<compile_context>
chip_gen: v5e
topology: v5e:2x2
jax: 0.10.0
libtpu: 0.0.40
codegen_flags: <defaults>
</compile_context>

<pallas_src>
import functools
import math

import numpy as np
import jax
import jax.numpy as jnp
from jax import lax
from jax.experimental import pallas as pl
from jax.experimental.pallas import tpu as pltpu

DIM = 32
NUM_HEADS = 4
HEAD_DIM = DIM // NUM_HEADS
A = 8              # batch == seq (required by the module's residual add)
LN_EPS = 1e-5      # nn.LayerNorm default eps


# ----------------------------- in-kernel helpers -----------------------------

def _layer_norm(x, g, b):
    mu = jnp.mean(x, axis=-1, keepdims=True)
    xc = x - mu
    var = jnp.mean(xc * xc, axis=-1, keepdims=True)
    return xc * lax.rsqrt(var + LN_EPS) * g + b


def _erf_approx(z):
    # TODO(synk): lax.erf has no guaranteed Mosaic lowering; use the
    # Abramowitz & Stegun 7.1.26 rational approximation (|err| < 1.5e-7).
    s = jnp.where(z >= 0.0, 1.0, -1.0)
    a = jnp.abs(z)
    t = 1.0 / (1.0 + 0.3275911 * a)
    poly = t * (0.254829592 + t * (-0.284496736 + t * (1.421413741
                + t * (-1.453152027 + t * 1.061405429))))
    return s * (1.0 - poly * jnp.exp(-a * a))


def _gelu_exact(z):
    # nn.GELU() default = exact erf-based GELU
    return 0.5 * z * (1.0 + _erf_approx(z * (1.0 / math.sqrt(2.0))))


# ------------------------------- fused kernel --------------------------------

def _vit_block_kernel(x_ref, wh_ref, bh_ref, wmlp_ref, vec_ref, pm_ref, o_ref,
                      *, num_heads, head_dim):
    xf = x_ref[...]                                     # (N, D) = (B*S, D)
    sel = pm_ref[0]                                     # (N, N) 0/1 permutation
    mask = pm_ref[1]                                    # (N, N) 1 = same batch

    # Queries permuted to output-row order via a 0/1 selection matmul
    # (this is the folded x.transpose(0,1); MXU has slack, so it's free).
    xq = jnp.dot(sel, xf, preferred_element_type=jnp.float32)       # (N, D)

    scale = 1.0 / math.sqrt(head_dim)
    attn = None
    for h in range(num_heads):                          # static unroll (4)
        wq_h = wh_ref[0, h]                             # (hd, D)
        wk_h = wh_ref[1, h]
        wv_h = wh_ref[2, h]
        woT_h = wh_ref[3, h]                            # (hd, D) rows of wo.T
        q_h = lax.dot_general(xq, wq_h, (((1,), (1,)), ((), ())),
                              preferred_element_type=jnp.float32) + bh_ref[0, h]
        k_h = lax.dot_general(xf, wk_h, (((1,), (1,)), ((), ())),
                              preferred_element_type=jnp.float32) + bh_ref[1, h]
        v_h = lax.dot_general(xf, wv_h, (((1,), (1,)), ((), ())),
                              preferred_element_type=jnp.float32) + bh_ref[2, h]
        s = lax.dot_general(q_h * scale, k_h, (((1,), (1,)), ((), ())),
                            preferred_element_type=jnp.float32)     # (N, N)
        # Global row max keeps exp() <= 1 even for masked entries (no inf*0).
        e = jnp.exp(s - jnp.max(s, axis=-1, keepdims=True)) * mask
        p = e * (1.0 / jnp.sum(e, axis=-1, keepdims=True))          # exact div
        hv = jnp.dot(p, v_h, preferred_element_type=jnp.float32)    # (N, hd)
        contrib = jnp.dot(hv, woT_h, preferred_element_type=jnp.float32)
        attn = contrib if attn is None else attn + contrib          # (N, D)
    attn = attn + vec_ref[0:1, :]                       # out-projection bias

    # Residual + norm1 + MLP + residual + norm2.
    y = xf + attn
    y = _layer_norm(y, vec_ref[1:2, :], vec_ref[2:3, :])            # norm1
    hid = _gelu_exact(
        lax.dot_general(y, wmlp_ref[0], (((1,), (1,)), ((), ())),
                        preferred_element_type=jnp.float32) + vec_ref[3:4, :])
    ff = lax.dot_general(hid, wmlp_ref[1], (((1,), (1,)), ((), ())),
                         preferred_element_type=jnp.float32) + vec_ref[4:5, :]
    y = y + ff
    # TODO(synk): output last dim is 32 (<128 lanes) so this store is
    # lane-masked; negligible at 8 KiB, only worth a relayout at D >= 128.
    o_ref[...] = _layer_norm(y, vec_ref[5:6, :], vec_ref[6:7, :])   # norm2


# -------------------------------- wrapper -------------------------------------

def pack_params(params):
    """18 parameter tensors -> 4 packed arrays (done once, outside the hot path)."""
    (wq, wk, wv, bq, bk, bv, wo, bo, g1, be1, w1, b1, w2, b2, g2, be2) = params
    H, hd = NUM_HEADS, HEAD_DIM
    D = wq.shape[0]
    per_head = lambda w: w.reshape(H, hd, D)
    w_heads = jnp.stack([per_head(wq), per_head(wk), per_head(wv),
                         per_head(wo.T)])                     # (4, H, hd, D)
    b_heads = jnp.stack([bq.reshape(H, 1, hd), bk.reshape(H, 1, hd),
                         bv.reshape(H, 1, hd)])               # (3, H, 1, hd)
    w_mlp = jnp.stack([w1, w2])                               # (2, D, D)
    vecs = jnp.concatenate([bo, g1, be1, b1, b2, g2, be2], axis=0)  # (7, D)
    return (w_heads, b_heads, w_mlp, vecs)


def _full_spec(shape):
    nd = len(shape)
    return pl.BlockSpec(shape, lambda g, _nd=nd: (0,) * _nd)


@jax.jit
def vit_block_forward(x, packed):
    w_heads, b_heads, w_mlp, vecs = packed
    B, S, D = x.shape
    assert B == S, "module residual (x + attn_output) requires batch == seq"
    N = B * S
    xf = x.reshape(N, D)                    # free row-major reshape

    # Compile-time constants: permutation (folded transpose) + batch mask.
    r = np.arange(N)
    i, j = r // S, r % S
    col = np.arange(N)
    sel = (col[None, :] == (j * S + i)[:, None]).astype(np.float32)
    msk = ((col[None, :] // S) == j[:, None]).astype(np.float32)
    permmask = jnp.asarray(np.stack([sel, msk]))              # (2, N, N)

    kernel = functools.partial(_vit_block_kernel,
                               num_heads=NUM_HEADS, head_dim=HEAD_DIM)
    out_flat = pl.pallas_call(
        kernel,
        out_shape=jax.ShapeDtypeStruct((N, D), jnp.float32),
        grid=(1,),                                            # single TC step
        in_specs=[_full_spec((N, D)),
                  _full_spec(w_heads.shape),
                  _full_spec(b_heads.shape),
                  _full_spec(w_mlp.shape),
                  _full_spec(vecs.shape),
                  _full_spec((2, N, N))],
        out_specs=pl.BlockSpec((N, D), lambda g: (0, 0)),
        compiler_params=pltpu.CompilerParams(
            dimension_semantics=("arbitrary",)),
    )(xf, w_heads, b_heads, w_mlp, vecs, permmask)
    return out_flat.reshape(B, S, D)


# --------------------------- params + pure-JAX reference ----------------------

def init_params(key, dim):
    ks = jax.random.split(key, 16)
    n = lambda k, shape, s: jax.random.normal(k, shape, jnp.float32) * s
    wq = n(ks[0], (dim, dim), 0.08)
    wk = n(ks[1], (dim, dim), 0.08)
    wv = n(ks[2], (dim, dim), 0.08)
    bq = n(ks[3], (1, dim), 0.02)
    bk = n(ks[4], (1, dim), 0.02)
    bv = n(ks[5], (1, dim), 0.02)
    wo = n(ks[6], (dim, dim), 0.08)
    bo = n(ks[7], (1, dim), 0.02)
    g1 = 1.0 + n(ks[8], (1, dim), 0.05)
    be1 = n(ks[9], (1, dim), 0.05)
    w1 = n(ks[10], (dim, dim), 0.08)
    b1 = n(ks[11], (1, dim), 0.02)
    w2 = n(ks[12], (dim, dim), 0.08)
    b2 = n(ks[13], (1, dim), 0.02)
    g2 = 1.0 + n(ks[14], (1, dim), 0.05)
    be2 = n(ks[15], (1, dim), 0.05)
    return (wq, wk, wv, bq, bk, bv, wo, bo, g1, be1, w1, b1, w2, b2, g2, be2)


def reference(x, params):
    (wq, wk, wv, bq, bk, bv, wo, bo,
     g1, be1, w1, b1, w2, b2, g2, be2) = params
    B, S, D = x.shape
    H, hd = NUM_HEADS, HEAD_DIM
    xt = jnp.transpose(x, (1, 0, 2))                         # (L, N, D)
    q = xt @ wq.T + bq[0]
    k = xt @ wk.T + bk[0]
    v = xt @ wv.T + bv[0]
    heads = lambda t: t.reshape(S, B, H, hd)
    qh = heads(q) / math.sqrt(hd)
    kh = heads(k)
    vh = heads(v)
    sc = jnp.einsum('lnhe,mnhe->nhlm', qh, kh)
    p = jax.nn.softmax(sc, axis=-1)
    o = jnp.einsum('nhlm,mnhe->lnhe', p, vh).reshape(S, B, D)
    attn_out = o @ wo.T + bo[0]

    def ln(t, g, b):
        mu = t.mean(-1, keepdims=True)
        var = ((t - mu) ** 2).mean(-1, keepdims=True)
        return (t - mu) / jnp.sqrt(var + LN_EPS) * g[0] + b[0]

    y = x + attn_out
    y = ln(y, g1, be1)
    ff = jax.nn.gelu(y @ w1.T + b1[0], approximate=False) @ w2.T + b2[0]
    y = y + ff
    return ln(y, g2, be2)


# ------------------------------------ main ------------------------------------

if __name__ == "__main__":
    key = jax.random.PRNGKey(0)
    kx, kp = jax.random.split(key)
    x = jax.random.normal(kx, (A, A, DIM), jnp.float32)   # batch == seq == 8
    params = init_params(kp, DIM)
    packed = pack_params(params)

    out = jax.block_until_ready(vit_block_forward(x, packed))
    assert out.shape == (A, A, DIM) and out.dtype == jnp.float32

    ref = reference(x, params)
    err = float(jnp.max(jnp.abs(out - ref)))
    # Exact softmax divide now; remaining error is the 1.5e-7 erf polynomial
    # plus f32 accumulation-order differences (expected well under 1e-4).
    if err < 5e-4:
        print("KERNEL_OK")
    else:
        print(f"MISMATCH max_abs_err={err}")
</pallas_src>

<mosaic_0001>
module attributes {stable_mosaic.version = 11 : i64} {
  func.func @_vit_block_kernel(%arg0: i32, %arg1: memref<64x32xf32, #tpu.memory_space<vmem>>, %arg2: memref<4x4x8x32xf32, #tpu.memory_space<vmem>>, %arg3: memref<3x4x1x8xf32, #tpu.memory_space<vmem>>, %arg4: memref<2x32x32xf32, #tpu.memory_space<vmem>>, %arg5: memref<7x32xf32, #tpu.memory_space<vmem>>, %arg6: memref<2x64x64xf32, #tpu.memory_space<vmem>>, %arg7: memref<64x32xf32, #tpu.memory_space<vmem>>) attributes {dimension_semantics = [#tpu.dimension_semantics<arbitrary>], iteration_bounds = array<i64: 1>, scalar_prefetch = 0 : i64, scratch_operands = 0 : i64, tpu.core_type = #tpu.core_type<tc>, window_params = [{pipeline_mode = #tpu.pipeline_mode<synchronous>, transform_indices = @transform_0, window_bounds = array<i64: 64, 32>}, {pipeline_mode = #tpu.pipeline_mode<synchronous>, transform_indices = @transform_1, window_bounds = array<i64: 4, 4, 8, 32>}, {pipeline_mode = #tpu.pipeline_mode<synchronous>, transform_indices = @transform_2, window_bounds = array<i64: 3, 4, 1, 8>}, {pipeline_mode = #tpu.pipeline_mode<synchronous>, transform_indices = @transform_3, window_bounds = array<i64: 2, 32, 32>}, {pipeline_mode = #tpu.pipeline_mode<synchronous>, transform_indices = @transform_4, window_bounds = array<i64: 7, 32>}, {pipeline_mode = #tpu.pipeline_mode<synchronous>, transform_indices = @transform_5, window_bounds = array<i64: 2, 64, 64>}, {pipeline_mode = #tpu.pipeline_mode<synchronous>, transform_indices = @transform_6, window_bounds = array<i64: 64, 32>}]} {
    %c0 = arith.constant 0 : index
    %c0_0 = arith.constant 0 : index
    %0 = vector.load %arg1[%c0, %c0_0] : memref<64x32xf32, #tpu.memory_space<vmem>>, vector<64x32xf32>
    %c0_1 = arith.constant 0 : index
    %c0_2 = arith.constant 0 : index
    %c0_3 = arith.constant 0 : index
    %1 = vector.load %arg6[%c0_1, %c0_2, %c0_3] : memref<2x64x64xf32, #tpu.memory_space<vmem>>, vector<1x64x64xf32>
    %2 = vector.shape_cast %1 : vector<1x64x64xf32> to vector<64x64xf32>
    %c1 = arith.constant 1 : index
    %c0_4 = arith.constant 0 : index
    %c0_5 = arith.constant 0 : index
    %3 = vector.load %arg6[%c1, %c0_4, %c0_5] : memref<2x64x64xf32, #tpu.memory_space<vmem>>, vector<1x64x64xf32>
    %4 = vector.shape_cast %3 : vector<1x64x64xf32> to vector<64x64xf32>
    %cst = arith.constant dense<0.000000e+00> : vector<64x32xf32>
    %5 = tpu.matmul %2, %0, %cst {dimension_numbers = #tpu.dot_dimension_numbers<[1], [0], [0], [1], [0, 0, 1, 1], [], []>} : vector<64x64xf32>, vector<64x32xf32>, vector<64x32xf32> -> vector<64x32xf32>
    %c0_6 = arith.constant 0 : index
    %c0_7 = arith.constant 0 : index
    %c0_8 = arith.constant 0 : index
    %c0_9 = arith.constant 0 : index
    %6 = vector.load %arg2[%c0_6, %c0_7, %c0_8, %c0_9] : memref<4x4x8x32xf32, #tpu.memory_space<vmem>>, vector<1x1x8x32xf32>
    %7 = vector.shape_cast %6 : vector<1x1x8x32xf32> to vector<8x32xf32>
    %c1_10 = arith.constant 1 : index
    %c0_11 = arith.constant 0 : index
    %c0_12 = arith.constant 0 : index
    %c0_13 = arith.constant 0 : index
    %8 = vector.load %arg2[%c1_10, %c0_11, %c0_12, %c0_13] : memref<4x4x8x32xf32, #tpu.memory_space<vmem>>, vector<1x1x8x32xf32>
    %9 = vector.shape_cast %8 : vector<1x1x8x32xf32> to vector<8x32xf32>
    %c2 = arith.constant 2 : index
    %c0_14 = arith.constant 0 : index
    %c0_15 = arith.constant 0 : index
    %c0_16 = arith.constant 0 : index
    %10 = vector.load %arg2[%c2, %c0_14, %c0_15, %c0_16] : memref<4x4x8x32xf32, #tpu.memory_space<vmem>>, vector<1x1x8x32xf32>
    %11 = vector.shape_cast %10 : vector<1x1x8x32xf32> to vector<8x32xf32>
    %c3 = arith.constant 3 : index
    %c0_17 = arith.constant 0 : index
    %c0_18 = arith.constant 0 : index
    %c0_19 = arith.constant 0 : index
    %12 = vector.load %arg2[%c3, %c0_17, %c0_18, %c0_19] : memref<4x4x8x32xf32, #tpu.memory_space<vmem>>, vector<1x1x8x32xf32>
    %13 = vector.shape_cast %12 : vector<1x1x8x32xf32> to vector<8x32xf32>
    %cst_20 = arith.constant dense<0.000000e+00> : vector<64x8xf32>
    %14 = tpu.matmul %5, %7, %cst_20 {dimension_numbers = #tpu.dot_dimension_numbers<[1], [1], [0], [0], [0, 0, 1, 0], [], []>} : vector<64x32xf32>, vector<8x32xf32>, vector<64x8xf32> -> vector<64x8xf32>
    %c0_21 = arith.constant 0 : index
    %c0_22 = arith.constant 0 : index
    %c0_23 = arith.constant 0 : index
    %c0_24 = arith.constant 0 : index
    %15 = vector.load %arg3[%c0_21, %c0_22, %c0_23, %c0_24] : memref<3x4x1x8xf32, #tpu.memory_space<vmem>>, vector<1x1x1x8xf32>
    %16 = vector.shape_cast %15 : vector<1x1x1x8xf32> to vector<1x8xf32>
    %17 = vector.broadcast %16 : vector<1x8xf32> to vector<64x8xf32>
    %18 = arith.addf %14, %17 : vector<64x8xf32>
    %cst_25 = arith.constant dense<0.000000e+00> : vector<64x8xf32>
    %19 = tpu.matmul %0, %9, %cst_25 {dimension_numbers = #tpu.dot_dimension_numbers<[1], [1], [0], [0], [0, 0, 1, 0], [], []>} : vector<64x32xf32>, vector<8x32xf32>, vector<64x8xf32> -> vector<64x8xf32>
    %c1_26 = arith.constant 1 : index
    %c0_27 = arith.constant 0 : index
    %c0_28 = arith.constant 0 : index
    %c0_29 = arith.constant 0 : index
    %20 = vector.load %arg3[%c1_26, %c0_27, %c0_28, %c0_29] : memref<3x4x1x8xf32, #tpu.memory_space<vmem>>, vector<1x1x1x8xf32>
    %21 = vector.shape_cast %20 : vector<1x1x1x8xf32> to vector<1x8xf32>
    %22 = vector.broadcast %21 : vector<1x8xf32> to vector<64x8xf32>
    %23 = arith.addf %19, %22 : vector<64x8xf32>
    %cst_30 = arith.constant dense<0.000000e+00> : vector<64x8xf32>
    %24 = tpu.matmul %0, %11, %cst_30 {dimension_numbers = #tpu.dot_dimension_numbers<[1], [1], [0], [0], [0, 0, 1, 0], [], []>} : vector<64x32xf32>, vector<8x32xf32>, vector<64x8xf32> -> vector<64x8xf32>
    %c2_31 = arith.constant 2 : index
    %c0_32 = arith.constant 0 : index
    %c0_33 = arith.constant 0 : index
    %c0_34 = arith.constant 0 : index
    %25 = vector.load %arg3[%c2_31, %c0_32, %c0_33, %c0_34] : memref<3x4x1x8xf32, #tpu.memory_space<vmem>>, vector<1x1x1x8xf32>
    %26 = vector.shape_cast %25 : vector<1x1x1x8xf32> to vector<1x8xf32>
    %27 = vector.broadcast %26 : vector<1x8xf32> to vector<64x8xf32>
    %28 = arith.addf %24, %27 : vector<64x8xf32>
    %cst_35 = arith.constant 0.353553385 : f32
    %29 = vector.broadcast %cst_35 : f32 to vector<64x8xf32>
    %30 = arith.mulf %18, %29 : vector<64x8xf32>
    %cst_36 = arith.constant dense<0.000000e+00> : vector<64x64xf32>
    %31 = tpu.matmul %30, %23, %cst_36 {dimension_numbers = #tpu.dot_dimension_numbers<[1], [1], [0], [0], [0, 0, 1, 0], [], []>} : vector<64x8xf32>, vector<64x8xf32>, vector<64x64xf32> -> vector<64x64xf32>
    %cst_37 = arith.constant dense<0xFF800000> : vector<64xf32>
    %32 = vector.multi_reduction <maximumf>, %31, %cst_37 [1] : vector<64x64xf32> to vector<64xf32>
    %33 = vector.shape_cast %32 : vector<64xf32> to vector<64x1xf32>
    %34 = vector.broadcast %33 : vector<64x1xf32> to vector<64x64xf32>
    %35 = arith.subf %31, %34 : vector<64x64xf32>
    %36 = math.exp %35 : vector<64x64xf32>
    %37 = arith.mulf %36, %4 : vector<64x64xf32>
    %cst_38 = arith.constant dense<0.000000e+00> : vector<64xf32>
    %38 = vector.multi_reduction <add>, %37, %cst_38 [1] : vector<64x64xf32> to vector<64xf32>
    %39 = vector.shape_cast %38 : vector<64xf32> to vector<64x1xf32>
    %cst_39 = arith.constant 1.000000e+00 : f32
    %40 = vector.broadcast %cst_39 : f32 to vector<64x1xf32>
    %41 = arith.divf %40, %39 : vector<64x1xf32>
    %42 = vector.broadcast %41 : vector<64x1xf32> to vector<64x64xf32>
    %43 = arith.mulf %37, %42 : vector<64x64xf32>
    %cst_40 = arith.constant dense<0.000000e+00> : vector<64x8xf32>
    %44 = tpu.matmul %43, %28, %cst_40 {dimension_numbers = #tpu.dot_dimension_numbers<[1], [0], [0], [1], [0, 0, 1, 1], [], []>} : vector<64x64xf32>, vector<64x8xf32>, vector<64x8xf32> -> vector<64x8xf32>
    %cst_41 = arith.constant dense<0.000000e+00> : vector<64x32xf32>
    %45 = tpu.matmul %44, %13, %cst_41 {dimension_numbers = #tpu.dot_dimension_numbers<[1], [0], [0], [1], [0, 0, 1, 1], [], []>} : vector<64x8xf32>, vector<8x32xf32>, vector<64x32xf32> -> vector<64x32xf32>
    %c0_42 = arith.constant 0 : index
    %c1_43 = arith.constant 1 : index
    %c0_44 = arith.constant 0 : index
    %c0_45 = arith.constant 0 : index
    %46 = vector.load %arg2[%c0_42, %c1_43, %c0_44, %c0_45] : memref<4x4x8x32xf32, #tpu.memory_space<vmem>>, vector<1x1x8x32xf32>
    %47 = vector.shape_cast %46 : vector<1x1x8x32xf32> to vector<8x32xf32>
    %c1_46 = arith.constant 1 : index
    %c1_47 = arith.constant 1 : index
    %c0_48 = arith.constant 0 : index
    %c0_49 = arith.constant 0 : index
    %48 = vector.load %arg2[%c1_46, %c1_47, %c0_48, %c0_49] : memref<4x4x8x32xf32, #tpu.memory_space<vmem>>, vector<1x1x8x32xf32>
    %49 = vector.shape_cast %48 : vector<1x1x8x32xf32> to vector<8x32xf32>
    %c2_50 = arith.constant 2 : index
    %c1_51 = arith.constant 1 : index
    %c0_52 = arith.constant 0 : index
    %c0_53 = arith.constant 0 : index
    %50 = vector.load %arg2[%c2_50, %c1_51, %c0_52, %c0_53] : memref<4x4x8x32xf32, #tpu.memory_space<vmem>>, vector<1x1x8x32xf32>
    %51 = vector.shape_cast %50 : vector<1x1x8x32xf32> to vector<8x32xf32>
    %c3_54 = arith.constant 3 : index
    %c1_55 = arith.constant 1 : index
    %c0_56 = arith.constant 0 : index
    %c0_57 = arith.constant 0 : index
    %52 = vector.load %arg2[%c3_54, %c1_55, %c0_56, %c0_57] : memref<4x4x8x32xf32, #tpu.memory_space<vmem>>, vector<1x1x8x32xf32>
    %53 = vector.shape_cast %52 : vector<1x1x8x32xf32> to vector<8x32xf32>
    %cst_58 = arith.constant dense<0.000000e+00> : vector<64x8xf32>
    %54 = tpu.matmul %5, %47, %cst_58 {dimension_numbers = #tpu.dot_dimension_numbers<[1], [1], [0], [0], [0, 0, 1, 0], [], []>} : vector<64x32xf32>, vector<8x32xf32>, vector<64x8xf32> -> vector<64x8xf32>
    %c0_59 = arith.constant 0 : index
    %c1_60 = arith.constant 1 : index
    %c0_61 = arith.constant 0 : index
    %c0_62 = arith.constant 0 : index
    %55 = vector.load %arg3[%c0_59, %c1_60, %c0_61, %c0_62] : memref<3x4x1x8xf32, #tpu.memory_space<vmem>>, vector<1x1x1x8xf32>
    %56 = vector.shape_cast %55 : vector<1x1x1x8xf32> to vector<1x8xf32>
    %57 = vector.broadcast %56 : vector<1x8xf32> to vector<64x8xf32>
    %58 = arith.addf %54, %57 : vector<64x8xf32>
    %cst_63 = arith.constant dense<0.000000e+00> : vector<64x8xf32>
    %59 = tpu.matmul %0, %49, %cst_63 {dimension_numbers = #tpu.dot_dimension_numbers<[1], [1], [0], [0], [0, 0, 1, 0], [], []>} : vector<64x32xf32>, vector<8x32xf32>, vector<64x8xf32> -> vector<64x8xf32>
    %c1_64 = arith.constant 1 : index
    %c1_65 = arith.constant 1 : index
    %c0_66 = arith.constant 0 : index
    %c0_67 = arith.constant 0 : index
    %60 = vector.load %arg3[%c1_64, %c1_65, %c0_66, %c0_67] : memref<3x4x1x8xf32, #tpu.memory_space<vmem>>, vector<1x1x1x8xf32>
    %61 = vector.shape_cast %60 : vector<1x1x1x8xf32> to vector<1x8xf32>
    %62 = vector.broadcast %61 : vector<1x8xf32> to vector<64x8xf32>
    %63 = arith.addf %59, %62 : vector<64x8xf32>
    %cst_68 = arith.constant dense<0.000000e+00> : vector<64x8xf32>
    %64 = tpu.matmul %0, %51, %cst_68 {dimension_numbers = #tpu.dot_dimension_numbers<[1], [1], [0], [0], [0, 0, 1, 0], [], []>} : vector<64x32xf32>, vector<8x32xf32>, vector<64x8xf32> -> vector<64x8xf32>
    %c2_69 = arith.constant 2 : index
    %c1_70 = arith.constant 1 : index
    %c0_71 = arith.constant 0 : index
    %c0_72 = arith.constant 0 : index
    %65 = vector.load %arg3[%c2_69, %c1_70, %c0_71, %c0_72] : memref<3x4x1x8xf32, #tpu.memory_space<vmem>>, vector<1x1x1x8xf32>
    %66 = vector.shape_cast %65 : vector<1x1x1x8xf32> to vector<1x8xf32>
    %67 = vector.broadcast %66 : vector<1x8xf32> to vector<64x8xf32>
    %68 = arith.addf %64, %67 : vector<64x8xf32>
    %cst_73 = arith.constant 0.353553385 : f32
    %69 = vector.broadcast %cst_73 : f32 to vector<64x8xf32>
    %70 = arith.mulf %58, %69 : vector<64x8xf32>
    %cst_74 = arith.constant dense<0.000000e+00> : vector<64x64xf32>
    %71 = tpu.matmul %70, %63, %cst_74 {dimension_numbers = #tpu.dot_dimension_numbers<[1], [1], [0], [0], [0, 0, 1, 0], [], []>} : vector<64x8xf32>, vector<64x8xf32>, vector<64x64xf32> -> vector<64x64xf32>
    %cst_75 = arith.constant dense<0xFF800000> : vector<64xf32>
    %72 = vector.multi_reduction <maximumf>, %71, %cst_75 [1] : vector<64x64xf32> to vector<64xf32>
    %73 = vector.shape_cast %72 : vector<64xf32> to vector<64x1xf32>
    %74 = vector.broadcast %73 : vector<64x1xf32> to vector<64x64xf32>
    %75 = arith.subf %71, %74 : vector<64x64xf32>
    %76 = math.exp %75 : vector<64x64xf32>
    %77 = arith.mulf %76, %4 : vector<64x64xf32>
    %cst_76 = arith.constant dense<0.000000e+00> : vector<64xf32>
    %78 = vector.multi_reduction <add>, %77, %cst_76 [1] : vector<64x64xf32> to vector<64xf32>
    %79 = vector.shape_cast %78 : vector<64xf32> to vector<64x1xf32>
    %cst_77 = arith.constant 1.000000e+00 : f32
    %80 = vector.broadcast %cst_77 : f32 to vector<64x1xf32>
    %81 = arith.divf %80, %79 : vector<64x1xf32>
    %82 = vector.broadcast %81 : vector<64x1xf32> to vector<64x64xf32>
    %83 = arith.mulf %77, %82 : vector<64x64xf32>
    %cst_78 = arith.constant dense<0.000000e+00> : vector<64x8xf32>
    %84 = tpu.matmul %83, %68, %cst_78 {dimension_numbers = #tpu.dot_dimension_numbers<[1], [0], [0], [1], [0, 0, 1, 1], [], []>} : vector<64x64xf32>, vector<64x8xf32>, vector<64x8xf32> -> vector<64x8xf32>
    %cst_79 = arith.constant dense<0.000000e+00> : vector<64x32xf32>
    %85 = tpu.matmul %84, %53, %cst_79 {dimension_numbers = #tpu.dot_dimension_numbers<[1], [0], [0], [1], [0, 0, 1, 1], [], []>} : vector<64x8xf32>, vector<8x32xf32>, vector<64x32xf32> -> vector<64x32xf32>
    %86 = arith.addf %45, %85 : vector<64x32xf32>
    %c0_80 = arith.constant 0 : index
    %c2_81 = arith.constant 2 : index
    %c0_82 = arith.constant 0 : index
    %c0_83 = arith.constant 0 : index
    %87 = vector.load %arg2[%c0_80, %c2_81, %c0_82, %c0_83] : memref<4x4x8x32xf32, #tpu.memory_space<vmem>>, vector<1x1x8x32xf32>
    %88 = vector.shape_cast %87 : vector<1x1x8x32xf32> to vector<8x32xf32>
    %c1_84 = arith.constant 1 : index
    %c2_85 = arith.constant 2 : index
    %c0_86 = arith.constant 0 : index
    %c0_87 = arith.constant 0 : index
    %89 = vector.load %arg2[%c1_84, %c2_85, %c0_86, %c0_87] : memref<4x4x8x32xf32, #tpu.memory_space<vmem>>, vector<1x1x8x32xf32>
    %90 = vector.shape_cast %89 : vector<1x1x8x32xf32> to vector<8x32xf32>
    %c2_88 = arith.constant 2 : index
    %c2_89 = arith.constant 2 : index
    %c0_90 = arith.constant 0 : index
    %c0_91 = arith.constant 0 : index
    %91 = vector.load %arg2[%c2_88, %c2_89, %c0_90, %c0_91] : memref<4x4x8x32xf32, #tpu.memory_space<vmem>>, vector<1x1x8x32xf32>
    %92 = vector.shape_cast %91 : vector<1x1x8x32xf32> to vector<8x32xf32>
    %c3_92 = arith.constant 3 : index
    %c2_93 = arith.constant 2 : index
    %c0_94 = arith.constant 0 : index
    %c0_95 = arith.constant 0 : index
    %93 = vector.load %arg2[%c3_92, %c2_93, %c0_94, %c0_95] : memref<4x4x8x32xf32, #tpu.memory_space<vmem>>, vector<1x1x8x32xf32>
    %94 = vector.shape_cast %93 : vector<1x1x8x32xf32> to vector<8x32xf32>
    %cst_96 = arith.constant dense<0.000000e+00> : vector<64x8xf32>
    %95 = tpu.matmul %5, %88, %cst_96 {dimension_numbers = #tpu.dot_dimension_numbers<[1], [1], [0], [0], [0, 0, 1, 0], [], []>} : vector<64x32xf32>, vector<8x32xf32>, vector<64x8xf32> -> vector<64x8xf32>
    %c0_97 = arith.constant 0 : index
    %c2_98 = arith.constant 2 : index
    %c0_99 = arith.constant 0 : index
    %c0_100 = arith.constant 0 : index
    %96 = vector.load %arg3[%c0_97, %c2_98, %c0_99, %c0_100] : memref<3x4x1x8xf32, #tpu.memory_space<vmem>>, vector<1x1x1x8xf32>
    %97 = vector.shape_cast %96 : vector<1x1x1x8xf32> to vector<1x8xf32>
    %98 = vector.broadcast %97 : vector<1x8xf32> to vector<64x8xf32>
    %99 = arith.addf %95, %98 : vector<64x8xf32>
    %cst_101 = arith.constant dense<0.000000e+00> : vector<64x8xf32>
    %100 = tpu.matmul %0, %90, %cst_101 {dimension_numbers = #tpu.dot_dimension_numbers<[1], [1], [0], [0], [0, 0, 1, 0], [], []>} : vector<64x32xf32>, vector<8x32xf32>, vector<64x8xf32> -> vector<64x8xf32>
    %c1_102 = arith.constant 1 : index
    %c2_103 = arith.constant 2 : index
    %c0_104 = arith.constant 0 : index
    %c0_105 = arith.constant 0 : index
    %101 = vector.load %arg3[%c1_102, %c2_103, %c0_104, %c0_105] : memref<3x4x1x8xf32, #tpu.memory_space<vmem>>, vector<1x1x1x8xf32>
    %102 = vector.shape_cast %101 : vector<1x1x1x8xf32> to vector<1x8xf32>
    %103 = vector.broadcast %102 : vector<1x8xf32> to vector<64x8xf32>
    %104 = arith.addf %100, %103 : vector<64x8xf32>
    %cst_106 = arith.constant dense<0.000000e+00> : vector<64x8xf32>
    %105 = tpu.matmul %0, %92, %cst_106 {dimension_numbers = #tpu.dot_dimension_numbers<[1], [1], [0], [0], [0, 0, 1, 0], [], []>} : vector<64x32xf32>, vector<8x32xf32>, vector<64x8xf32> -> vector<64x8xf32>
    %c2_107 = arith.constant 2 : index
    %c2_108 = arith.constant 2 : index
    %c0_109 = arith.constant 0 : index
    %c0_110 = arith.constant 0 : index
    %106 = vector.load %arg3[%c2_107, %c2_108, %c0_109, %c0_110] : memref<3x4x1x8xf32, #tpu.memory_space<vmem>>, vector<1x1x1x8xf32>
    %107 = vector.shape_cast %106 : vector<1x1x1x8xf32> to vector<1x8xf32>
    %108 = vector.broadcast %107 : vector<1x8xf32> to vector<64x8xf32>
    %109 = arith.addf %105, %108 : vector<64x8xf32>
    %cst_111 = arith.constant 0.353553385 : f32
    %110 = vector.broadcast %cst_111 : f32 to vector<64x8xf32>
    %111 = arith.mulf %99, %110 : vector<64x8xf32>
    %cst_112 = arith.constant dense<0.000000e+00> : vector<64x64xf32>
    %112 = tpu.matmul %111, %104, %cst_112 {dimension_numbers = #tpu.dot_dimension_numbers<[1], [1], [0], [0], [0, 0, 1, 0], [], []>} : vector<64x8xf32>, vector<64x8xf32>, vector<64x64xf32> -> vector<64x64xf32>
    %cst_113 = arith.constant dense<0xFF800000> : vector<64xf32>
    %113 = vector.multi_reduction <maximumf>, %112, %cst_113 [1] : vector<64x64xf32> to vector<64xf32>
    %114 = vector.shape_cast %113 : vector<64xf32> to vector<64x1xf32>
    %115 = vector.broadcast %114 : vector<64x1xf32> to vector<64x64xf32>
    %116 = arith.subf %112, %115 : vector<64x64xf32>
    %117 = math.exp %116 : vector<64x64xf32>
    %118 = arith.mulf %117, %4 : vector<64x64xf32>
    %cst_114 = arith.constant dense<0.000000e+00> : vector<64xf32>
    %119 = vector.multi_reduction <add>, %118, %cst_114 [1] : vector<64x64xf32> to vector<64xf32>
    %120 = vector.shape_cast %119 : vector<64xf32> to vector<64x1xf32>
    %cst_115 = arith.constant 1.000000e+00 : f32
    %121 = vector.broadcast %cst_115 : f32 to vector<64x1xf32>
    %122 = arith.divf %121, %120 : vector<64x1xf32>
    %123 = vector.broadcast %122 : vector<64x1xf32> to vector<64x64xf32>
    %124 = arith.mulf %118, %123 : vector<64x64xf32>
    %cst_116 = arith.constant dense<0.000000e+00> : vector<64x8xf32>
    %125 = tpu.matmul %124, %109, %cst_116 {dimension_numbers = #tpu.dot_dimension_numbers<[1], [0], [0], [1], [0, 0, 1, 1], [], []>} : vector<64x64xf32>, vector<64x8xf32>, vector<64x8xf32> -> vector<64x8xf32>
    %cst_117 = arith.constant dense<0.000000e+00> : vector<64x32xf32>
    %126 = tpu.matmul %125, %94, %cst_117 {dimension_numbers = #tpu.dot_dimension_numbers<[1], [0], [0], [1], [0, 0, 1, 1], [], []>} : vector<64x8xf32>, vector<8x32xf32>, vector<64x32xf32> -> vector<64x32xf32>
    %127 = arith.addf %86, %126 : vector<64x32xf32>
    %c0_118 = arith.constant 0 : index
    %c3_119 = arith.constant 3 : index
    %c0_120 = arith.constant 0 : index
    %c0_121 = arith.constant 0 : index
    %128 = vector.load %arg2[%c0_118, %c3_119, %c0_120, %c0_121] : memref<4x4x8x32xf32, #tpu.memory_space<vmem>>, vector<1x1x8x32xf32>
    %129 = vector.shape_cast %128 : vector<1x1x8x32xf32> to vector<8x32xf32>
    %c1_122 = arith.constant 1 : index
    %c3_123 = arith.constant 3 : index
    %c0_124 = arith.constant 0 : index
    %c0_125 = arith.constant 0 : index
    %130 = vector.load %arg2[%c1_122, %c3_123, %c0_124, %c0_125] : memref<4x4x8x32xf32, #tpu.memory_space<vmem>>, vector<1x1x8x32xf32>
    %131 = vector.shape_cast %130 : vector<1x1x8x32xf32> to vector<8x32xf32>
    %c2_126 = arith.constant 2 : index
    %c3_127 = arith.constant 3 : index
    %c0_128 = arith.constant 0 : index
    %c0_129 = arith.constant 0 : index
    %132 = vector.load %arg2[%c2_126, %c3_127, %c0_128, %c0_129] : memref<4x4x8x32xf32, #tpu.memory_space<vmem>>, vector<1x1x8x32xf32>
    %133 = vector.shape_cast %132 : vector<1x1x8x32xf32> to vector<8x32xf32>
    %c3_130 = arith.constant 3 : index
    %c3_131 = arith.constant 3 : index
    %c0_132 = arith.constant 0 : index
    %c0_133 = arith.constant 0 : index
    %134 = vector.load %arg2[%c3_130, %c3_131, %c0_132, %c0_133] : memref<4x4x8x32xf32, #tpu.memory_space<vmem>>, vector<1x1x8x32xf32>
    %135 = vector.shape_cast %134 : vector<1x1x8x32xf32> to vector<8x32xf32>
    %cst_134 = arith.constant dense<0.000000e+00> : vector<64x8xf32>
    %136 = tpu.matmul %5, %129, %cst_134 {dimension_numbers = #tpu.dot_dimension_numbers<[1], [1], [0], [0], [0, 0, 1, 0], [], []>} : vector<64x32xf32>, vector<8x32xf32>, vector<64x8xf32> -> vector<64x8xf32>
    %c0_135 = arith.constant 0 : index
    %c3_136 = arith.constant 3 : index
    %c0_137 = arith.constant 0 : index
    %c0_138 = arith.constant 0 : index
    %137 = vector.load %arg3[%c0_135, %c3_136, %c0_137, %c0_138] : memref<3x4x1x8xf32, #tpu.memory_space<vmem>>, vector<1x1x1x8xf32>
    %138 = vector.shape_cast %137 : vector<1x1x1x8xf32> to vector<1x8xf32>
    %139 = vector.broadcast %138 : vector<1x8xf32> to vector<64x8xf32>
    %140 = arith.addf %136, %139 : vector<64x8xf32>
    %cst_139 = arith.constant dense<0.000000e+00> : vector<64x8xf32>
    %141 = tpu.matmul %0, %131, %cst_139 {dimension_numbers = #tpu.dot_dimension_numbers<[1], [1], [0], [0], [0, 0, 1, 0], [], []>} : vector<64x32xf32>, vector<8x32xf32>, vector<64x8xf32> -> vector<64x8xf32>
    %c1_140 = arith.constant 1 : index
    %c3_141 = arith.constant 3 : index
    %c0_142 = arith.constant 0 : index
    %c0_143 = arith.constant 0 : index
    %142 = vector.load %arg3[%c1_140, %c3_141, %c0_142, %c0_143] : memref<3x4x1x8xf32, #tpu.memory_space<vmem>>, vector<1x1x1x8xf32>
    %143 = vector.shape_cast %142 : vector<1x1x1x8xf32> to vector<1x8xf32>
    %144 = vector.broadcast %143 : vector<1x8xf32> to vector<64x8xf32>
    %145 = arith.addf %141, %144 : vector<64x8xf32>
    %cst_144 = arith.constant dense<0.000000e+00> : vector<64x8xf32>
    %146 = tpu.matmul %0, %133, %cst_144 {dimension_numbers = #tpu.dot_dimension_numbers<[1], [1], [0], [0], [0, 0, 1, 0], [], []>} : vector<64x32xf32>, vector<8x32xf32>, vector<64x8xf32> -> vector<64x8xf32>
    %c2_145 = arith.constant 2 : index
    %c3_146 = arith.constant 3 : index
    %c0_147 = arith.constant 0 : index
    %c0_148 = arith.constant 0 : index
    %147 = vector.load %arg3[%c2_145, %c3_146, %c0_147, %c0_148] : memref<3x4x1x8xf32, #tpu.memory_space<vmem>>, vector<1x1x1x8xf32>
    %148 = vector.shape_cast %147 : vector<1x1x1x8xf32> to vector<1x8xf32>
    %149 = vector.broadcast %148 : vector<1x8xf32> to vector<64x8xf32>
    %150 = arith.addf %146, %149 : vector<64x8xf32>
    %cst_149 = arith.constant 0.353553385 : f32
    %151 = vector.broadcast %cst_149 : f32 to vector<64x8xf32>
    %152 = arith.mulf %140, %151 : vector<64x8xf32>
    %cst_150 = arith.constant dense<0.000000e+00> : vector<64x64xf32>
    %153 = tpu.matmul %152, %145, %cst_150 {dimension_numbers = #tpu.dot_dimension_numbers<[1], [1], [0], [0], [0, 0, 1, 0], [], []>} : vector<64x8xf32>, vector<64x8xf32>, vector<64x64xf32> -> vector<64x64xf32>
    %cst_151 = arith.constant dense<0xFF800000> : vector<64xf32>
    %154 = vector.multi_reduction <maximumf>, %153, %cst_151 [1] : vector<64x64xf32> to vector<64xf32>
    %155 = vector.shape_cast %154 : vector<64xf32> to vector<64x1xf32>
    %156 = vector.broadcast %155 : vector<64x1xf32> to vector<64x64xf32>
    %157 = arith.subf %153, %156 : vector<64x64xf32>
    %158 = math.exp %157 : vector<64x64xf32>
    %159 = arith.mulf %158, %4 : vector<64x64xf32>
    %cst_152 = arith.constant dense<0.000000e+00> : vector<64xf32>
    %160 = vector.multi_reduction <add>, %159, %cst_152 [1] : vector<64x64xf32> to vector<64xf32>
    %161 = vector.shape_cast %160 : vector<64xf32> to vector<64x1xf32>
    %cst_153 = arith.constant 1.000000e+00 : f32
    %162 = vector.broadcast %cst_153 : f32 to vector<64x1xf32>
    %163 = arith.divf %162, %161 : vector<64x1xf32>
    %164 = vector.broadcast %163 : vector<64x1xf32> to vector<64x64xf32>
    %165 = arith.mulf %159, %164 : vector<64x64xf32>
    %cst_154 = arith.constant dense<0.000000e+00> : vector<64x8xf32>
    %166 = tpu.matmul %165, %150, %cst_154 {dimension_numbers = #tpu.dot_dimension_numbers<[1], [0], [0], [1], [0, 0, 1, 1], [], []>} : vector<64x64xf32>, vector<64x8xf32>, vector<64x8xf32> -> vector<64x8xf32>
    %cst_155 = arith.constant dense<0.000000e+00> : vector<64x32xf32>
    %167 = tpu.matmul %166, %135, %cst_155 {dimension_numbers = #tpu.dot_dimension_numbers<[1], [0], [0], [1], [0, 0, 1, 1], [], []>} : vector<64x8xf32>, vector<8x32xf32>, vector<64x32xf32> -> vector<64x32xf32>
    %168 = arith.addf %127, %167 : vector<64x32xf32>
    %c0_156 = arith.constant 0 : index
    %c0_157 = arith.constant 0 : index
    %169 = vector.load %arg5[%c0_156, %c0_157] : memref<7x32xf32, #tpu.memory_space<vmem>>, vector<1x32xf32>
    %170 = vector.broadcast %169 : vector<1x32xf32> to vector<64x32xf32>
    %171 = arith.addf %168, %170 : vector<64x32xf32>
    %172 = arith.addf %0, %171 : vector<64x32xf32>
    %c1_158 = arith.constant 1 : index
    %c0_159 = arith.constant 0 : index
    %173 = vector.load %arg5[%c1_158, %c0_159] : memref<7x32xf32, #tpu.memory_space<vmem>>, vector<1x32xf32>
    %c2_160 = arith.constant 2 : index
    %c0_161 = arith.constant 0 : index
    %174 = vector.load %arg5[%c2_160, %c0_161] : memref<7x32xf32, #tpu.memory_space<vmem>>, vector<1x32xf32>
    %cst_162 = arith.constant dense<0.000000e+00> : vector<64xf32>
    %175 = vector.multi_reduction <add>, %172, %cst_162 [1] : vector<64x32xf32> to vector<64xf32>
    %176 = vector.shape_cast %175 : vector<64xf32> to vector<64x1xf32>
    %cst_163 = arith.constant 3.200000e+01 : f32
    %177 = vector.broadcast %cst_163 : f32 to vector<64x1xf32>
    %178 = arith.divf %176, %177 : vector<64x1xf32>
    %179 = vector.broadcast %178 : vector<64x1xf32> to vector<64x32xf32>
    %180 = arith.subf %172, %179 : vector<64x32xf32>
    %181 = arith.mulf %180, %180 : vector<64x32xf32>
    %cst_164 = arith.constant dense<0.000000e+00> : vector<64xf32>
    %182 = vector.multi_reduction <add>, %181, %cst_164 [1] : vector<64x32xf32> to vector<64xf32>
    %183 = vector.shape_cast %182 : vector<64xf32> to vector<64x1xf32>
    %cst_165 = arith.constant 3.200000e+01 : f32
    %184 = vector.broadcast %cst_165 : f32 to vector<64x1xf32>
    %185 = arith.divf %183, %184 : vector<64x1xf32>
    %cst_166 = arith.constant 9.99999974E-6 : f32
    %186 = vector.broadcast %cst_166 : f32 to vector<64x1xf32>
    %187 = arith.addf %185, %186 : vector<64x1xf32>
    %188 = math.rsqrt %187 : vector<64x1xf32>
    %189 = vector.broadcast %188 : vector<64x1xf32> to vector<64x32xf32>
    %190 = arith.mulf %180, %189 : vector<64x32xf32>
    %191 = vector.broadcast %173 : vector<1x32xf32> to vector<64x32xf32>
    %192 = arith.mulf %190, %191 : vector<64x32xf32>
    %193 = vector.broadcast %174 : vector<1x32xf32> to vector<64x32xf32>
    %194 = arith.addf %192, %193 : vector<64x32xf32>
    %c0_167 = arith.constant 0 : index
    %c0_168 = arith.constant 0 : index
    %c0_169 = arith.constant 0 : index
    %195 = vector.load %arg4[%c0_167, %c0_168, %c0_169] : memref<2x32x32xf32, #tpu.memory_space<vmem>>, vector<1x32x32xf32>
    %196 = vector.shape_cast %195 : vector<1x32x32xf32> to vector<32x32xf32>
    %cst_170 = arith.constant dense<0.000000e+00> : vector<64x32xf32>
    %197 = tpu.matmul %194, %196, %cst_170 {dimension_numbers = #tpu.dot_dimension_numbers<[1], [1], [0], [0], [0, 0, 1, 0], [], []>} : vector<64x32xf32>, vector<32x32xf32>, vector<64x32xf32> -> vector<64x32xf32>
    %c3_171 = arith.constant 3 : index
    %c0_172 = arith.constant 0 : index
    %198 = vector.load %arg5[%c3_171, %c0_172] : memref<7x32xf32, #tpu.memory_space<vmem>>, vector<1x32xf32>
    %199 = vector.broadcast %198 : vector<1x32xf32> to vector<64x32xf32>
    %200 = arith.addf %197, %199 : vector<64x32xf32>
    %cst_173 = arith.constant 5.000000e-01 : f32
    %201 = vector.broadcast %cst_173 : f32 to vector<64x32xf32>
    %202 = arith.mulf %201, %200 : vector<64x32xf32>
    %cst_174 = arith.constant 0.707106769 : f32
    %203 = vector.broadcast %cst_174 : f32 to vector<64x32xf32>
    %204 = arith.mulf %200, %203 : vector<64x32xf32>
    %cst_175 = arith.constant 0.000000e+00 : f32
    %205 = vector.broadcast %cst_175 : f32 to vector<64x32xf32>
    %206 = arith.cmpf oge, %204, %205 : vector<64x32xf32>
    %cst_176 = arith.constant 1.000000e+00 : f32
    %cst_177 = arith.constant -1.000000e+00 : f32
    %207 = vector.broadcast %cst_176 : f32 to vector<64x32xf32>
    %208 = vector.broadcast %cst_177 : f32 to vector<64x32xf32>
    %209 = arith.select %206, %207, %208 : vector<64x32xi1>, vector<64x32xf32>
    %210 = math.absf %204 : vector<64x32xf32>
    %cst_178 = arith.constant 0.327591091 : f32
    %211 = vector.broadcast %cst_178 : f32 to vector<64x32xf32>
    %212 = arith.mulf %211, %210 : vector<64x32xf32>
    %cst_179 = arith.constant 1.000000e+00 : f32
    %213 = vector.broadcast %cst_179 : f32 to vector<64x32xf32>
    %214 = arith.addf %213, %212 : vector<64x32xf32>
    %cst_180 = arith.constant 1.000000e+00 : f32
    %215 = vector.broadcast %cst_180 : f32 to vector<64x32xf32>
    %216 = arith.divf %215, %214 : vector<64x32xf32>
    %cst_181 = arith.constant 1.06140542 : f32
    %217 = vector.broadcast %cst_181 : f32 to vector<64x32xf32>
    %218 = arith.mulf %216, %217 : vector<64x32xf32>
    %cst_182 = arith.constant -1.45315206 : f32
    %219 = vector.broadcast %cst_182 : f32 to vector<64x32xf32>
    %220 = arith.addf %219, %218 : vector<64x32xf32>
    %221 = arith.mulf %216, %220 : vector<64x32xf32>
    %cst_183 = arith.constant 1.42141378 : f32
    %222 = vector.broadcast %cst_183 : f32 to vector<64x32xf32>
    %223 = arith.addf %222, %221 : vector<64x32xf32>
    %224 = arith.mulf %216, %223 : vector<64x32xf32>
    %cst_184 = arith.constant -0.284496725 : f32
    %225 = vector.broadcast %cst_184 : f32 to vector<64x32xf32>
    %226 = arith.addf %225, %224 : vector<64x32xf32>
    %227 = arith.mulf %216, %226 : vector<64x32xf32>
    %cst_185 = arith.constant 0.254829586 : f32
    %228 = vector.broadcast %cst_185 : f32 to vector<64x32xf32>
    %229 = arith.addf %228, %227 : vector<64x32xf32>
    %230 = arith.mulf %216, %229 : vector<64x32xf32>
    %cst_186 = arith.constant 0.000000e+00 : f32
    %231 = vector.broadcast %cst_186 : f32 to vector<64x32xf32>
    %232 = arith.subf %231, %210 : vector<64x32xf32>
    %233 = arith.mulf %232, %210 : vector<64x32xf32>
    %234 = math.exp %233 : vector<64x32xf32>
    %235 = arith.mulf %230, %234 : vector<64x32xf32>
    %cst_187 = arith.constant 1.000000e+00 : f32
    %236 = vector.broadcast %cst_187 : f32 to vector<64x32xf32>
    %237 = arith.subf %236, %235 : vector<64x32xf32>
    %238 = arith.mulf %209, %237 : vector<64x32xf32>
    %cst_188 = arith.constant 1.000000e+00 : f32
    %239 = vector.broadcast %cst_188 : f32 to vector<64x32xf32>
    %240 = arith.addf %239, %238 : vector<64x32xf32>
    %241 = arith.mulf %202, %240 : vector<64x32xf32>
    %c1_189 = arith.constant 1 : index
    %c0_190 = arith.constant 0 : index
    %c0_191 = arith.constant 0 : index
    %242 = vector.load %arg4[%c1_189, %c0_190, %c0_191] : memref<2x32x32xf32, #tpu.memory_space<vmem>>, vector<1x32x32xf32>
    %243 = vector.shape_cast %242 : vector<1x32x32xf32> to vector<32x32xf32>
    %cst_192 = arith.constant dense<0.000000e+00> : vector<64x32xf32>
    %244 = tpu.matmul %241, %243, %cst_192 {dimension_numbers = #tpu.dot_dimension_numbers<[1], [1], [0], [0], [0, 0, 1, 0], [], []>} : vector<64x32xf32>, vector<32x32xf32>, vector<64x32xf32> -> vector<64x32xf32>
    %c4 = arith.constant 4 : index
    %c0_193 = arith.constant 0 : index
    %245 = vector.load %arg5[%c4, %c0_193] : memref<7x32xf32, #tpu.memory_space<vmem>>, vector<1x32xf32>
    %246 = vector.broadcast %245 : vector<1x32xf32> to vector<64x32xf32>
    %247 = arith.addf %244, %246 : vector<64x32xf32>
    %248 = arith.addf %194, %247 : vector<64x32xf32>
    %c5 = arith.constant 5 : index
    %c0_194 = arith.constant 0 : index
    %249 = vector.load %arg5[%c5, %c0_194] : memref<7x32xf32, #tpu.memory_space<vmem>>, vector<1x32xf32>
    %c6 = arith.constant 6 : index
    %c0_195 = arith.constant 0 : index
    %250 = vector.load %arg5[%c6, %c0_195] : memref<7x32xf32, #tpu.memory_space<vmem>>, vector<1x32xf32>
    %cst_196 = arith.constant dense<0.000000e+00> : vector<64xf32>
    %251 = vector.multi_reduction <add>, %248, %cst_196 [1] : vector<64x32xf32> to vector<64xf32>
    %252 = vector.shape_cast %251 : vector<64xf32> to vector<64x1xf32>
    %cst_197 = arith.constant 3.200000e+01 : f32
    %253 = vector.broadcast %cst_197 : f32 to vector<64x1xf32>
    %254 = arith.divf %252, %253 : vector<64x1xf32>
    %255 = vector.broadcast %254 : vector<64x1xf32> to vector<64x32xf32>
    %256 = arith.subf %248, %255 : vector<64x32xf32>
    %257 = arith.mulf %256, %256 : vector<64x32xf32>
    %cst_198 = arith.constant dense<0.000000e+00> : vector<64xf32>
    %258 = vector.multi_reduction <add>, %257, %cst_198 [1] : vector<64x32xf32> to vector<64xf32>
    %259 = vector.shape_cast %258 : vector<64xf32> to vector<64x1xf32>
    %cst_199 = arith.constant 3.200000e+01 : f32
    %260 = vector.broadcast %cst_199 : f32 to vector<64x1xf32>
    %261 = arith.divf %259, %260 : vector<64x1xf32>
    %cst_200 = arith.constant 9.99999974E-6 : f32
    %262 = vector.broadcast %cst_200 : f32 to vector<64x1xf32>
    %263 = arith.addf %261, %262 : vector<64x1xf32>
    %264 = math.rsqrt %263 : vector<64x1xf32>
    %265 = vector.broadcast %264 : vector<64x1xf32> to vector<64x32xf32>
    %266 = arith.mulf %256, %265 : vector<64x32xf32>
    %267 = vector.broadcast %249 : vector<1x32xf32> to vector<64x32xf32>
    %268 = arith.mulf %266, %267 : vector<64x32xf32>
    %269 = vector.broadcast %250 : vector<1x32xf32> to vector<64x32xf32>
    %270 = arith.addf %268, %269 : vector<64x32xf32>
    %c0_201 = arith.constant 0 : index
    %c0_202 = arith.constant 0 : index
    %271 = vector.load %arg7[%c0_201, %c0_202] : memref<64x32xf32, #tpu.memory_space<vmem>>, vector<64x32xf32>
    tpu.vector_store %arg7[%c0_201, %c0_202], %270 {strides = array<i32>} : memref<64x32xf32, #tpu.memory_space<vmem>>, vector<64x32xf32>,
    return
  }
  func.func @transform_0(%arg0: i32) -> (i32, i32) {
    %c0_i32 = arith.constant 0 : i32
    %c0_i32_0 = arith.constant 0 : i32
    %c0_i32_1 = arith.constant 0 : i32
    return %c0_i32, %c0_i32_0 : i32, i32
  }
  func.func @transform_1(%arg0: i32) -> (i32, i32, i32, i32) {
    %c0_i32 = arith.constant 0 : i32
    %c0_i32_0 = arith.constant 0 : i32
    %c0_i32_1 = arith.constant 0 : i32
    %c0_i32_2 = arith.constant 0 : i32
    %c0_i32_3 = arith.constant 0 : i32
    return %c0_i32, %c0_i32_0, %c0_i32_1, %c0_i32_2 : i32, i32, i32, i32
  }
  func.func @transform_2(%arg0: i32) -> (i32, i32, i32, i32) {
    %c0_i32 = arith.constant 0 : i32
    %c0_i32_0 = arith.constant 0 : i32
    %c0_i32_1 = arith.constant 0 : i32
    %c0_i32_2 = arith.constant 0 : i32
    %c0_i32_3 = arith.constant 0 : i32
    return %c0_i32, %c0_i32_0, %c0_i32_1, %c0_i32_2 : i32, i32, i32, i32
  }
  func.func @transform_3(%arg0: i32) -> (i32, i32, i32) {
    %c0_i32 = arith.constant 0 : i32
    %c0_i32_0 = arith.constant 0 : i32
    %c0_i32_1 = arith.constant 0 : i32
    %c0_i32_2 = arith.constant 0 : i32
    return %c0_i32, %c0_i32_0, %c0_i32_1 : i32, i32, i32
  }
  func.func @transform_4(%arg0: i32) -> (i32, i32) {
    %c0_i32 = arith.constant 0 : i32
    %c0_i32_0 = arith.constant 0 : i32
    %c0_i32_1 = arith.constant 0 : i32
    return %c0_i32, %c0_i32_0 : i32, i32
  }
  func.func @transform_5(%arg0: i32) -> (i32, i32, i32) {
    %c0_i32 = arith.constant 0 : i32
    %c0_i32_0 = arith.constant 0 : i32
    %c0_i32_1 = arith.constant 0 : i32
    %c0_i32_2 = arith.constant 0 : i32
    return %c0_i32, %c0_i32_0, %c0_i32_1 : i32, i32, i32
  }
  func.func @transform_6(%arg0: i32) -> (i32, i32) {
    %c0_i32 = arith.constant 0 : i32
    %c0_i32_0 = arith.constant 0 : i32
    %c0_i32_1 = arith.constant 0 : i32
    return %c0_i32, %c0_i32_0 : i32, i32
  }
}

</mosaic_0001>

<llo_original>
// kernel: vit_block_forward.1
$region0: #{vit_block_forward.1}
  #allocation0 [shape = 'u32[]', space=smem, size = 0x4, offset = 0x4, fixed_abs, tag = 'smem constant byte address 0x4 - core index']
  #allocation1 [shape = 'u32[72,128]{1,0:T(1,128)}', space=vmem, size = 0x9000, scoped, tag = 'internal scratch']
  %s0 = inlined_call_operand.hbm [shape: f32[64,32], index: 0, kind: input, shape index: {}]
  %s1 = inlined_call_operand.hbm [shape: f32[4,4,8,32], index: 1, kind: input, shape index: {}]
  %s2 = inlined_call_operand.hbm [shape: f32[3,4,1,8], index: 2, kind: input, shape index: {}]
  %s3 = inlined_call_operand.hbm [shape: f32[2,32,32], index: 3, kind: input, shape index: {}]
  %s4 = inlined_call_operand.hbm [shape: f32[7,32], index: 4, kind: input, shape index: {}]
  %s5 = inlined_call_operand.hbm [shape: f32[2,64,64], index: 5, kind: input, shape index: {}]
  %s6 = inlined_call_operand.hbm [shape: f32[64,32], index: 6, kind: output, shape index: {}]
  %s7 = sld [smem:[#allocation0]]
  $region58: #{vit_block_forward.1} parent=0
    _
  %s9 = ssub.s32 1, %s7
  %s10 = scalar_select 0, %s9, %s7
  $region1: #{vit_block_forward.1} parent=0
    #allocation2 [shape = 'u8[32768]{0}', space=vmem, size = 0x8000, scoped, tag = 'input window, operand 0, single buffered']
    #allocation3 [shape = 's32[1]{0}', space=sflag, size = 0x4, scoped, tag = 'scoped memory for vit_block_forward.1']
    #allocation4 [shape = 's32[1]{0}', space=sflag, size = 0x4, scoped, tag = 'scoped memory for vit_block_forward.1']
    #allocation5 [shape = 'u8[65536]{0}', space=vmem, size = 0x10000, scoped, tag = 'input window, operand 1, single buffered']
    #allocation6 [shape = 's32[1]{0}', space=sflag, size = 0x4, scoped, tag = 'scoped memory for vit_block_forward.1']
    #allocation7 [shape = 'u8[6144]{0}', space=vmem, size = 0x1800, scoped, tag = 'input window, operand 2, single buffered']
    #allocation8 [shape = 'u8[32768]{0}', space=vmem, size = 0x8000, scoped, tag = 'input window, operand 3, single buffered']
    #allocation9 [shape = 's32[1]{0}', space=sflag, size = 0x4, scoped, tag = 'scoped memory for vit_block_forward.1']
    #allocation10 [shape = 'u8[4096]{0}', space=vmem, size = 0x1000, scoped, tag = 'input window, operand 4, single buffered']
    #allocation11 [shape = 'u8[65536]{0}', space=vmem, size = 0x10000, scoped, tag = 'input window, operand 5, single buffered']
    #allocation12 [shape = 's32[1]{0}', space=sflag, size = 0x4, scoped, tag = 'scoped memory for vit_block_forward.1']
    #allocation13 [shape = 'u8[32768]{0}', space=vmem, size = 0x8000, scoped, tag = 'output window, operand 0, single buffered']
    %11 = vsyncpa [#allocation3], 0
    %12 = vsyncpa [#allocation6], 0
    %13 = vsyncpa [#allocation9], 0
    %14 = vsyncpa [#allocation12], 0
    %15 = vsyncpa [#allocation4], 0
    // Predicated region
    $region2: #{vit_block_forward.1} parent=1 // pred_check
      _
    $region3: #{vit_block_forward.1} parent=1 // pred_check_branch
      %17 = sbr.rel (0) target = $region5
    $region4: #{vit_block_forward.1} parent=1 // pred_region
      %19 = vsyncadd [#allocation3], 0
      %s20 = sshll.u32 %s0, 4
      %s21 = int_to_ptr.hbm [resolvable:$true] %s20
      %s22 = sshll.u32 [#allocation2], 4
      %s23 = int_to_ptr.vmem [resolvable:$true] %s22
      %28 = dma.hbm_to_vmem [thread:$0]  %s21, 1024, %s23, [#allocation3], 128, 128, 8
    $region5: #{vit_block_forward.1} parent=1 // pred_fallthru
      _
    // Predicated region
    $region6: #{vit_block_forward.1} parent=1 // pred_check
      _
    $region7: #{vit_block_forward.1} parent=1 // pred_check_branch
      %30 = sbr.rel (0) target = $region9
    $region8: #{vit_block_forward.1} parent=1 // pred_region
      %32 = vsyncadd [#allocation6], 0
      %s33 = sshll.u32 %s1, 4
      %s34 = int_to_ptr.hbm [resolvable:$true] %s33
      %s35 = sshll.u32 [#allocation5], 4
      %s36 = int_to_ptr.vmem [resolvable:$true] %s35
      %41 = dma.hbm_to_vmem [thread:$0]  %s34, 2048, %s36, [#allocation6], 128, 128, 8
    $region9: #{vit_block_forward.1} parent=1 // pred_fallthru
      _
    // Predicated region
    $region10: #{vit_block_forward.1} parent=1 // pred_check
      _
    $region11: #{vit_block_forward.1} parent=1 // pred_check_branch
      %43 = sbr.rel (0) target = $region13
    $region12: #{vit_block_forward.1} parent=1 // pred_region
      %45 = vsyncadd [#allocation6], 0
      %s46 = sshll.u32 %s2, 4
      %s47 = int_to_ptr.hbm [resolvable:$true] %s46
      %s48 = sshll.u32 [#allocation7], 4
      %s49 = int_to_ptr.vmem [resolvable:$true] %s48
      %54 = dma.hbm_to_vmem [thread:$0]  %s47, 192, %s49, [#allocation6], 16, 16, 1
    $region13: #{vit_block_forward.1} parent=1 // pred_fallthru
      _
    // Predicated region
    $region14: #{vit_block_forward.1} parent=1 // pred_check
      _
    $region15: #{vit_block_forward.1} parent=1 // pred_check_branch
      %56 = sbr.rel (0) target = $region17
    $region16: #{vit_block_forward.1} parent=1 // pred_region
      %58 = vsyncadd [#allocation9], 0
      %s59 = sshll.u32 %s3, 4
      %s60 = int_to_ptr.hbm [resolvable:$true] %s59
      %s61 = sshll.u32 [#allocation8], 4
      %s62 = int_to_ptr.vmem [resolvable:$true] %s61
      %67 = dma.hbm_to_vmem [thread:$0]  %s60, 1024, %s62, [#allocation9], 128, 128, 8
    $region17: #{vit_block_forward.1} parent=1 // pred_fallthru
      _
    // Predicated region
    $region18: #{vit_block_forward.1} parent=1 // pred_check
      _
    $region19: #{vit_block_forward.1} parent=1 // pred_check_branch
      %69 = sbr.rel (0) target = $region21
    $region20: #{vit_block_forward.1} parent=1 // pred_region
      %71 = vsyncadd [#allocation9], 0
      %s73 = sshll.u32 %s4, 4
      %s74 = int_to_ptr.hbm [resolvable:$true] %s73
      %s75 = sshll.u32 [#allocation10], 4
      %s76 = int_to_ptr.vmem [resolvable:$true] %s75
      %78 = dma.hbm_to_vmem [thread:$0]  %s74, 128, %s76, [#allocation9]
    $region21: #{vit_block_forward.1} parent=1 // pred_fallthru
      _
    // Predicated region
    $region22: #{vit_block_forward.1} parent=1 // pred_check
      _
    $region23: #{vit_block_forward.1} parent=1 // pred_check_branch
      %80 = sbr.rel (0) target = $region25
    $region24: #{vit_block_forward.1} parent=1 // pred_region
      %82 = vsyncadd [#allocation12], 0
      %s83 = sshll.u32 %s5, 4
      %s84 = int_to_ptr.hbm [resolvable:$true] %s83
      %s85 = sshll.u32 [#allocation11], 4
      %s86 = int_to_ptr.vmem [resolvable:$true] %s85
      %91 = dma.hbm_to_vmem [thread:$0]  %s84, 2048, %s86, [#allocation12], 128, 128, 8
    $region25: #{vit_block_forward.1} parent=1 // pred_fallthru
      _
    // Predicated region
    $region26: #{vit_block_forward.1} parent=1 // pred_check
      _
    $region27: #{vit_block_forward.1} parent=1 // pred_check_branch
      %93 = sbr.rel (0) target = $region29
    $region28: #{vit_block_forward.1} parent=1 // pred_region
      %95 = dma.done [#allocation3], 1024
    $region29: #{vit_block_forward.1} parent=1 // pred_fallthru
      _
    // Predicated region
    $region30: #{vit_block_forward.1} parent=1 // pred_check
      _
    $region31: #{vit_block_forward.1} parent=1 // pred_check_branch
      %97 = sbr.rel (0) target = $region33
    $region32: #{vit_block_forward.1} parent=1 // pred_region
      %99 = dma.done [#allocation6], 2048
    $region33: #{vit_block_forward.1} parent=1 // pred_fallthru
      _
    // Predicated region
    $region34: #{vit_block_forward.1} parent=1 // pred_check
      _
    $region35: #{vit_block_forward.1} parent=1 // pred_check_branch
      %101 = sbr.rel (0) target = $region37
    $region36: #{vit_block_forward.1} parent=1 // pred_region
      %103 = dma.done [#allocation6], 192
    $region37: #{vit_block_forward.1} parent=1 // pred_fallthru
      _
    // Predicated region
    $region38: #{vit_block_forward.1} parent=1 // pred_check
      _
    $region39: #{vit_block_forward.1} parent=1 // pred_check_branch
      %105 = sbr.rel (0) target = $region41
    $region40: #{vit_block_forward.1} parent=1 // pred_region
      %107 = dma.done [#allocation9], 1024
    $region41: #{vit_block_forward.1} parent=1 // pred_fallthru
      _
    // Predicated region
    $region42: #{vit_block_forward.1} parent=1 // pred_check
      _
    $region43: #{vit_block_forward.1} parent=1 // pred_check_branch
      %109 = sbr.rel (0) target = $region45
    $region44: #{vit_block_forward.1} parent=1 // pred_region
      %111 = dma.done [#allocation9], 128
    $region45: #{vit_block_forward.1} parent=1 // pred_fallthru
      _
    // Predicated region
    $region46: #{vit_block_forward.1} parent=1 // pred_check
      _
    $region47: #{vit_block_forward.1} parent=1 // pred_check_branch
      %113 = sbr.rel (0) target = $region49
    $region48: #{vit_block_forward.1} parent=1 // pred_region
      %115 = dma.done [#allocation12], 2048
    $region49: #{vit_block_forward.1} parent=1 // pred_fallthru
      _
    %v116 = vld [vmem:[#allocation2] sm:$0xff]
    %v117 = vld [vmem:[#allocation2 + $0x8] sm:$0xff]
    %v118 = vld [vmem:[#allocation2 + $0x10] sm:$0xff]
    %v119 = vld [vmem:[#allocation2 + $0x18] sm:$0xff]
    %v120 = vld [vmem:[#allocation2 + $0x20] sm:$0xff]
    %v121 = vld [vmem:[#allocation2 + $0x28] sm:$0xff]
    %v122 = vld [vmem:[#allocation2 + $0x30] sm:$0xff]
    %v123 = vld [vmem:[#allocation2 + $0x38] sm:$0xff]
    %v124 = vld [vmem:[#allocation11] sm:$0xff]
    %v125 = vld [vmem:[#allocation11 + $0x8] sm:$0xff]
    %v126 = vld [vmem:[#allocation11 + $0x10] sm:$0xff]
    %v127 = vld [vmem:[#allocation11 + $0x18] sm:$0xff]
    %v128 = vld [vmem:[#allocation11 + $0x20] sm:$0xff]
    %v129 = vld [vmem:[#allocation11 + $0x28] sm:$0xff]
    %v130 = vld [vmem:[#allocation11 + $0x30] sm:$0xff]
    %v131 = vld [vmem:[#allocation11 + $0x38] sm:$0xff]
    %s132 = scalar_lea.vmem [#allocation11], 64
    %v133 = vld [vmem:[%s132] sm:$0xff]
    %v134 = vld [vmem:[%s132 + $0x8] sm:$0xff]
    %v135 = vld [vmem:[%s132 + $0x10] sm:$0xff]
    %v136 = vld [vmem:[%s132 + $0x18] sm:$0xff]
    %v137 = vld [vmem:[%s132 + $0x20] sm:$0xff]
    %v138 = vld [vmem:[%s132 + $0x28] sm:$0xff]
    %v139 = vld [vmem:[%s132 + $0x30] sm:$0xff]
    %v140 = vld [vmem:[%s132 + $0x38] sm:$0xff]
    %vm141 = vcmask 523264
    %v143 = vsel %vm141, %v124, 0
    %v146 = vsel %vm141, %v125, 0
    %v149 = vsel %vm141, %v126, 0
    %v152 = vsel %vm141, %v127, 0
    %v155 = vsel %vm141, %v128, 0
    %v158 = vsel %vm141, %v129, 0
    %v161 = vsel %vm141, %v130, 0
    %v164 = vsel %vm141, %v131, 0
    %166 = vmatpush.msra.mxu0 0.0
    %167 = vmatpush.msra.mxu0 0.0
    %168 = vmatpush.msra.mxu0 0.0
    %169 = vmatpush.msra.mxu0 0.0
    %170 = vmatpush.msra.mxu0 0.0
    %171 = vmatpush.msra.mxu0 0.0
    %172 = vmatpush.msra.mxu0 0.0
    %173 = vmatpush.msra.mxu0 0.0
    %174 = vmatpush.msra.mxu0 %v123
    %175 = vmatpush.msra.mxu0 %v122
    %176 = vmatpush.msra.mxu0 %v121
    %177 = vmatpush.msra.mxu0 %v120
    %178 = vmatpush.msra.mxu0 %v119
    %179 = vmatpush.msra.mxu0 %v118
    %180 = vmatpush.msra.mxu0 %v117
    %181 = vmatpush.msra.mxu0 %v116
    %182 = vmatmul.f32.gmra.mxu0 %v143
    %v183 = vpop.f32.mrf.mxu0
    %v184 = vadd.f32 0.0, %v183
    %185 = vmatmul.f32.gmra.mxu0 %v146
    %v186 = vpop.f32.mrf.mxu0
    %v187 = vadd.f32 0.0, %v186
    %188 = vmatmul.f32.gmra.mxu0 %v149
    %v189 = vpop.f32.mrf.mxu0
    %v190 = vadd.f32 0.0, %v189
    %191 = vmatmul.f32.gmra.mxu0 %v152
    %v192 = vpop.f32.mrf.mxu0
    %v193 = vadd.f32 0.0, %v192
    %194 = vmatmul.f32.gmra.mxu0 %v155
    %v195 = vpop.f32.mrf.mxu0
    %v196 = vadd.f32 0.0, %v195
    %197 = vmatmul.f32.gmra.mxu0 %v158
    %v198 = vpop.f32.mrf.mxu0
    %v199 = vadd.f32 0.0, %v198
    %200 = vmatmul.f32.gmra.mxu0 %v161
    %v201 = vpop.f32.mrf.mxu0
    %v202 = vadd.f32 0.0, %v201
    %203 = vmatmul.f32.gmra.mxu0 %v164
    %v204 = vpop.f32.mrf.mxu0
    %v205 = vadd.f32 0.0, %v204
    %206 = vdwg.mxu0
    %v207 = vld [vmem:[#allocation5] sm:$0xff]
    %s208 = scalar_lea.vmem [#allocation5], 32
    %v209 = vld [vmem:[%s208] sm:$0xff]
    %s210 = scalar_lea.vmem [#allocation5], 64
    %v211 = vld [vmem:[%s210] sm:$0xff]
    %s212 = scalar_lea.vmem [#allocation5], 96
    %v213 = vld [vmem:[%s212] sm:$0xff]
    %v214 = vld [vmem:[#allocation7] sm:$0x1]
    %v216 = vperm.slane %v214, 0
    %vm218 = vcmask 261120
    %v220 = vsel %vm218, %v184, 0
    %v223 = vsel %vm218, %v187, 0
    %v226 = vsel %vm218, %v190, 0
    %v229 = vsel %vm218, %v193, 0
    %v232 = vsel %vm218, %v196, 0
    %v235 = vsel %vm218, %v199, 0
    %v238 = vsel %vm218, %v202, 0
    %v241 = vsel %vm218, %v205, 0
    %v244 = vsel %vm218, %v207, 0
    %246 = vmatpush.xpose.msra.mxu0 0.0
    %247 = vmatpush.xpose.msra.mxu0 0.0
    %248 = vmatpush.xpose.msra.mxu0 0.0
    %249 = vmatpush.xpose.msra.mxu0 0.0
    %250 = vmatpush.xpose.msra.mxu0 0.0
    %251 = vmatpush.xpose.msra.mxu0 0.0
    %252 = vmatpush.xpose.msra.mxu0 0.0
    %253 = vmatpush.xpose.msra.mxu0 0.0
    %254 = vmatpush.xpose.msra.mxu0 0.0
    %255 = vmatpush.xpose.msra.mxu0 0.0
    %256 = vmatpush.xpose.msra.mxu0 0.0
    %257 = vmatpush.xpose.msra.mxu0 0.0
    %258 = vmatpush.xpose.msra.mxu0 0.0
    %259 = vmatpush.xpose.msra.mxu0 0.0
    %260 = vmatpush.xpose.msra.mxu0 0.0
    %261 = vmatpush.xpose.msra.mxu0 %v244
    %262 = vmatmul.f32.gmra.mxu0 %v220
    %v263 = vpop.f32.mrf.mxu0
    %v264 = vadd.f32 %v216, %v263
    %265 = vmatmul.f32.gmra.mxu0 %v223
    %v266 = vpop.f32.mrf.mxu0
    %v267 = vadd.f32 %v216, %v266
    %268 = vmatmul.f32.gmra.mxu0 %v226
    %v269 = vpop.f32.mrf.mxu0
    %v270 = vadd.f32 %v216, %v269
    %271 = vmatmul.f32.gmra.mxu0 %v229
    %v272 = vpop.f32.mrf.mxu0
    %v273 = vadd.f32 %v216, %v272
    %274 = vmatmul.f32.gmra.mxu0 %v232
    %v275 = vpop.f32.mrf.mxu0
    %v276 = vadd.f32 %v216, %v275
    %277 = vmatmul.f32.gmra.mxu0 %v235
    %v278 = vpop.f32.mrf.mxu0
    %v279 = vadd.f32 %v216, %v278
    %280 = vmatmul.f32.gmra.mxu0 %v238
    %v281 = vpop.f32.mrf.mxu0
    %v282 = vadd.f32 %v216, %v281
    %283 = vmatmul.f32.gmra.mxu0 %v241
    %v284 = vpop.f32.mrf.mxu0
    %v285 = vadd.f32 %v216, %v284
    %286 = vdwg.mxu0
    %s287 = scalar_lea.vmem [#allocation7], 4
    %v288 = vld [vmem:[%s287] sm:$0x1]
    %v290 = vperm.slane %v288, 0
    %v293 = vsel %vm218, %v116, 0
    %v296 = vsel %vm218, %v117, 0
    %v299 = vsel %vm218, %v118, 0
    %v302 = vsel %vm218, %v119, 0
    %v305 = vsel %vm218, %v120, 0
    %v308 = vsel %vm218, %v121, 0
    %v311 = vsel %vm218, %v122, 0
    %v314 = vsel %vm218, %v123, 0
    %v317 = vsel %vm218, %v209, 0
    %319 = vmatpush.xpose.msra.mxu0 0.0
    %320 = vmatpush.xpose.msra.mxu0 0.0
    %321 = vmatpush.xpose.msra.mxu0 0.0
    %322 = vmatpush.xpose.msra.mxu0 0.0
    %323 = vmatpush.xpose.msra.mxu0 0.0
    %324 = vmatpush.xpose.msra.mxu0 0.0
    %325 = vmatpush.xpose.msra.mxu0 0.0
    %326 = vmatpush.xpose.msra.mxu0 0.0
    %327 = vmatpush.xpose.msra.mxu0 0.0
    %328 = vmatpush.xpose.msra.mxu0 0.0
    %329 = vmatpush.xpose.msra.mxu0 0.0
    %330 = vmatpush.xpose.msra.mxu0 0.0
    %331 = vmatpush.xpose.msra.mxu0 0.0
    %332 = vmatpush.xpose.msra.mxu0 0.0
    %333 = vmatpush.xpose.msra.mxu0 0.0
    %334 = vmatpush.xpose.msra.mxu0 %v317
    %335 = vmatmul.f32.gmra.mxu0 %v293
    %v336 = vpop.f32.mrf.mxu0
    %v337 = vadd.f32 %v290, %v336
    %338 = vmatmul.f32.gmra.mxu0 %v296
    %v339 = vpop.f32.mrf.mxu0
    %v340 = vadd.f32 %v290, %v339
    %341 = vmatmul.f32.gmra.mxu0 %v299
    %v342 = vpop.f32.mrf.mxu0
    %v343 = vadd.f32 %v290, %v342
    %344 = vmatmul.f32.gmra.mxu0 %v302
    %v345 = vpop.f32.mrf.mxu0
    %v346 = vadd.f32 %v290, %v345
    %347 = vmatmul.f32.gmra.mxu0 %v305
    %v348 = vpop.f32.mrf.mxu0
    %v349 = vadd.f32 %v290, %v348
    %350 = vmatmul.f32.gmra.mxu0 %v308
    %v351 = vpop.f32.mrf.mxu0
    %v352 = vadd.f32 %v290, %v351
    %353 = vmatmul.f32.gmra.mxu0 %v311
    %v354 = vpop.f32.mrf.mxu0
    %v355 = vadd.f32 %v290, %v354
    %356 = vmatmul.f32.gmra.mxu0 %v314
    %v357 = vpop.f32.mrf.mxu0
    %v358 = vadd.f32 %v290, %v357
    %359 = vdwg.mxu0
    %s360 = scalar_lea.vmem [#allocation7], 8
    %v361 = vld [vmem:[%s360] sm:$0x1]
    %v363 = vperm.slane %v361, 0
    %v366 = vsel %vm218, %v211, 0
    %368 = vmatpush.xpose.msra.mxu0 0.0
    %369 = vmatpush.xpose.msra.mxu0 0.0
    %370 = vmatpush.xpose.msra.mxu0 0.0
    %371 = vmatpush.xpose.msra.mxu0 0.0
    %372 = vmatpush.xpose.msra.mxu0 0.0
    %373 = vmatpush.xpose.msra.mxu0 0.0
    %374 = vmatpush.xpose.msra.mxu0 0.0
    %375 = vmatpush.xpose.msra.mxu0 0.0
    %376 = vmatpush.xpose.msra.mxu0 0.0
    %377 = vmatpush.xpose.msra.mxu0 0.0
    %378 = vmatpush.xpose.msra.mxu0 0.0
    %379 = vmatpush.xpose.msra.mxu0 0.0
    %380 = vmatpush.xpose.msra.mxu0 0.0
    %381 = vmatpush.xpose.msra.mxu0 0.0
    %382 = vmatpush.xpose.msra.mxu0 0.0
    %383 = vmatpush.xpose.msra.mxu0 %v366
    %384 = vmatmul.f32.gmra.mxu0 %v293
    %v385 = vpop.f32.mrf.mxu0
    %v386 = vadd.f32 %v363, %v385
    %387 = vmatmul.f32.gmra.mxu0 %v296
    %v388 = vpop.f32.mrf.mxu0
    %v389 = vadd.f32 %v363, %v388
    %390 = vmatmul.f32.gmra.mxu0 %v299
    %v391 = vpop.f32.mrf.mxu0
    %v392 = vadd.f32 %v363, %v391
    %393 = vmatmul.f32.gmra.mxu0 %v302
    %v394 = vpop.f32.mrf.mxu0
    %v395 = vadd.f32 %v363, %v394
    %396 = vmatmul.f32.gmra.mxu0 %v305
    %v397 = vpop.f32.mrf.mxu0
    %v398 = vadd.f32 %v363, %v397
    %399 = vmatmul.f32.gmra.mxu0 %v308
    %v400 = vpop.f32.mrf.mxu0
    %v401 = vadd.f32 %v363, %v400
    %402 = vmatmul.f32.gmra.mxu0 %v311
    %v403 = vpop.f32.mrf.mxu0
    %v404 = vadd.f32 %v363, %v403
    %405 = vmatmul.f32.gmra.mxu0 %v314
    %v406 = vpop.f32.mrf.mxu0
    %v407 = vadd.f32 %v363, %v406
    %408 = vdwg.mxu0
    %v409 = vmul.f32 %v264, 0.35355338
    %v410 = vmul.f32 %v267, 0.35355338
    %v411 = vmul.f32 %v270, 0.35355338
    %v412 = vmul.f32 %v273, 0.35355338
    %v413 = vmul.f32 %v276, 0.35355338
    %v414 = vmul.f32 %v279, 0.35355338
    %v415 = vmul.f32 %v282, 0.35355338
    %v416 = vmul.f32 %v285, 0.35355338
    %vm417 = vcmask 64512
    %v419 = vsel %vm417, %v409, 0
    %v422 = vsel %vm417, %v410, 0
    %v425 = vsel %vm417, %v411, 0
    %v428 = vsel %vm417, %v412, 0
    %v431 = vsel %vm417, %v413, 0
    %v434 = vsel %vm417, %v414, 0
    %v437 = vsel %vm417, %v415, 0
    %v440 = vsel %vm417, %v416, 0
    %v443 = vsel %vm417, %v337, 0
    %v446 = vsel %vm417, %v340, 0
    %v449 = vsel %vm417, %v343, 0
    %v452 = vsel %vm417, %v346, 0
    %v455 = vsel %vm417, %v349, 0
    %v458 = vsel %vm417, %v352, 0
    %v461 = vsel %vm417, %v355, 0
    %v464 = vsel %vm417, %v358, 0
    %466 = vmatpush.xpose.msra.mxu0 0.0
    %467 = vmatpush.xpose.msra.mxu0 0.0
    %468 = vmatpush.xpose.msra.mxu0 0.0
    %469 = vmatpush.xpose.msra.mxu0 0.0
    %470 = vmatpush.xpose.msra.mxu0 0.0
    %471 = vmatpush.xpose.msra.mxu0 0.0
    %472 = vmatpush.xpose.msra.mxu0 0.0
    %473 = vmatpush.xpose.msra.mxu0 0.0
    %474 = vmatpush.xpose.msra.mxu0 %v464
    %475 = vmatpush.xpose.msra.mxu0 %v461
    %476 = vmatpush.xpose.msra.mxu0 %v458
    %477 = vmatpush.xpose.msra.mxu0 %v455
    %478 = vmatpush.xpose.msra.mxu0 %v452
    %479 = vmatpush.xpose.msra.mxu0 %v449
    %480 = vmatpush.xpose.msra.mxu0 %v446
    %481 = vmatpush.xpose.msra.mxu0 %v443
    %482 = vmatmul.f32.gmra.mxu0 %v419
    %v483 = vpop.f32.mrf.mxu0
    %v484 = vadd.f32 0.0, %v483
    %485 = vmatmul.f32.gmra.mxu0 %v422
    %v486 = vpop.f32.mrf.mxu0
    %v487 = vadd.f32 0.0, %v486
    %488 = vmatmul.f32.gmra.mxu0 %v425
    %v489 = vpop.f32.mrf.mxu0
    %v490 = vadd.f32 0.0, %v489
    %491 = vmatmul.f32.gmra.mxu0 %v428
    %v492 = vpop.f32.mrf.mxu0
    %v493 = vadd.f32 0.0, %v492
    %494 = vmatmul.f32.gmra.mxu0 %v431
    %v495 = vpop.f32.mrf.mxu0
    %v496 = vadd.f32 0.0, %v495
    %497 = vmatmul.f32.gmra.mxu0 %v434
    %v498 = vpop.f32.mrf.mxu0
    %v499 = vadd.f32 0.0, %v498
    %500 = vmatmul.f32.gmra.mxu0 %v437
    %v501 = vpop.f32.mrf.mxu0
    %v502 = vadd.f32 0.0, %v501
    %503 = vmatmul.f32.gmra.mxu0 %v440
    %v504 = vpop.f32.mrf.mxu0
    %v505 = vadd.f32 0.0, %v504
    %506 = vdwg.mxu0
    %v507 = vsel %vm141, %v484, -inf
    %508 = vmax.xlane.f32.xlu0 %v507
    %v509 = vpop.xlane.xlu0 %508
    %v510 = vsel %vm141, %v487, -inf
    %511 = vmax.xlane.f32.xlu0 %v510
    %v512 = vpop.xlane.xlu0 %511
    %v513 = vsel %vm141, %v490, -inf
    %514 = vmax.xlane.f32.xlu0 %v513
    %v515 = vpop.xlane.xlu0 %514
    %v516 = vsel %vm141, %v493, -inf
    %517 = vmax.xlane.f32.xlu0 %v516
    %v518 = vpop.xlane.xlu0 %517
    %v519 = vsel %vm141, %v496, -inf
    %520 = vmax.xlane.f32.xlu0 %v519
    %v521 = vpop.xlane.xlu0 %520
    %v522 = vsel %vm141, %v499, -inf
    %523 = vmax.xlane.f32.xlu0 %v522
    %v524 = vpop.xlane.xlu0 %523
    %v525 = vsel %vm141, %v502, -inf
    %526 = vmax.xlane.f32.xlu0 %v525
    %v527 = vpop.xlane.xlu0 %526
    %v528 = vsel %vm141, %v505, -inf
    %529 = vmax.xlane.f32.xlu0 %v528
    %v530 = vpop.xlane.xlu0 %529
    %v531 = vsub.f32 %v484, %v509
    %v532 = vsub.f32 %v487, %v512
    %v533 = vsub.f32 %v490, %v515
    %v534 = vsub.f32 %v493, %v518
    %v535 = vsub.f32 %v496, %v521
    %v536 = vsub.f32 %v499, %v524
    %v537 = vsub.f32 %v502, %v527
    %v538 = vsub.f32 %v505, %v530
    %v539 = vmul.f32 %v531, 1.442695
    %v540 = vpow.pop %v539
    %v541 = vmul.f32 %v532, 1.442695
    %v542 = vpow.pop %v541
    %v543 = vmul.f32 %v533, 1.442695
    %v544 = vpow.pop %v543
    %v545 = vmul.f32 %v534, 1.442695
    %v546 = vpow.pop %v545
    %v547 = vmul.f32 %v535, 1.442695
    %v548 = vpow.pop %v547
    %v549 = vmul.f32 %v536, 1.442695
    %v550 = vpow.pop %v549
    %v551 = vmul.f32 %v537, 1.442695
    %v552 = vpow.pop %v551
    %v553 = vmul.f32 %v538, 1.442695
    %v554 = vpow.pop %v553
    %v555 = vmul.f32 %v540, %v133
    %v556 = vmul.f32 %v542, %v134
    %v557 = vmul.f32 %v544, %v135
    %v558 = vmul.f32 %v546, %v136
    %v559 = vmul.f32 %v548, %v137
    %v560 = vmul.f32 %v550, %v138
    %v561 = vmul.f32 %v552, %v139
    %v562 = vmul.f32 %v554, %v140
    %v563 = vsel %vm141, %v555, 0.0
    %564 = vadd.xlane.f32.xlu0 %v563
    %v565 = vpop.xlane.xlu0 %564
    %v566 = vsel %vm141, %v556, 0.0
    %567 = vadd.xlane.f32.xlu0 %v566
    %v568 = vpop.xlane.xlu0 %567
    %v569 = vsel %vm141, %v557, 0.0
    %570 = vadd.xlane.f32.xlu0 %v569
    %v571 = vpop.xlane.xlu0 %570
    %v572 = vsel %vm141, %v558, 0.0
    %573 = vadd.xlane.f32.xlu0 %v572
    %v574 = vpop.xlane.xlu0 %573
    %v575 = vsel %vm141, %v559, 0.0
    %576 = vadd.xlane.f32.xlu0 %v575
    %v577 = vpop.xlane.xlu0 %576
    %v578 = vsel %vm141, %v560, 0.0
    %579 = vadd.xlane.f32.xlu0 %v578
    %v580 = vpop.xlane.xlu0 %579
    %v581 = vsel %vm141, %v561, 0.0
    %582 = vadd.xlane.f32.xlu0 %v581
    %v583 = vpop.xlane.xlu0 %582
    %v584 = vsel %vm141, %v562, 0.0
    %585 = vadd.xlane.f32.xlu0 %v584
    %v586 = vpop.xlane.xlu0 %585
    %v587 = vrcp.pop %v565
    %v588 = vmul.f32 %v565, %v587
    %v589 = vsub.f32 1.0, %v588
    %v590 = vmul.f32 %v587, %v589
    %v591 = vadd.f32 %v587, %v590
    %vm592 = vweird.f32 %v565
    %vm593 = vweird.f32 %v587
    %vm594 = vmor %vm592, %vm593
    %v595 = vsel %vm594, %v587, %v591
    %v596 = vand.u32 2147483647, %v565
    %vm597 = vcmp.eq.f32.partialorder %v596, 8.507059e+37
    %v598 = vand.u32 %v565, 2147483648
    %v599 = vor.u32 1.1754944e-38, %v598
    %v600 = vsel %vm597, %v599, %v595
    %v601 = vmul.f32 1.0, %v600
    %v602 = vrcp.pop %v568
    %v603 = vmul.f32 %v568, %v602
    %v604 = vsub.f32 1.0, %v603
    %v605 = vmul.f32 %v602, %v604
    %v606 = vadd.f32 %v602, %v605
    %vm607 = vweird.f32 %v568
    %vm608 = vweird.f32 %v602
    %vm609 = vmor %vm607, %vm608
    %v610 = vsel %vm609, %v602, %v606
    %v611 = vand.u32 2147483647, %v568
    %vm612 = vcmp.eq.f32.partialorder %v611, 8.507059e+37
    %v613 = vand.u32 %v568, 2147483648
    %v614 = vor.u32 1.1754944e-38, %v613
    %v615 = vsel %vm612, %v614, %v610
    %v616 = vmul.f32 1.0, %v615
    %v617 = vrcp.pop %v571
    %v618 = vmul.f32 %v571, %v617
    %v619 = vsub.f32 1.0, %v618
    %v620 = vmul.f32 %v617, %v619
    %v621 = vadd.f32 %v617, %v620
    %vm622 = vweird.f32 %v571
    %vm623 = vweird.f32 %v617
    %vm624 = vmor %vm622, %vm623
    %v625 = vsel %vm624, %v617, %v621
    %v626 = vand.u32 2147483647, %v571
    %vm627 = vcmp.eq.f32.partialorder %v626, 8.507059e+37
    %v628 = vand.u32 %v571, 2147483648
    %v629 = vor.u32 1.1754944e-38, %v628
    %v630 = vsel %vm627, %v629, %v625
    %v631 = vmul.f32 1.0, %v630
    %v632 = vrcp.pop %v574
    %v633 = vmul.f32 %v574, %v632
    %v634 = vsub.f32 1.0, %v633
    %v635 = vmul.f32 %v632, %v634
    %v636 = vadd.f32 %v632, %v635
    %vm637 = vweird.f32 %v574
    %vm638 = vweird.f32 %v632
    %vm639 = vmor %vm637, %vm638
    %v640 = vsel %vm639, %v632, %v636
    %v641 = vand.u32 2147483647, %v574
    %vm642 = vcmp.eq.f32.partialorder %v641, 8.507059e+37
    %v643 = vand.u32 %v574, 2147483648
    %v644 = vor.u32 1.1754944e-38, %v643
    %v645 = vsel %vm642, %v644, %v640
    %v646 = vmul.f32 1.0, %v645
    %v647 = vrcp.pop %v577
    %v648 = vmul.f32 %v577, %v647
    %v649 = vsub.f32 1.0, %v648
    %v650 = vmul.f32 %v647, %v649
    %v651 = vadd.f32 %v647, %v650
    %vm652 = vweird.f32 %v577
    %vm653 = vweird.f32 %v647
    %vm654 = vmor %vm652, %vm653
    %v655 = vsel %vm654, %v647, %v651
    %v656 = vand.u32 2147483647, %v577
    %vm657 = vcmp.eq.f32.partialorder %v656, 8.507059e+37
    %v658 = vand.u32 %v577, 2147483648
    %v659 = vor.u32 1.1754944e-38, %v658
    %v660 = vsel %vm657, %v659, %v655
    %v661 = vmul.f32 1.0, %v660
    %v662 = vrcp.pop %v580
    %v663 = vmul.f32 %v580, %v662
    %v664 = vsub.f32 1.0, %v663
    %v665 = vmul.f32 %v662, %v664
    %v666 = vadd.f32 %v662, %v665
    %vm667 = vweird.f32 %v580
    %vm668 = vweird.f32 %v662
    %vm669 = vmor %vm667, %vm668
    %v670 = vsel %vm669, %v662, %v666
    %v671 = vand.u32 2147483647, %v580
    %vm672 = vcmp.eq.f32.partialorder %v671, 8.507059e+37
    %v673 = vand.u32 %v580, 2147483648
    %v674 = vor.u32 1.1754944e-38, %v673
    %v675 = vsel %vm672, %v674, %v670
    %v676 = vmul.f32 1.0, %v675
    %v677 = vrcp.pop %v583
    %v678 = vmul.f32 %v583, %v677
    %v679 = vsub.f32 1.0, %v678
    %v680 = vmul.f32 %v677, %v679
    %v681 = vadd.f32 %v677, %v680
    %vm682 = vweird.f32 %v583
    %vm683 = vweird.f32 %v677
    %vm684 = vmor %vm682, %vm683
    %v685 = vsel %vm684, %v677, %v681
    %v686 = vand.u32 2147483647, %v583
    %vm687 = vcmp.eq.f32.partialorder %v686, 8.507059e+37
    %v688 = vand.u32 %v583, 2147483648
    %v689 = vor.u32 1.1754944e-38, %v688
    %v690 = vsel %vm687, %v689, %v685
    %v691 = vmul.f32 1.0, %v690
    %v692 = vrcp.pop %v586
    %v693 = vmul.f32 %v586, %v692
    %v694 = vsub.f32 1.0, %v693
    %v695 = vmul.f32 %v692, %v694
    %v696 = vadd.f32 %v692, %v695
    %vm697 = vweird.f32 %v586
    %vm698 = vweird.f32 %v692
    %vm699 = vmor %vm697, %vm698
    %v700 = vsel %vm699, %v692, %v696
    %v701 = vand.u32 2147483647, %v586
    %vm702 = vcmp.eq.f32.partialorder %v701, 8.507059e+37
    %v703 = vand.u32 %v586, 2147483648
    %v704 = vor.u32 1.1754944e-38, %v703
    %v705 = vsel %vm702, %v704, %v700
    %v706 = vmul.f32 1.0, %v705
    %v707 = vmul.f32 %v555, %v601
    %v708 = vmul.f32 %v556, %v616
    %v709 = vmul.f32 %v557, %v631
    %v710 = vmul.f32 %v558, %v646
    %v711 = vmul.f32 %v559, %v661
    %v712 = vmul.f32 %v560, %v676
    %v713 = vmul.f32 %v561, %v691
    %v714 = vmul.f32 %v562, %v706
    %v716 = vsel %vm141, %v707, 0
    %v719 = vsel %vm141, %v708, 0
    %v722 = vsel %vm141, %v709, 0
    %v725 = vsel %vm141, %v710, 0
    %v728 = vsel %vm141, %v711, 0
    %v731 = vsel %vm141, %v712, 0
    %v734 = vsel %vm141, %v713, 0
    %v737 = vsel %vm141, %v714, 0
    %739 = vmatpush.msra.mxu0 0.0
    %740 = vmatpush.msra.mxu0 0.0
    %741 = vmatpush.msra.mxu0 0.0
    %742 = vmatpush.msra.mxu0 0.0
    %743 = vmatpush.msra.mxu0 0.0
    %744 = vmatpush.msra.mxu0 0.0
    %745 = vmatpush.msra.mxu0 0.0
    %746 = vmatpush.msra.mxu0 0.0
    %747 = vmatpush.msra.mxu0 %v407
    %748 = vmatpush.msra.mxu0 %v404
    %749 = vmatpush.msra.mxu0 %v401
    %750 = vmatpush.msra.mxu0 %v398
    %751 = vmatpush.msra.mxu0 %v395
    %752 = vmatpush.msra.mxu0 %v392
    %753 = vmatpush.msra.mxu0 %v389
    %754 = vmatpush.msra.mxu0 %v386
    %755 = vmatmul.f32.gmra.mxu0 %v716
    %v756 = vpop.f32.mrf.mxu0
    %v757 = vadd.f32 0.0, %v756
    %758 = vmatmul.f32.gmra.mxu0 %v719
    %v759 = vpop.f32.mrf.mxu0
    %v760 = vadd.f32 0.0, %v759
    %761 = vmatmul.f32.gmra.mxu0 %v722
    %v762 = vpop.f32.mrf.mxu0
    %v763 = vadd.f32 0.0, %v762
    %764 = vmatmul.f32.gmra.mxu0 %v725
    %v765 = vpop.f32.mrf.mxu0
    %v766 = vadd.f32 0.0, %v765
    %767 = vmatmul.f32.gmra.mxu0 %v728
    %v768 = vpop.f32.mrf.mxu0
    %v769 = vadd.f32 0.0, %v768
    %770 = vmatmul.f32.gmra.mxu0 %v731
    %v771 = vpop.f32.mrf.mxu0
    %v772 = vadd.f32 0.0, %v771
    %773 = vmatmul.f32.gmra.mxu0 %v734
    %v774 = vpop.f32.mrf.mxu0
    %v775 = vadd.f32 0.0, %v774
    %776 = vmatmul.f32.gmra.mxu0 %v737
    %v777 = vpop.f32.mrf.mxu0
    %v778 = vadd.f32 0.0, %v777
    %779 = vdwg.mxu0
    %s780 = scalar_lea.vmem [#allocation5], 8
    %v781 = vld [vmem:[%s780] sm:$0xff]
    %s782 = scalar_lea.vmem [#allocation5], 40
    %v783 = vld [vmem:[%s782] sm:$0xff]
    %s784 = scalar_lea.vmem [#allocation5], 72
    %v785 = vld [vmem:[%s784] sm:$0xff]
    %s786 = scalar_lea.vmem [#allocation5], 104
    %v787 = vld [vmem:[%s786] sm:$0xff]
    %s788 = scalar_lea.vmem [#allocation7], 1
    %v789 = vld [vmem:[%s788] sm:$0x1]
    %v791 = vperm.slane %v789, 0
    %v794 = vsel %vm218, %v781, 0
    %796 = vmatpush.xpose.msra.mxu0 0.0
    %797 = vmatpush.xpose.msra.mxu0 0.0
    %798 = vmatpush.xpose.msra.mxu0 0.0
    %799 = vmatpush.xpose.msra.mxu0 0.0
    %800 = vmatpush.xpose.msra.mxu0 0.0
    %801 = vmatpush.xpose.msra.mxu0 0.0
    %802 = vmatpush.xpose.msra.mxu0 0.0
    %803 = vmatpush.xpose.msra.mxu0 0.0
    %804 = vmatpush.xpose.msra.mxu0 0.0
    %805 = vmatpush.xpose.msra.mxu0 0.0
    %806 = vmatpush.xpose.msra.mxu0 0.0
    %807 = vmatpush.xpose.msra.mxu0 0.0
    %808 = vmatpush.xpose.msra.mxu0 0.0
    %809 = vmatpush.xpose.msra.mxu0 0.0
    %810 = vmatpush.xpose.msra.mxu0 0.0
    %811 = vmatpush.xpose.msra.mxu0 %v794
    %812 = vmatmul.f32.gmra.mxu0 %v220
    %v813 = vpop.f32.mrf.mxu0
    %v814 = vadd.f32 %v791, %v813
    %815 = vmatmul.f32.gmra.mxu0 %v223
    %v816 = vpop.f32.mrf.mxu0
    %v817 = vadd.f32 %v791, %v816
    %818 = vmatmul.f32.gmra.mxu0 %v226
    %v819 = vpop.f32.mrf.mxu0
    %v820 = vadd.f32 %v791, %v819
    %821 = vmatmul.f32.gmra.mxu0 %v229
    %v822 = vpop.f32.mrf.mxu0
    %v823 = vadd.f32 %v791, %v822
    %824 = vmatmul.f32.gmra.mxu0 %v232
    %v825 = vpop.f32.mrf.mxu0
    %v826 = vadd.f32 %v791, %v825
    %827 = vmatmul.f32.gmra.mxu0 %v235
    %v828 = vpop.f32.mrf.mxu0
    %v829 = vadd.f32 %v791, %v828
    %830 = vmatmul.f32.gmra.mxu0 %v238
    %v831 = vpop.f32.mrf.mxu0
    %v832 = vadd.f32 %v791, %v831
    %833 = vmatmul.f32.gmra.mxu0 %v241
    %v834 = vpop.f32.mrf.mxu0
    %v835 = vadd.f32 %v791, %v834
    %836 = vdwg.mxu0
    %s837 = scalar_lea.vmem [#allocation7], 5
    %v838 = vld [vmem:[%s837] sm:$0x1]
    %v840 = vperm.slane %v838, 0
    %v843 = vsel %vm218, %v783, 0
    %845 = vmatpush.xpose.msra.mxu0 0.0
    %846 = vmatpush.xpose.msra.mxu0 0.0
    %847 = vmatpush.xpose.msra.mxu0 0.0
    %848 = vmatpush.xpose.msra.mxu0 0.0
    %849 = vmatpush.xpose.msra.mxu0 0.0
    %850 = vmatpush.xpose.msra.mxu0 0.0
    %851 = vmatpush.xpose.msra.mxu0 0.0
    %852 = vmatpush.xpose.msra.mxu0 0.0
    %853 = vmatpush.xpose.msra.mxu0 0.0
    %854 = vmatpush.xpose.msra.mxu0 0.0
    %855 = vmatpush.xpose.msra.mxu0 0.0
    %856 = vmatpush.xpose.msra.mxu0 0.0
    %857 = vmatpush.xpose.msra.mxu0 0.0
    %858 = vmatpush.xpose.msra.mxu0 0.0
    %859 = vmatpush.xpose.msra.mxu0 0.0
    %860 = vmatpush.xpose.msra.mxu0 %v843
    %861 = vmatmul.f32.gmra.mxu0 %v293
    %v862 = vpop.f32.mrf.mxu0
    %v863 = vadd.f32 %v840, %v862
    %864 = vmatmul.f32.gmra.mxu0 %v296
    %v865 = vpop.f32.mrf.mxu0
    %v866 = vadd.f32 %v840, %v865
    %867 = vmatmul.f32.gmra.mxu0 %v299
    %v868 = vpop.f32.mrf.mxu0
    %v869 = vadd.f32 %v840, %v868
    %870 = vmatmul.f32.gmra.mxu0 %v302
    %v871 = vpop.f32.mrf.mxu0
    %v872 = vadd.f32 %v840, %v871
    %873 = vmatmul.f32.gmra.mxu0 %v305
    %v874 = vpop.f32.mrf.mxu0
    %v875 = vadd.f32 %v840, %v874
    %876 = vmatmul.f32.gmra.mxu0 %v308
    %v877 = vpop.f32.mrf.mxu0
    %v878 = vadd.f32 %v840, %v877
    %879 = vmatmul.f32.gmra.mxu0 %v311
    %v880 = vpop.f32.mrf.mxu0
    %v881 = vadd.f32 %v840, %v880
    %882 = vmatmul.f32.gmra.mxu0 %v314
    %v883 = vpop.f32.mrf.mxu0
    %v884 = vadd.f32 %v840, %v883
    %885 = vdwg.mxu0
    %s886 = scalar_lea.vmem [#allocation7], 9
    %v887 = vld [vmem:[%s886] sm:$0x1]
    %v889 = vperm.slane %v887, 0
    %v892 = vsel %vm218, %v785, 0
    %894 = vmatpush.xpose.msra.mxu0 0.0
    %895 = vmatpush.xpose.msra.mxu0 0.0
    %896 = vmatpush.xpose.msra.mxu0 0.0
    %897 = vmatpush.xpose.msra.mxu0 0.0
    %898 = vmatpush.xpose.msra.mxu0 0.0
    %899 = vmatpush.xpose.msra.mxu0 0.0
    %900 = vmatpush.xpose.msra.mxu0 0.0
    %901 = vmatpush.xpose.msra.mxu0 0.0
    %902 = vmatpush.xpose.msra.mxu0 0.0
    %903 = vmatpush.xpose.msra.mxu0 0.0
    %904 = vmatpush.xpose.msra.mxu0 0.0
    %905 = vmatpush.xpose.msra.mxu0 0.0
    %906 = vmatpush.xpose.msra.mxu0 0.0
    %907 = vmatpush.xpose.msra.mxu0 0.0
    %908 = vmatpush.xpose.msra.mxu0 0.0
    %909 = vmatpush.xpose.msra.mxu0 %v892
    %910 = vmatmul.f32.gmra.mxu0 %v293
    %v911 = vpop.f32.mrf.mxu0
    %v912 = vadd.f32 %v889, %v911
    %913 = vmatmul.f32.gmra.mxu0 %v296
    %v914 = vpop.f32.mrf.mxu0
    %v915 = vadd.f32 %v889, %v914
    %916 = vmatmul.f32.gmra.mxu0 %v299
    %v917 = vpop.f32.mrf.mxu0
    %v918 = vadd.f32 %v889, %v917
    %919 = vmatmul.f32.gmra.mxu0 %v302
    %v920 = vpop.f32.mrf.mxu0
    %v921 = vadd.f32 %v889, %v920
    %922 = vmatmul.f32.gmra.mxu0 %v305
    %v923 = vpop.f32.mrf.mxu0
    %v924 = vadd.f32 %v889, %v923
    %925 = vmatmul.f32.gmra.mxu0 %v308
    %v926 = vpop.f32.mrf.mxu0
    %v927 = vadd.f32 %v889, %v926
    %928 = vmatmul.f32.gmra.mxu0 %v311
    %v929 = vpop.f32.mrf.mxu0
    %v930 = vadd.f32 %v889, %v929
    %931 = vmatmul.f32.gmra.mxu0 %v314
    %v932 = vpop.f32.mrf.mxu0
    %v933 = vadd.f32 %v889, %v932
    %934 = vdwg.mxu0
    %v935 = vmul.f32 %v814, 0.35355338
    %v936 = vmul.f32 %v817, 0.35355338
    %v937 = vmul.f32 %v820, 0.35355338
    %v938 = vmul.f32 %v823, 0.35355338
    %v939 = vmul.f32 %v826, 0.35355338
    %v940 = vmul.f32 %v829, 0.35355338
    %v941 = vmul.f32 %v832, 0.35355338
    %v942 = vmul.f32 %v835, 0.35355338
    %v944 = vsel %vm417, %v935, 0
    %v947 = vsel %vm417, %v936, 0
    %v950 = vsel %vm417, %v937, 0
    %v953 = vsel %vm417, %v938, 0
    %v956 = vsel %vm417, %v939, 0
    %v959 = vsel %vm417, %v940, 0
    %v962 = vsel %vm417, %v941, 0
    %v965 = vsel %vm417, %v942, 0
    %v968 = vsel %vm417, %v863, 0
    %v971 = vsel %vm417, %v866, 0
    %v974 = vsel %vm417, %v869, 0
    %v977 = vsel %vm417, %v872, 0
    %v980 = vsel %vm417, %v875, 0
    %v983 = vsel %vm417, %v878, 0
    %v986 = vsel %vm417, %v881, 0
    %v989 = vsel %vm417, %v884, 0
    %991 = vmatpush.xpose.msra.mxu0 0.0
    %992 = vmatpush.xpose.msra.mxu0 0.0
    %993 = vmatpush.xpose.msra.mxu0 0.0
    %994 = vmatpush.xpose.msra.mxu0 0.0
    %995 = vmatpush.xpose.msra.mxu0 0.0
    %996 = vmatpush.xpose.msra.mxu0 0.0
    %997 = vmatpush.xpose.msra.mxu0 0.0
    %998 = vmatpush.xpose.msra.mxu0 0.0
    %999 = vmatpush.xpose.msra.mxu0 %v989
    %1000 = vmatpush.xpose.msra.mxu0 %v986
    %1001 = vmatpush.xpose.msra.mxu0 %v983
    %1002 = vmatpush.xpose.msra.mxu0 %v980
    %1003 = vmatpush.xpose.msra.mxu0 %v977
    %1004 = vmatpush.xpose.msra.mxu0 %v974
    %1005 = vmatpush.xpose.msra.mxu0 %v971
    %1006 = vmatpush.xpose.msra.mxu0 %v968
    %1007 = vmatmul.f32.gmra.mxu0 %v944
    %v1008 = vpop.f32.mrf.mxu0
    %v1009 = vadd.f32 0.0, %v1008
    %1010 = vmatmul.f32.gmra.mxu0 %v947
    %v1011 = vpop.f32.mrf.mxu0
    %v1012 = vadd.f32 0.0, %v1011
    %1013 = vmatmul.f32.gmra.mxu0 %v950
    %v1014 = vpop.f32.mrf.mxu0
    %v1015 = vadd.f32 0.0, %v1014
    %1016 = vmatmul.f32.gmra.mxu0 %v953
    %v1017 = vpop.f32.mrf.mxu0
    %v1018 = vadd.f32 0.0, %v1017
    %1019 = vmatmul.f32.gmra.mxu0 %v956
    %v1020 = vpop.f32.mrf.mxu0
    %v1021 = vadd.f32 0.0, %v1020
    %1022 = vmatmul.f32.gmra.mxu0 %v959
    %v1023 = vpop.f32.mrf.mxu0
    %v1024 = vadd.f32 0.0, %v1023
    %1025 = vmatmul.f32.gmra.mxu0 %v962
    %v1026 = vpop.f32.mrf.mxu0
    %v1027 = vadd.f32 0.0, %v1026
    %1028 = vmatmul.f32.gmra.mxu0 %v965
    %v1029 = vpop.f32.mrf.mxu0
    %v1030 = vadd.f32 0.0, %v1029
    %1031 = vdwg.mxu0
    %v1032 = vsel %vm141, %v1009, -inf
    %1033 = vmax.xlane.f32.xlu0 %v1032
    %v1034 = vpop.xlane.xlu0 %1033
    %v1035 = vsel %vm141, %v1012, -inf
    %1036 = vmax.xlane.f32.xlu0 %v1035
    %v1037 = vpop.xlane.xlu0 %1036
    %v1038 = vsel %vm141, %v1015, -inf
    %1039 = vmax.xlane.f32.xlu0 %v1038
    %v1040 = vpop.xlane.xlu0 %1039
    %v1041 = vsel %vm141, %v1018, -inf
    %1042 = vmax.xlane.f32.xlu0 %v1041
    %v1043 = vpop.xlane.xlu0 %1042
    %v1044 = vsel %vm141, %v1021, -inf
    %1045 = vmax.xlane.f32.xlu0 %v1044
    %v1046 = vpop.xlane.xlu0 %1045
    %v1047 = vsel %vm141, %v1024, -inf
    %1048 = vmax.xlane.f32.xlu0 %v1047
    %v1049 = vpop.xlane.xlu0 %1048
    %v1050 = vsel %vm141, %v1027, -inf
    %1051 = vmax.xlane.f32.xlu0 %v1050
    %v1052 = vpop.xlane.xlu0 %1051
    %v1053 = vsel %vm141, %v1030, -inf
    %1054 = vmax.xlane.f32.xlu0 %v1053
    %v1055 = vpop.xlane.xlu0 %1054
    %v1056 = vsub.f32 %v1009, %v1034
    %v1057 = vsub.f32 %v1012, %v1037
    %v1058 = vsub.f32 %v1015, %v1040
    %v1059 = vsub.f32 %v1018, %v1043
    %v1060 = vsub.f32 %v1021, %v1046
    %v1061 = vsub.f32 %v1024, %v1049
    %v1062 = vsub.f32 %v1027, %v1052
    %v1063 = vsub.f32 %v1030, %v1055
    %v1064 = vmul.f32 %v1056, 1.442695
    %v1065 = vpow.pop %v1064
    %v1066 = vmul.f32 %v1057, 1.442695
    %v1067 = vpow.pop %v1066
    %v1068 = vmul.f32 %v1058, 1.442695
    %v1069 = vpow.pop %v1068
    %v1070 = vmul.f32 %v1059, 1.442695
    %v1071 = vpow.pop %v1070
    %v1072 = vmul.f32 %v1060, 1.442695
    %v1073 = vpow.pop %v1072
    %v1074 = vmul.f32 %v1061, 1.442695
    %v1075 = vpow.pop %v1074
    %v1076 = vmul.f32 %v1062, 1.442695
    %v1077 = vpow.pop %v1076
    %v1078 = vmul.f32 %v1063, 1.442695
    %v1079 = vpow.pop %v1078
    %v1080 = vmul.f32 %v1065, %v133
    %v1081 = vmul.f32 %v1067, %v134
    %v1082 = vmul.f32 %v1069, %v135
    %v1083 = vmul.f32 %v1071, %v136
    %v1084 = vmul.f32 %v1073, %v137
    %v1085 = vmul.f32 %v1075, %v138
    %v1086 = vmul.f32 %v1077, %v139
    %v1087 = vmul.f32 %v1079, %v140
    %v1088 = vsel %vm141, %v1080, 0.0
    %1089 = vadd.xlane.f32.xlu0 %v1088
    %v1090 = vpop.xlane.xlu0 %1089
    %v1091 = vsel %vm141, %v1081, 0.0
    %1092 = vadd.xlane.f32.xlu0 %v1091
    %v1093 = vpop.xlane.xlu0 %1092
    %v1094 = vsel %vm141, %v1082, 0.0
    %1095 = vadd.xlane.f32.xlu0 %v1094
    %v1096 = vpop.xlane.xlu0 %1095
    %v1097 = vsel %vm141, %v1083, 0.0
    %1098 = vadd.xlane.f32.xlu0 %v1097
    %v1099 = vpop.xlane.xlu0 %1098
    %v1100 = vsel %vm141, %v1084, 0.0
    %1101 = vadd.xlane.f32.xlu0 %v1100
    %v1102 = vpop.xlane.xlu0 %1101
    %v1103 = vsel %vm141, %v1085, 0.0
    %1104 = vadd.xlane.f32.xlu0 %v1103
    %v1105 = vpop.xlane.xlu0 %1104
    %v1106 = vsel %vm141, %v1086, 0.0
    %1107 = vadd.xlane.f32.xlu0 %v1106
    %v1108 = vpop.xlane.xlu0 %1107
    %v1109 = vsel %vm141, %v1087, 0.0
    %1110 = vadd.xlane.f32.xlu0 %v1109
    %v1111 = vpop.xlane.xlu0 %1110
    %v1112 = vrcp.pop %v1090
    %v1113 = vmul.f32 %v1090, %v1112
    %v1114 = vsub.f32 1.0, %v1113
    %v1115 = vmul.f32 %v1112, %v1114
    %v1116 = vadd.f32 %v1112, %v1115
    %vm1117 = vweird.f32 %v1090
    %vm1118 = vweird.f32 %v1112
    %vm1119 = vmor %vm1117, %vm1118
    %v1120 = vsel %vm1119, %v1112, %v1116
    %v1121 = vand.u32 2147483647, %v1090
    %vm1122 = vcmp.eq.f32.partialorder %v1121, 8.507059e+37
    %v1123 = vand.u32 %v1090, 2147483648
    %v1124 = vor.u32 1.1754944e-38, %v1123
    %v1125 = vsel %vm1122, %v1124, %v1120
    %v1126 = vmul.f32 1.0, %v1125
    %v1127 = vrcp.pop %v1093
    %v1128 = vmul.f32 %v1093, %v1127
    %v1129 = vsub.f32 1.0, %v1128
    %v1130 = vmul.f32 %v1127, %v1129
    %v1131 = vadd.f32 %v1127, %v1130
    %vm1132 = vweird.f32 %v1093
    %vm1133 = vweird.f32 %v1127
    %vm1134 = vmor %vm1132, %vm1133
    %v1135 = vsel %vm1134, %v1127, %v1131
    %v1136 = vand.u32 2147483647, %v1093
    %vm1137 = vcmp.eq.f32.partialorder %v1136, 8.507059e+37
    %v1138 = vand.u32 %v1093, 2147483648
    %v1139 = vor.u32 1.1754944e-38, %v1138
    %v1140 = vsel %vm1137, %v1139, %v1135
    %v1141 = vmul.f32 1.0, %v1140
    %v1142 = vrcp.pop %v1096
    %v1143 = vmul.f32 %v1096, %v1142
    %v1144 = vsub.f32 1.0, %v1143
    %v1145 = vmul.f32 %v1142, %v1144
    %v1146 = vadd.f32 %v1142, %v1145
    %vm1147 = vweird.f32 %v1096
    %vm1148 = vweird.f32 %v1142
    %vm1149 = vmor %vm1147, %vm1148
    %v1150 = vsel %vm1149, %v1142, %v1146
    %v1151 = vand.u32 2147483647, %v1096
    %vm1152 = vcmp.eq.f32.partialorder %v1151, 8.507059e+37
    %v1153 = vand.u32 %v1096, 2147483648
    %v1154 = vor.u32 1.1754944e-38, %v1153
    %v1155 = vsel %vm1152, %v1154, %v1150
    %v1156 = vmul.f32 1.0, %v1155
    %v1157 = vrcp.pop %v1099
    %v1158 = vmul.f32 %v1099, %v1157
    %v1159 = vsub.f32 1.0, %v1158
    %v1160 = vmul.f32 %v1157, %v1159
    %v1161 = vadd.f32 %v1157, %v1160
    %vm1162 = vweird.f32 %v1099
    %vm1163 = vweird.f32 %v1157
    %vm1164 = vmor %vm1162, %vm1163
    %v1165 = vsel %vm1164, %v1157, %v1161
    %v1166 = vand.u32 2147483647, %v1099
    %vm1167 = vcmp.eq.f32.partialorder %v1166, 8.507059e+37
    %v1168 = vand.u32 %v1099, 2147483648
    %v1169 = vor.u32 1.1754944e-38, %v1168
    %v1170 = vsel %vm1167, %v1169, %v1165
    %v1171 = vmul.f32 1.0, %v1170
    %v1172 = vrcp.pop %v1102
    %v1173 = vmul.f32 %v1102, %v1172
    %v1174 = vsub.f32 1.0, %v1173
    %v1175 = vmul.f32 %v1172, %v1174
    %v1176 = vadd.f32 %v1172, %v1175
    %vm1177 = vweird.f32 %v1102
    %vm1178 = vweird.f32 %v1172
    %vm1179 = vmor %vm1177, %vm1178
    %v1180 = vsel %vm1179, %v1172, %v1176
    %v1181 = vand.u32 2147483647, %v1102
    %vm1182 = vcmp.eq.f32.partialorder %v1181, 8.507059e+37
    %v1183 = vand.u32 %v1102, 2147483648
    %v1184 = vor.u32 1.1754944e-38, %v1183
    %v1185 = vsel %vm1182, %v1184, %v1180
    %v1186 = vmul.f32 1.0, %v1185
    %v1187 = vrcp.pop %v1105
    %v1188 = vmul.f32 %v1105, %v1187
    %v1189 = vsub.f32 1.0, %v1188
    %v1190 = vmul.f32 %v1187, %v1189
    %v1191 = vadd.f32 %v1187, %v1190
    %vm1192 = vweird.f32 %v1105
    %vm1193 = vweird.f32 %v1187
    %vm1194 = vmor %vm1192, %vm1193
    %v1195 = vsel %vm1194, %v1187, %v1191
    %v1196 = vand.u32 2147483647, %v1105
    %vm1197 = vcmp.eq.f32.partialorder %v1196, 8.507059e+37
    %v1198 = vand.u32 %v1105, 2147483648
    %v1199 = vor.u32 1.1754944e-38, %v1198
    %v1200 = vsel %vm1197, %v1199, %v1195
    %v1201 = vmul.f32 1.0, %v1200
    %v1202 = vrcp.pop %v1108
    %v1203 = vmul.f32 %v1108, %v1202
    %v1204 = vsub.f32 1.0, %v1203
    %v1205 = vmul.f32 %v1202, %v1204
    %v1206 = vadd.f32 %v1202, %v1205
    %vm1207 = vweird.f32 %v1108
    %vm1208 = vweird.f32 %v1202
    %vm1209 = vmor %vm1207, %vm1208
    %v1210 = vsel %vm1209, %v1202, %v1206
    %v1211 = vand.u32 2147483647, %v1108
    %vm1212 = vcmp.eq.f32.partialorder %v1211, 8.507059e+37
    %v1213 = vand.u32 %v1108, 2147483648
    %v1214 = vor.u32 1.1754944e-38, %v1213
    %v1215 = vsel %vm1212, %v1214, %v1210
    %v1216 = vmul.f32 1.0, %v1215
    %v1217 = vrcp.pop %v1111
    %v1218 = vmul.f32 %v1111, %v1217
    %v1219 = vsub.f32 1.0, %v1218
    %v1220 = vmul.f32 %v1217, %v1219
    %v1221 = vadd.f32 %v1217, %v1220
    %vm1222 = vweird.f32 %v1111
    %vm1223 = vweird.f32 %v1217
    %vm1224 = vmor %vm1222, %vm1223
    %v1225 = vsel %vm1224, %v1217, %v1221
    %v1226 = vand.u32 2147483647, %v1111
    %vm1227 = vcmp.eq.f32.partialorder %v1226, 8.507059e+37
    %v1228 = vand.u32 %v1111, 2147483648
    %v1229 = vor.u32 1.1754944e-38, %v1228
    %v1230 = vsel %vm1227, %v1229, %v1225
    %v1231 = vmul.f32 1.0, %v1230
    %v1232 = vmul.f32 %v1080, %v1126
    %v1233 = vmul.f32 %v1081, %v1141
    %v1234 = vmul.f32 %v1082, %v1156
    %v1235 = vmul.f32 %v1083, %v1171
    %v1236 = vmul.f32 %v1084, %v1186
    %v1237 = vmul.f32 %v1085, %v1201
    %v1238 = vmul.f32 %v1086, %v1216
    %v1239 = vmul.f32 %v1087, %v1231
    %v1241 = vsel %vm141, %v1232, 0
    %v1244 = vsel %vm141, %v1233, 0
    %v1247 = vsel %vm141, %v1234, 0
    %v1250 = vsel %vm141, %v1235, 0
    %v1253 = vsel %vm141, %v1236, 0
    %v1256 = vsel %vm141, %v1237, 0
    %v1259 = vsel %vm141, %v1238, 0
    %v1262 = vsel %vm141, %v1239, 0
    %1264 = vmatpush.msra.mxu0 0.0
    %1265 = vmatpush.msra.mxu0 0.0
    %1266 = vmatpush.msra.mxu0 0.0
    %1267 = vmatpush.msra.mxu0 0.0
    %1268 = vmatpush.msra.mxu0 0.0
    %1269 = vmatpush.msra.mxu0 0.0
    %1270 = vmatpush.msra.mxu0 0.0
    %1271 = vmatpush.msra.mxu0 0.0
    %1272 = vmatpush.msra.mxu0 %v933
    %1273 = vmatpush.msra.mxu0 %v930
    %1274 = vmatpush.msra.mxu0 %v927
    %1275 = vmatpush.msra.mxu0 %v924
    %1276 = vmatpush.msra.mxu0 %v921
    %1277 = vmatpush.msra.mxu0 %v918
    %1278 = vmatpush.msra.mxu0 %v915
    %1279 = vmatpush.msra.mxu0 %v912
    %1280 = vmatmul.f32.gmra.mxu0 %v1241
    %v1281 = vpop.f32.mrf.mxu0
    %v1282 = vadd.f32 0.0, %v1281
    %1283 = vmatmul.f32.gmra.mxu0 %v1244
    %v1284 = vpop.f32.mrf.mxu0
    %v1285 = vadd.f32 0.0, %v1284
    %1286 = vmatmul.f32.gmra.mxu0 %v1247
    %v1287 = vpop.f32.mrf.mxu0
    %v1288 = vadd.f32 0.0, %v1287
    %1289 = vmatmul.f32.gmra.mxu0 %v1250
    %v1290 = vpop.f32.mrf.mxu0
    %v1291 = vadd.f32 0.0, %v1290
    %1292 = vmatmul.f32.gmra.mxu0 %v1253
    %v1293 = vpop.f32.mrf.mxu0
    %v1294 = vadd.f32 0.0, %v1293
    %1295 = vmatmul.f32.gmra.mxu0 %v1256
    %v1296 = vpop.f32.mrf.mxu0
    %v1297 = vadd.f32 0.0, %v1296
    %1298 = vmatmul.f32.gmra.mxu0 %v1259
    %v1299 = vpop.f32.mrf.mxu0
    %v1300 = vadd.f32 0.0, %v1299
    %1301 = vmatmul.f32.gmra.mxu0 %v1262
    %v1302 = vpop.f32.mrf.mxu0
    %v1303 = vadd.f32 0.0, %v1302
    %1304 = vdwg.mxu0
    %v1306 = vsel %vm417, %v1282, 0
    %v1309 = vsel %vm417, %v1285, 0
    %v1312 = vsel %vm417, %v1288, 0
    %v1315 = vsel %vm417, %v1291, 0
    %v1318 = vsel %vm417, %v1294, 0
    %v1321 = vsel %vm417, %v1297, 0
    %v1324 = vsel %vm417, %v1300, 0
    %v1327 = vsel %vm417, %v1303, 0
    %1329 = vmatpush.msra.mxu0 0.0
    %1330 = vmatpush.msra.mxu0 0.0
    %1331 = vmatpush.msra.mxu0 0.0
    %1332 = vmatpush.msra.mxu0 0.0
    %1333 = vmatpush.msra.mxu0 0.0
    %1334 = vmatpush.msra.mxu0 0.0
    %1335 = vmatpush.msra.mxu0 0.0
    %1336 = vmatpush.msra.mxu0 0.0
    %1337 = vmatpush.msra.mxu0 0.0
    %1338 = vmatpush.msra.mxu0 0.0
    %1339 = vmatpush.msra.mxu0 0.0
    %1340 = vmatpush.msra.mxu0 0.0
    %1341 = vmatpush.msra.mxu0 0.0
    %1342 = vmatpush.msra.mxu0 0.0
    %1343 = vmatpush.msra.mxu0 0.0
    %1344 = vmatpush.msra.mxu0 %v787
    %1345 = vmatmul.f32.gmra.mxu0 %v1306
    %v1346 = vpop.f32.mrf.mxu0
    %v1347 = vadd.f32 0.0, %v1346
    %1348 = vmatmul.f32.gmra.mxu0 %v1309
    %v1349 = vpop.f32.mrf.mxu0
    %v1350 = vadd.f32 0.0, %v1349
    %1351 = vmatmul.f32.gmra.mxu0 %v1312
    %v1352 = vpop.f32.mrf.mxu0
    %v1353 = vadd.f32 0.0, %v1352
    %1354 = vmatmul.f32.gmra.mxu0 %v1315
    %v1355 = vpop.f32.mrf.mxu0
    %v1356 = vadd.f32 0.0, %v1355
    %1357 = vmatmul.f32.gmra.mxu0 %v1318
    %v1358 = vpop.f32.mrf.mxu0
    %v1359 = vadd.f32 0.0, %v1358
    %1360 = vmatmul.f32.gmra.mxu0 %v1321
    %v1361 = vpop.f32.mrf.mxu0
    %v1362 = vadd.f32 0.0, %v1361
    %1363 = vmatmul.f32.gmra.mxu0 %v1324
    %v1364 = vpop.f32.mrf.mxu0
    %v1365 = vadd.f32 0.0, %v1364
    %1366 = vmatmul.f32.gmra.mxu0 %v1327
    %v1367 = vpop.f32.mrf.mxu0
    %v1368 = vadd.f32 0.0, %v1367
    %1369 = vdwg.mxu0
    %v1371 = vsel %vm417, %v757, 0
    %v1374 = vsel %vm417, %v760, 0
    %v1377 = vsel %vm417, %v763, 0
    %v1380 = vsel %vm417, %v766, 0
    %v1383 = vsel %vm417, %v769, 0
    %v1386 = vsel %vm417, %v772, 0
    %v1389 = vsel %vm417, %v775, 0
    %v1392 = vsel %vm417, %v778, 0
    %1394 = vmatpush.msra.mxu0 0.0
    %1395 = vmatpush.msra.mxu0 0.0
    %1396 = vmatpush.msra.mxu0 0.0
    %1397 = vmatpush.msra.mxu0 0.0
    %1398 = vmatpush.msra.mxu0 0.0
    %1399 = vmatpush.msra.mxu0 0.0
    %1400 = vmatpush.msra.mxu0 0.0
    %1401 = vmatpush.msra.mxu0 0.0
    %1402 = vmatpush.msra.mxu0 0.0
    %1403 = vmatpush.msra.mxu0 0.0
    %1404 = vmatpush.msra.mxu0 0.0
    %1405 = vmatpush.msra.mxu0 0.0
    %1406 = vmatpush.msra.mxu0 0.0
    %1407 = vmatpush.msra.mxu0 0.0
    %1408 = vmatpush.msra.mxu0 0.0
    %1409 = vmatpush.msra.mxu0 %v213
    %1410 = vmatmul.f32.gmra.mxu0 %v1371
    %v1411 = vpop.f32.mrf.mxu0
    %v1412 = vadd.f32 %v1347, %v1411
    %1413 = vmatmul.f32.gmra.mxu0 %v1374
    %v1414 = vpop.f32.mrf.mxu0
    %v1415 = vadd.f32 %v1350, %v1414
    %1416 = vmatmul.f32.gmra.mxu0 %v1377
    %v1417 = vpop.f32.mrf.mxu0
    %v1418 = vadd.f32 %v1353, %v1417
    %1419 = vmatmul.f32.gmra.mxu0 %v1380
    %v1420 = vpop.f32.mrf.mxu0
    %v1421 = vadd.f32 %v1356, %v1420
    %1422 = vmatmul.f32.gmra.mxu0 %v1383
    %v1423 = vpop.f32.mrf.mxu0
    %v1424 = vadd.f32 %v1359, %v1423
    %1425 = vmatmul.f32.gmra.mxu0 %v1386
    %v1426 = vpop.f32.mrf.mxu0
    %v1427 = vadd.f32 %v1362, %v1426
    %1428 = vmatmul.f32.gmra.mxu0 %v1389
    %v1429 = vpop.f32.mrf.mxu0
    %v1430 = vadd.f32 %v1365, %v1429
    %1431 = vmatmul.f32.gmra.mxu0 %v1392
    %v1432 = vpop.f32.mrf.mxu0
    %v1433 = vadd.f32 %v1368, %v1432
    %1434 = vdwg.mxu0
    %s1435 = scalar_lea.vmem [#allocation5], 16
    %v1436 = vld [vmem:[%s1435] sm:$0xff]
    %s1437 = scalar_lea.vmem [#allocation5], 48
    %v1438 = vld [vmem:[%s1437] sm:$0xff]
    %s1439 = scalar_lea.vmem [#allocation5], 80
    %v1440 = vld [vmem:[%s1439] sm:$0xff]
    %s1441 = scalar_lea.vmem [#allocation5], 112
    %v1442 = vld [vmem:[%s1441] sm:$0xff]
    %s1443 = scalar_lea.vmem [#allocation7], 2
    %v1444 = vld [vmem:[%s1443] sm:$0x1]
    %v1446 = vperm.slane %v1444, 0
    %v1449 = vsel %vm218, %v1436, 0
    %1451 = vmatpush.xpose.msra.mxu0 0.0
    %1452 = vmatpush.xpose.msra.mxu0 0.0
    %1453 = vmatpush.xpose.msra.mxu0 0.0
    %1454 = vmatpush.xpose.msra.mxu0 0.0
    %1455 = vmatpush.xpose.msra.mxu0 0.0
    %1456 = vmatpush.xpose.msra.mxu0 0.0
    %1457 = vmatpush.xpose.msra.mxu0 0.0
    %1458 = vmatpush.xpose.msra.mxu0 0.0
    %1459 = vmatpush.xpose.msra.mxu0 0.0
    %1460 = vmatpush.xpose.msra.mxu0 0.0
    %1461 = vmatpush.xpose.msra.mxu0 0.0
    %1462 = vmatpush.xpose.msra.mxu0 0.0
    %1463 = vmatpush.xpose.msra.mxu0 0.0
    %1464 = vmatpush.xpose.msra.mxu0 0.0
    %1465 = vmatpush.xpose.msra.mxu0 0.0
    %1466 = vmatpush.xpose.msra.mxu0 %v1449
    %1467 = vmatmul.f32.gmra.mxu0 %v220
    %v1468 = vpop.f32.mrf.mxu0
    %v1469 = vadd.f32 %v1446, %v1468
    %1470 = vmatmul.f32.gmra.mxu0 %v223
    %v1471 = vpop.f32.mrf.mxu0
    %v1472 = vadd.f32 %v1446, %v1471
    %1473 = vmatmul.f32.gmra.mxu0 %v226
    %v1474 = vpop.f32.mrf.mxu0
    %v1475 = vadd.f32 %v1446, %v1474
    %1476 = vmatmul.f32.gmra.mxu0 %v229
    %v1477 = vpop.f32.mrf.mxu0
    %v1478 = vadd.f32 %v1446, %v1477
    %1479 = vmatmul.f32.gmra.mxu0 %v232
    %v1480 = vpop.f32.mrf.mxu0
    %v1481 = vadd.f32 %v1446, %v1480
    %1482 = vmatmul.f32.gmra.mxu0 %v235
    %v1483 = vpop.f32.mrf.mxu0
    %v1484 = vadd.f32 %v1446, %v1483
    %1485 = vmatmul.f32.gmra.mxu0 %v238
    %v1486 = vpop.f32.mrf.mxu0
    %v1487 = vadd.f32 %v1446, %v1486
    %1488 = vmatmul.f32.gmra.mxu0 %v241
    %v1489 = vpop.f32.mrf.mxu0
    %v1490 = vadd.f32 %v1446, %v1489
    %1491 = vdwg.mxu0
    %s1492 = scalar_lea.vmem [#allocation7], 6
    %v1493 = vld [vmem:[%s1492] sm:$0x1]
    %v1495 = vperm.slane %v1493, 0
    %v1498 = vsel %vm218, %v1438, 0
    %1500 = vmatpush.xpose.msra.mxu0 0.0
    %1501 = vmatpush.xpose.msra.mxu0 0.0
    %1502 = vmatpush.xpose.msra.mxu0 0.0
    %1503 = vmatpush.xpose.msra.mxu0 0.0
    %1504 = vmatpush.xpose.msra.mxu0 0.0
    %1505 = vmatpush.xpose.msra.mxu0 0.0
    %1506 = vmatpush.xpose.msra.mxu0 0.0
    %1507 = vmatpush.xpose.msra.mxu0 0.0
    %1508 = vmatpush.xpose.msra.mxu0 0.0
    %1509 = vmatpush.xpose.msra.mxu0 0.0
    %1510 = vmatpush.xpose.msra.mxu0 0.0
    %1511 = vmatpush.xpose.msra.mxu0 0.0
    %1512 = vmatpush.xpose.msra.mxu0 0.0
    %1513 = vmatpush.xpose.msra.mxu0 0.0
    %1514 = vmatpush.xpose.msra.mxu0 0.0
    %1515 = vmatpush.xpose.msra.mxu0 %v1498
    %1516 = vmatmul.f32.gmra.mxu0 %v293
    %v1517 = vpop.f32.mrf.mxu0
    %v1518 = vadd.f32 %v1495, %v1517
    %1519 = vmatmul.f32.gmra.mxu0 %v296
    %v1520 = vpop.f32.mrf.mxu0
    %v1521 = vadd.f32 %v1495, %v1520
    %1522 = vmatmul.f32.gmra.mxu0 %v299
    %v1523 = vpop.f32.mrf.mxu0
    %v1524 = vadd.f32 %v1495, %v1523
    %1525 = vmatmul.f32.gmra.mxu0 %v302
    %v1526 = vpop.f32.mrf.mxu0
    %v1527 = vadd.f32 %v1495, %v1526
    %1528 = vmatmul.f32.gmra.mxu0 %v305
    %v1529 = vpop.f32.mrf.mxu0
    %v1530 = vadd.f32 %v1495, %v1529
    %1531 = vmatmul.f32.gmra.mxu0 %v308
    %v1532 = vpop.f32.mrf.mxu0
    %v1533 = vadd.f32 %v1495, %v1532
    %1534 = vmatmul.f32.gmra.mxu0 %v311
    %v1535 = vpop.f32.mrf.mxu0
    %v1536 = vadd.f32 %v1495, %v1535
    %1537 = vmatmul.f32.gmra.mxu0 %v314
    %v1538 = vpop.f32.mrf.mxu0
    %v1539 = vadd.f32 %v1495, %v1538
    %1540 = vdwg.mxu0
    %s1541 = scalar_lea.vmem [#allocation7], 10
    %v1542 = vld [vmem:[%s1541] sm:$0x1]
    %v1544 = vperm.slane %v1542, 0
    %v1547 = vsel %vm218, %v1440, 0
    %1549 = vmatpush.xpose.msra.mxu0 0.0
    %1550 = vmatpush.xpose.msra.mxu0 0.0
    %1551 = vmatpush.xpose.msra.mxu0 0.0
    %1552 = vmatpush.xpose.msra.mxu0 0.0
    %1553 = vmatpush.xpose.msra.mxu0 0.0
    %1554 = vmatpush.xpose.msra.mxu0 0.0
    %1555 = vmatpush.xpose.msra.mxu0 0.0
    %1556 = vmatpush.xpose.msra.mxu0 0.0
    %1557 = vmatpush.xpose.msra.mxu0 0.0
    %1558 = vmatpush.xpose.msra.mxu0 0.0
    %1559 = vmatpush.xpose.msra.mxu0 0.0
    %1560 = vmatpush.xpose.msra.mxu0 0.0
    %1561 = vmatpush.xpose.msra.mxu0 0.0
    %1562 = vmatpush.xpose.msra.mxu0 0.0
    %1563 = vmatpush.xpose.msra.mxu0 0.0
    %1564 = vmatpush.xpose.msra.mxu0 %v1547
    %1565 = vmatmul.f32.gmra.mxu0 %v293
    %v1566 = vpop.f32.mrf.mxu0
    %v1567 = vadd.f32 %v1544, %v1566
    %1568 = vmatmul.f32.gmra.mxu0 %v296
    %v1569 = vpop.f32.mrf.mxu0
    %v1570 = vadd.f32 %v1544, %v1569
    %1571 = vmatmul.f32.gmra.mxu0 %v299
    %v1572 = vpop.f32.mrf.mxu0
    %v1573 = vadd.f32 %v1544, %v1572
    %1574 = vmatmul.f32.gmra.mxu0 %v302
    %v1575 = vpop.f32.mrf.mxu0
    %v1576 = vadd.f32 %v1544, %v1575
    %1577 = vmatmul.f32.gmra.mxu0 %v305
    %v1578 = vpop.f32.mrf.mxu0
    %v1579 = vadd.f32 %v1544, %v1578
    %1580 = vmatmul.f32.gmra.mxu0 %v308
    %v1581 = vpop.f32.mrf.mxu0
    %v1582 = vadd.f32 %v1544, %v1581
    %1583 = vmatmul.f32.gmra.mxu0 %v311
    %v1584 = vpop.f32.mrf.mxu0
    %v1585 = vadd.f32 %v1544, %v1584
    %1586 = vmatmul.f32.gmra.mxu0 %v314
    %v1587 = vpop.f32.mrf.mxu0
    %v1588 = vadd.f32 %v1544, %v1587
    %1589 = vdwg.mxu0
    %v1590 = vmul.f32 %v1469, 0.35355338
    %v1591 = vmul.f32 %v1472, 0.35355338
    %v1592 = vmul.f32 %v1475, 0.35355338
    %v1593 = vmul.f32 %v1478, 0.35355338
    %v1594 = vmul.f32 %v1481, 0.35355338
    %v1595 = vmul.f32 %v1484, 0.35355338
    %v1596 = vmul.f32 %v1487, 0.35355338
    %v1597 = vmul.f32 %v1490, 0.35355338
    %v1599 = vsel %vm417, %v1590, 0
    %v1602 = vsel %vm417, %v1591, 0
    %v1605 = vsel %vm417, %v1592, 0
    %v1608 = vsel %vm417, %v1593, 0
    %v1611 = vsel %vm417, %v1594, 0
    %v1614 = vsel %vm417, %v1595, 0
    %v1617 = vsel %vm417, %v1596, 0
    %v1620 = vsel %vm417, %v1597, 0
    %v1623 = vsel %vm417, %v1518, 0
    %v1626 = vsel %vm417, %v1521, 0
    %v1629 = vsel %vm417, %v1524, 0
    %v1632 = vsel %vm417, %v1527, 0
    %v1635 = vsel %vm417, %v1530, 0
    %v1638 = vsel %vm417, %v1533, 0
    %v1641 = vsel %vm417, %v1536, 0
    %v1644 = vsel %vm417, %v1539, 0
    %1646 = vmatpush.xpose.msra.mxu0 0.0
    %1647 = vmatpush.xpose.msra.mxu0 0.0
    %1648 = vmatpush.xpose.msra.mxu0 0.0
    %1649 = vmatpush.xpose.msra.mxu0 0.0
    %1650 = vmatpush.xpose.msra.mxu0 0.0
    %1651 = vmatpush.xpose.msra.mxu0 0.0
    %1652 = vmatpush.xpose.msra.mxu0 0.0
    %1653 = vmatpush.xpose.msra.mxu0 0.0
    %1654 = vmatpush.xpose.msra.mxu0 %v1644
    %1655 = vmatpush.xpose.msra.mxu0 %v1641
    %1656 = vmatpush.xpose.msra.mxu0 %v1638
    %1657 = vmatpush.xpose.msra.mxu0 %v1635
    %1658 = vmatpush.xpose.msra.mxu0 %v1632
    %1659 = vmatpush.xpose.msra.mxu0 %v1629
    %1660 = vmatpush.xpose.msra.mxu0 %v1626
    %1661 = vmatpush.xpose.msra.mxu0 %v1623
    %1662 = vmatmul.f32.gmra.mxu0 %v1599
    %v1663 = vpop.f32.mrf.mxu0
    %v1664 = vadd.f32 0.0, %v1663
    %1665 = vmatmul.f32.gmra.mxu0 %v1602
    %v1666 = vpop.f32.mrf.mxu0
    %v1667 = vadd.f32 0.0, %v1666
    %1668 = vmatmul.f32.gmra.mxu0 %v1605
    %v1669 = vpop.f32.mrf.mxu0
    %v1670 = vadd.f32 0.0, %v1669
    %1671 = vmatmul.f32.gmra.mxu0 %v1608
    %v1672 = vpop.f32.mrf.mxu0
    %v1673 = vadd.f32 0.0, %v1672
    %1674 = vmatmul.f32.gmra.mxu0 %v1611
    %v1675 = vpop.f32.mrf.mxu0
    %v1676 = vadd.f32 0.0, %v1675
    %1677 = vmatmul.f32.gmra.mxu0 %v1614
    %v1678 = vpop.f32.mrf.mxu0
    %v1679 = vadd.f32 0.0, %v1678
    %1680 = vmatmul.f32.gmra.mxu0 %v1617
    %v1681 = vpop.f32.mrf.mxu0
    %v1682 = vadd.f32 0.0, %v1681
    %1683 = vmatmul.f32.gmra.mxu0 %v1620
    %v1684 = vpop.f32.mrf.mxu0
    %v1685 = vadd.f32 0.0, %v1684
    %1686 = vdwg.mxu0
    %v1687 = vsel %vm141, %v1664, -inf
    %1688 = vmax.xlane.f32.xlu0 %v1687
    %v1689 = vpop.xlane.xlu0 %1688
    %v1690 = vsel %vm141, %v1667, -inf
    %1691 = vmax.xlane.f32.xlu0 %v1690
    %v1692 = vpop.xlane.xlu0 %1691
    %v1693 = vsel %vm141, %v1670, -inf
    %1694 = vmax.xlane.f32.xlu0 %v1693
    %v1695 = vpop.xlane.xlu0 %1694
    %v1696 = vsel %vm141, %v1673, -inf
    %1697 = vmax.xlane.f32.xlu0 %v1696
    %v1698 = vpop.xlane.xlu0 %1697
    %v1699 = vsel %vm141, %v1676, -inf
    %1700 = vmax.xlane.f32.xlu0 %v1699
    %v1701 = vpop.xlane.xlu0 %1700
    %v1702 = vsel %vm141, %v1679, -inf
    %1703 = vmax.xlane.f32.xlu0 %v1702
    %v1704 = vpop.xlane.xlu0 %1703
    %v1705 = vsel %vm141, %v1682, -inf
    %1706 = vmax.xlane.f32.xlu0 %v1705
    %v1707 = vpop.xlane.xlu0 %1706
    %v1708 = vsel %vm141, %v1685, -inf
    %1709 = vmax.xlane.f32.xlu0 %v1708
    %v1710 = vpop.xlane.xlu0 %1709
    %v1711 = vsub.f32 %v1664, %v1689
    %v1712 = vsub.f32 %v1667, %v1692
    %v1713 = vsub.f32 %v1670, %v1695
    %v1714 = vsub.f32 %v1673, %v1698
    %v1715 = vsub.f32 %v1676, %v1701
    %v1716 = vsub.f32 %v1679, %v1704
    %v1717 = vsub.f32 %v1682, %v1707
    %v1718 = vsub.f32 %v1685, %v1710
    %v1719 = vmul.f32 %v1711, 1.442695
    %v1720 = vpow.pop %v1719
    %v1721 = vmul.f32 %v1712, 1.442695
    %v1722 = vpow.pop %v1721
    %v1723 = vmul.f32 %v1713, 1.442695
    %v1724 = vpow.pop %v1723
    %v1725 = vmul.f32 %v1714, 1.442695
    %v1726 = vpow.pop %v1725
    %v1727 = vmul.f32 %v1715, 1.442695
    %v1728 = vpow.pop %v1727
    %v1729 = vmul.f32 %v1716, 1.442695
    %v1730 = vpow.pop %v1729
    %v1731 = vmul.f32 %v1717, 1.442695
    %v1732 = vpow.pop %v1731
    %v1733 = vmul.f32 %v1718, 1.442695
    %v1734 = vpow.pop %v1733
    %v1735 = vmul.f32 %v1720, %v133
    %v1736 = vmul.f32 %v1722, %v134
    %v1737 = vmul.f32 %v1724, %v135
    %v1738 = vmul.f32 %v1726, %v136
    %v1739 = vmul.f32 %v1728, %v137
    %v1740 = vmul.f32 %v1730, %v138
    %v1741 = vmul.f32 %v1732, %v139
    %v1742 = vmul.f32 %v1734, %v140
    %v1743 = vsel %vm141, %v1735, 0.0
    %1744 = vadd.xlane.f32.xlu0 %v1743
    %v1745 = vpop.xlane.xlu0 %1744
    %v1746 = vsel %vm141, %v1736, 0.0
    %1747 = vadd.xlane.f32.xlu0 %v1746
    %v1748 = vpop.xlane.xlu0 %1747
    %v1749 = vsel %vm141, %v1737, 0.0
    %1750 = vadd.xlane.f32.xlu0 %v1749
    %v1751 = vpop.xlane.xlu0 %1750
    %v1752 = vsel %vm141, %v1738, 0.0
    %1753 = vadd.xlane.f32.xlu0 %v1752
    %v1754 = vpop.xlane.xlu0 %1753
    %v1755 = vsel %vm141, %v1739, 0.0
    %1756 = vadd.xlane.f32.xlu0 %v1755
    %v1757 = vpop.xlane.xlu0 %1756
    %v1758 = vsel %vm141, %v1740, 0.0
    %1759 = vadd.xlane.f32.xlu0 %v1758
    %v1760 = vpop.xlane.xlu0 %1759
    %v1761 = vsel %vm141, %v1741, 0.0
    %1762 = vadd.xlane.f32.xlu0 %v1761
    %v1763 = vpop.xlane.xlu0 %1762
    %v1764 = vsel %vm141, %v1742, 0.0
    %1765 = vadd.xlane.f32.xlu0 %v1764
    %v1766 = vpop.xlane.xlu0 %1765
    %v1767 = vrcp.pop %v1745
    %v1768 = vmul.f32 %v1745, %v1767
    %v1769 = vsub.f32 1.0, %v1768
    %v1770 = vmul.f32 %v1767, %v1769
    %v1771 = vadd.f32 %v1767, %v1770
    %vm1772 = vweird.f32 %v1745
    %vm1773 = vweird.f32 %v1767
    %vm1774 = vmor %vm1772, %vm1773
    %v1775 = vsel %vm1774, %v1767, %v1771
    %v1776 = vand.u32 2147483647, %v1745
    %vm1777 = vcmp.eq.f32.partialorder %v1776, 8.507059e+37
    %v1778 = vand.u32 %v1745, 2147483648
    %v1779 = vor.u32 1.1754944e-38, %v1778
    %v1780 = vsel %vm1777, %v1779, %v1775
    %v1781 = vmul.f32 1.0, %v1780
    %v1782 = vrcp.pop %v1748
    %v1783 = vmul.f32 %v1748, %v1782
    %v1784 = vsub.f32 1.0, %v1783
    %v1785 = vmul.f32 %v1782, %v1784
    %v1786 = vadd.f32 %v1782, %v1785
    %vm1787 = vweird.f32 %v1748
    %vm1788 = vweird.f32 %v1782
    %vm1789 = vmor %vm1787, %vm1788
    %v1790 = vsel %vm1789, %v1782, %v1786
    %v1791 = vand.u32 2147483647, %v1748
    %vm1792 = vcmp.eq.f32.partialorder %v1791, 8.507059e+37
    %v1793 = vand.u32 %v1748, 2147483648
    %v1794 = vor.u32 1.1754944e-38, %v1793
    %v1795 = vsel %vm1792, %v1794, %v1790
    %v1796 = vmul.f32 1.0, %v1795
    %v1797 = vrcp.pop %v1751
    %v1798 = vmul.f32 %v1751, %v1797
    %v1799 = vsub.f32 1.0, %v1798
    %v1800 = vmul.f32 %v1797, %v1799
    %v1801 = vadd.f32 %v1797, %v1800
    %vm1802 = vweird.f32 %v1751
    %vm1803 = vweird.f32 %v1797
    %vm1804 = vmor %vm1802, %vm1803
    %v1805 = vsel %vm1804, %v1797, %v1801
    %v1806 = vand.u32 2147483647, %v1751
    %vm1807 = vcmp.eq.f32.partialorder %v1806, 8.507059e+37
    %v1808 = vand.u32 %v1751, 2147483648
    %v1809 = vor.u32 1.1754944e-38, %v1808
    %v1810 = vsel %vm1807, %v1809, %v1805
    %v1811 = vmul.f32 1.0, %v1810
    %v1812 = vrcp.pop %v1754
    %v1813 = vmul.f32 %v1754, %v1812
    %v1814 = vsub.f32 1.0, %v1813
    %v1815 = vmul.f32 %v1812, %v1814
    %v1816 = vadd.f32 %v1812, %v1815
    %vm1817 = vweird.f32 %v1754
    %vm1818 = vweird.f32 %v1812
    %vm1819 = vmor %vm1817, %vm1818
    %v1820 = vsel %vm1819, %v1812, %v1816
    %v1821 = vand.u32 2147483647, %v1754
    %vm1822 = vcmp.eq.f32.partialorder %v1821, 8.507059e+37
    %v1823 = vand.u32 %v1754, 2147483648
    %v1824 = vor.u32 1.1754944e-38, %v1823
    %v1825 = vsel %vm1822, %v1824, %v1820
    %v1826 = vmul.f32 1.0, %v1825
    %v1827 = vrcp.pop %v1757
    %v1828 = vmul.f32 %v1757, %v1827
    %v1829 = vsub.f32 1.0, %v1828
    %v1830 = vmul.f32 %v1827, %v1829
    %v1831 = vadd.f32 %v1827, %v1830
    %vm1832 = vweird.f32 %v1757
    %vm1833 = vweird.f32 %v1827
    %vm1834 = vmor %vm1832, %vm1833
    %v1835 = vsel %vm1834, %v1827, %v1831
    %v1836 = vand.u32 2147483647, %v1757
    %vm1837 = vcmp.eq.f32.partialorder %v1836, 8.507059e+37
    %v1838 = vand.u32 %v1757, 2147483648
    %v1839 = vor.u32 1.1754944e-38, %v1838
    %v1840 = vsel %vm1837, %v1839, %v1835
    %v1841 = vmul.f32 1.0, %v1840
    %v1842 = vrcp.pop %v1760
    %v1843 = vmul.f32 %v1760, %v1842
    %v1844 = vsub.f32 1.0, %v1843
    %v1845 = vmul.f32 %v1842, %v1844
    %v1846 = vadd.f32 %v1842, %v1845
    %vm1847 = vweird.f32 %v1760
    %vm1848 = vweird.f32 %v1842
    %vm1849 = vmor %vm1847, %vm1848
    %v1850 = vsel %vm1849, %v1842, %v1846
    %v1851 = vand.u32 2147483647, %v1760
    %vm1852 = vcmp.eq.f32.partialorder %v1851, 8.507059e+37
    %v1853 = vand.u32 %v1760, 2147483648
    %v1854 = vor.u32 1.1754944e-38, %v1853
    %v1855 = vsel %vm1852, %v1854, %v1850
    %v1856 = vmul.f32 1.0, %v1855
    %v1857 = vrcp.pop %v1763
    %v1858 = vmul.f32 %v1763, %v1857
    %v1859 = vsub.f32 1.0, %v1858
    %v1860 = vmul.f32 %v1857, %v1859
    %v1861 = vadd.f32 %v1857, %v1860
    %vm1862 = vweird.f32 %v1763
    %vm1863 = vweird.f32 %v1857
    %vm1864 = vmor %vm1862, %vm1863
    %v1865 = vsel %vm1864, %v1857, %v1861
    %v1866 = vand.u32 2147483647, %v1763
    %vm1867 = vcmp.eq.f32.partialorder %v1866, 8.507059e+37
    %v1868 = vand.u32 %v1763, 2147483648
    %v1869 = vor.u32 1.1754944e-38, %v1868
    %v1870 = vsel %vm1867, %v1869, %v1865
    %v1871 = vmul.f32 1.0, %v1870
    %v1872 = vrcp.pop %v1766
    %v1873 = vmul.f32 %v1766, %v1872
    %v1874 = vsub.f32 1.0, %v1873
    %v1875 = vmul.f32 %v1872, %v1874
    %v1876 = vadd.f32 %v1872, %v1875
    %vm1877 = vweird.f32 %v1766
    %vm1878 = vweird.f32 %v1872
    %vm1879 = vmor %vm1877, %vm1878
    %v1880 = vsel %vm1879, %v1872, %v1876
    %v1881 = vand.u32 2147483647, %v1766
    %vm1882 = vcmp.eq.f32.partialorder %v1881, 8.507059e+37
    %v1883 = vand.u32 %v1766, 2147483648
    %v1884 = vor.u32 1.1754944e-38, %v1883
    %v1885 = vsel %vm1882, %v1884, %v1880
    %v1886 = vmul.f32 1.0, %v1885
    %v1887 = vmul.f32 %v1735, %v1781
    %v1888 = vmul.f32 %v1736, %v1796
    %v1889 = vmul.f32 %v1737, %v1811
    %v1890 = vmul.f32 %v1738, %v1826
    %v1891 = vmul.f32 %v1739, %v1841
    %v1892 = vmul.f32 %v1740, %v1856
    %v1893 = vmul.f32 %v1741, %v1871
    %v1894 = vmul.f32 %v1742, %v1886
    %v1896 = vsel %vm141, %v1887, 0
    %v1899 = vsel %vm141, %v1888, 0
    %v1902 = vsel %vm141, %v1889, 0
    %v1905 = vsel %vm141, %v1890, 0
    %v1908 = vsel %vm141, %v1891, 0
    %v1911 = vsel %vm141, %v1892, 0
    %v1914 = vsel %vm141, %v1893, 0
    %v1917 = vsel %vm141, %v1894, 0
    %1919 = vmatpush.msra.mxu0 0.0
    %1920 = vmatpush.msra.mxu0 0.0
    %1921 = vmatpush.msra.mxu0 0.0
    %1922 = vmatpush.msra.mxu0 0.0
    %1923 = vmatpush.msra.mxu0 0.0
    %1924 = vmatpush.msra.mxu0 0.0
    %1925 = vmatpush.msra.mxu0 0.0
    %1926 = vmatpush.msra.mxu0 0.0
    %1927 = vmatpush.msra.mxu0 %v1588
    %1928 = vmatpush.msra.mxu0 %v1585
    %1929 = vmatpush.msra.mxu0 %v1582
    %1930 = vmatpush.msra.mxu0 %v1579
    %1931 = vmatpush.msra.mxu0 %v1576
    %1932 = vmatpush.msra.mxu0 %v1573
    %1933 = vmatpush.msra.mxu0 %v1570
    %1934 = vmatpush.msra.mxu0 %v1567
    %1935 = vmatmul.f32.gmra.mxu0 %v1896
    %v1936 = vpop.f32.mrf.mxu0
    %v1937 = vadd.f32 0.0, %v1936
    %1938 = vmatmul.f32.gmra.mxu0 %v1899
    %v1939 = vpop.f32.mrf.mxu0
    %v1940 = vadd.f32 0.0, %v1939
    %1941 = vmatmul.f32.gmra.mxu0 %v1902
    %v1942 = vpop.f32.mrf.mxu0
    %v1943 = vadd.f32 0.0, %v1942
    %1944 = vmatmul.f32.gmra.mxu0 %v1905
    %v1945 = vpop.f32.mrf.mxu0
    %v1946 = vadd.f32 0.0, %v1945
    %1947 = vmatmul.f32.gmra.mxu0 %v1908
    %v1948 = vpop.f32.mrf.mxu0
    %v1949 = vadd.f32 0.0, %v1948
    %1950 = vmatmul.f32.gmra.mxu0 %v1911
    %v1951 = vpop.f32.mrf.mxu0
    %v1952 = vadd.f32 0.0, %v1951
    %1953 = vmatmul.f32.gmra.mxu0 %v1914
    %v1954 = vpop.f32.mrf.mxu0
    %v1955 = vadd.f32 0.0, %v1954
    %1956 = vmatmul.f32.gmra.mxu0 %v1917
    %v1957 = vpop.f32.mrf.mxu0
    %v1958 = vadd.f32 0.0, %v1957
    %1959 = vdwg.mxu0
    %v1961 = vsel %vm417, %v1937, 0
    %v1964 = vsel %vm417, %v1940, 0
    %v1967 = vsel %vm417, %v1943, 0
    %v1970 = vsel %vm417, %v1946, 0
    %v1973 = vsel %vm417, %v1949, 0
    %v1976 = vsel %vm417, %v1952, 0
    %v1979 = vsel %vm417, %v1955, 0
    %v1982 = vsel %vm417, %v1958, 0
    %1984 = vmatpush.msra.mxu0 0.0
    %1985 = vmatpush.msra.mxu0 0.0
    %1986 = vmatpush.msra.mxu0 0.0
    %1987 = vmatpush.msra.mxu0 0.0
    %1988 = vmatpush.msra.mxu0 0.0
    %1989 = vmatpush.msra.mxu0 0.0
    %1990 = vmatpush.msra.mxu0 0.0
    %1991 = vmatpush.msra.mxu0 0.0
    %1992 = vmatpush.msra.mxu0 0.0
    %1993 = vmatpush.msra.mxu0 0.0
    %1994 = vmatpush.msra.mxu0 0.0
    %1995 = vmatpush.msra.mxu0 0.0
    %1996 = vmatpush.msra.mxu0 0.0
    %1997 = vmatpush.msra.mxu0 0.0
    %1998 = vmatpush.msra.mxu0 0.0
    %1999 = vmatpush.msra.mxu0 %v1442
    %2000 = vmatmul.f32.gmra.mxu0 %v1961
    %v2001 = vpop.f32.mrf.mxu0
    %v2002 = vadd.f32 0.0, %v2001
    %2003 = vmatmul.f32.gmra.mxu0 %v1964
    %v2004 = vpop.f32.mrf.mxu0
    %v2005 = vadd.f32 0.0, %v2004
    %2006 = vmatmul.f32.gmra.mxu0 %v1967
    %v2007 = vpop.f32.mrf.mxu0
    %v2008 = vadd.f32 0.0, %v2007
    %2009 = vmatmul.f32.gmra.mxu0 %v1970
    %v2010 = vpop.f32.mrf.mxu0
    %v2011 = vadd.f32 0.0, %v2010
    %2012 = vmatmul.f32.gmra.mxu0 %v1973
    %v2013 = vpop.f32.mrf.mxu0
    %v2014 = vadd.f32 0.0, %v2013
    %2015 = vmatmul.f32.gmra.mxu0 %v1976
    %v2016 = vpop.f32.mrf.mxu0
    %v2017 = vadd.f32 0.0, %v2016
    %2018 = vmatmul.f32.gmra.mxu0 %v1979
    %v2019 = vpop.f32.mrf.mxu0
    %v2020 = vadd.f32 0.0, %v2019
    %2021 = vmatmul.f32.gmra.mxu0 %v1982
    %v2022 = vpop.f32.mrf.mxu0
    %v2023 = vadd.f32 0.0, %v2022
    %2024 = vdwg.mxu0
    %v2025 = vadd.f32 %v1412, %v2002
    %v2026 = vadd.f32 %v1415, %v2005
    %v2027 = vadd.f32 %v1418, %v2008
    %v2028 = vadd.f32 %v1421, %v2011
    %v2029 = vadd.f32 %v1424, %v2014
    %v2030 = vadd.f32 %v1427, %v2017
    %v2031 = vadd.f32 %v1430, %v2020
    %v2032 = vadd.f32 %v1433, %v2023
    %s2033 = scalar_lea.vmem [#allocation5], 24
    %v2034 = vld [vmem:[%s2033] sm:$0xff]
    %s2035 = scalar_lea.vmem [#allocation5], 56
    %v2036 = vld [vmem:[%s2035] sm:$0xff]
    %s2037 = scalar_lea.vmem [#allocation5], 88
    %v2038 = vld [vmem:[%s2037] sm:$0xff]
    %s2039 = scalar_lea.vmem [#allocation5], 120
    %v2040 = vld [vmem:[%s2039] sm:$0xff]
    %s2041 = scalar_lea.vmem [#allocation7], 3
    %v2042 = vld [vmem:[%s2041] sm:$0x1]
    %v2044 = vperm.slane %v2042, 0
    %v2047 = vsel %vm218, %v2034, 0
    %2049 = vmatpush.xpose.msra.mxu0 0.0
    %2050 = vmatpush.xpose.msra.mxu0 0.0
    %2051 = vmatpush.xpose.msra.mxu0 0.0
    %2052 = vmatpush.xpose.msra.mxu0 0.0
    %2053 = vmatpush.xpose.msra.mxu0 0.0
    %2054 = vmatpush.xpose.msra.mxu0 0.0
    %2055 = vmatpush.xpose.msra.mxu0 0.0
    %2056 = vmatpush.xpose.msra.mxu0 0.0
    %2057 = vmatpush.xpose.msra.mxu0 0.0
    %2058 = vmatpush.xpose.msra.mxu0 0.0
    %2059 = vmatpush.xpose.msra.mxu0 0.0
    %2060 = vmatpush.xpose.msra.mxu0 0.0
    %2061 = vmatpush.xpose.msra.mxu0 0.0
    %2062 = vmatpush.xpose.msra.mxu0 0.0
    %2063 = vmatpush.xpose.msra.mxu0 0.0
    %2064 = vmatpush.xpose.msra.mxu0 %v2047
    %2065 = vmatmul.f32.gmra.mxu0 %v220
    %v2066 = vpop.f32.mrf.mxu0
    %v2067 = vadd.f32 %v2044, %v2066
    %2068 = vmatmul.f32.gmra.mxu0 %v223
    %v2069 = vpop.f32.mrf.mxu0
    %v2070 = vadd.f32 %v2044, %v2069
    %2071 = vmatmul.f32.gmra.mxu0 %v226
    %v2072 = vpop.f32.mrf.mxu0
    %v2073 = vadd.f32 %v2044, %v2072
    %2074 = vmatmul.f32.gmra.mxu0 %v229
    %v2075 = vpop.f32.mrf.mxu0
    %v2076 = vadd.f32 %v2044, %v2075
    %2077 = vmatmul.f32.gmra.mxu0 %v232
    %v2078 = vpop.f32.mrf.mxu0
    %v2079 = vadd.f32 %v2044, %v2078
    %2080 = vmatmul.f32.gmra.mxu0 %v235
    %v2081 = vpop.f32.mrf.mxu0
    %v2082 = vadd.f32 %v2044, %v2081
    %2083 = vmatmul.f32.gmra.mxu0 %v238
    %v2084 = vpop.f32.mrf.mxu0
    %v2085 = vadd.f32 %v2044, %v2084
    %2086 = vmatmul.f32.gmra.mxu0 %v241
    %v2087 = vpop.f32.mrf.mxu0
    %v2088 = vadd.f32 %v2044, %v2087
    %2089 = vdwg.mxu0
    %s2090 = scalar_lea.vmem [#allocation7], 7
    %v2091 = vld [vmem:[%s2090] sm:$0x1]
    %v2093 = vperm.slane %v2091, 0
    %v2096 = vsel %vm218, %v2036, 0
    %2098 = vmatpush.xpose.msra.mxu0 0.0
    %2099 = vmatpush.xpose.msra.mxu0 0.0
    %2100 = vmatpush.xpose.msra.mxu0 0.0
    %2101 = vmatpush.xpose.msra.mxu0 0.0
    %2102 = vmatpush.xpose.msra.mxu0 0.0
    %2103 = vmatpush.xpose.msra.mxu0 0.0
    %2104 = vmatpush.xpose.msra.mxu0 0.0
    %2105 = vmatpush.xpose.msra.mxu0 0.0
    %2106 = vmatpush.xpose.msra.mxu0 0.0
    %2107 = vmatpush.xpose.msra.mxu0 0.0
    %2108 = vmatpush.xpose.msra.mxu0 0.0
    %2109 = vmatpush.xpose.msra.mxu0 0.0
    %2110 = vmatpush.xpose.msra.mxu0 0.0
    %2111 = vmatpush.xpose.msra.mxu0 0.0
    %2112 = vmatpush.xpose.msra.mxu0 0.0
    %2113 = vmatpush.xpose.msra.mxu0 %v2096
    %2114 = vmatmul.f32.gmra.mxu0 %v293
    %v2115 = vpop.f32.mrf.mxu0
    %v2116 = vadd.f32 %v2093, %v2115
    %2117 = vmatmul.f32.gmra.mxu0 %v296
    %v2118 = vpop.f32.mrf.mxu0
    %v2119 = vadd.f32 %v2093, %v2118
    %2120 = vmatmul.f32.gmra.mxu0 %v299
    %v2121 = vpop.f32.mrf.mxu0
    %v2122 = vadd.f32 %v2093, %v2121
    %2123 = vmatmul.f32.gmra.mxu0 %v302
    %v2124 = vpop.f32.mrf.mxu0
    %v2125 = vadd.f32 %v2093, %v2124
    %2126 = vmatmul.f32.gmra.mxu0 %v305
    %v2127 = vpop.f32.mrf.mxu0
    %v2128 = vadd.f32 %v2093, %v2127
    %2129 = vmatmul.f32.gmra.mxu0 %v308
    %v2130 = vpop.f32.mrf.mxu0
    %v2131 = vadd.f32 %v2093, %v2130
    %2132 = vmatmul.f32.gmra.mxu0 %v311
    %v2133 = vpop.f32.mrf.mxu0
    %v2134 = vadd.f32 %v2093, %v2133
    %2135 = vmatmul.f32.gmra.mxu0 %v314
    %v2136 = vpop.f32.mrf.mxu0
    %v2137 = vadd.f32 %v2093, %v2136
    %2138 = vdwg.mxu0
    %s2139 = scalar_lea.vmem [#allocation7], 11
    %v2140 = vld [vmem:[%s2139] sm:$0x1]
    %v2142 = vperm.slane %v2140, 0
    %v2145 = vsel %vm218, %v2038, 0
    %2147 = vmatpush.xpose.msra.mxu0 0.0
    %2148 = vmatpush.xpose.msra.mxu0 0.0
    %2149 = vmatpush.xpose.msra.mxu0 0.0
    %2150 = vmatpush.xpose.msra.mxu0 0.0
    %2151 = vmatpush.xpose.msra.mxu0 0.0
    %2152 = vmatpush.xpose.msra.mxu0 0.0
    %2153 = vmatpush.xpose.msra.mxu0 0.0
    %2154 = vmatpush.xpose.msra.mxu0 0.0
    %2155 = vmatpush.xpose.msra.mxu0 0.0
    %2156 = vmatpush.xpose.msra.mxu0 0.0
    %2157 = vmatpush.xpose.msra.mxu0 0.0
    %2158 = vmatpush.xpose.msra.mxu0 0.0
    %2159 = vmatpush.xpose.msra.mxu0 0.0
    %2160 = vmatpush.xpose.msra.mxu0 0.0
    %2161 = vmatpush.xpose.msra.mxu0 0.0
    %2162 = vmatpush.xpose.msra.mxu0 %v2145
    %2163 = vmatmul.f32.gmra.mxu0 %v293
    %v2164 = vpop.f32.mrf.mxu0
    %v2165 = vadd.f32 %v2142, %v2164
    %2166 = vmatmul.f32.gmra.mxu0 %v296
    %v2167 = vpop.f32.mrf.mxu0
    %v2168 = vadd.f32 %v2142, %v2167
    %2169 = vmatmul.f32.gmra.mxu0 %v299
    %v2170 = vpop.f32.mrf.mxu0
    %v2171 = vadd.f32 %v2142, %v2170
    %2172 = vmatmul.f32.gmra.mxu0 %v302
    %v2173 = vpop.f32.mrf.mxu0
    %v2174 = vadd.f32 %v2142, %v2173
    %2175 = vmatmul.f32.gmra.mxu0 %v305
    %v2176 = vpop.f32.mrf.mxu0
    %v2177 = vadd.f32 %v2142, %v2176
    %2178 = vmatmul.f32.gmra.mxu0 %v308
    %v2179 = vpop.f32.mrf.mxu0
    %v2180 = vadd.f32 %v2142, %v2179
    %2181 = vmatmul.f32.gmra.mxu0 %v311
    %v2182 = vpop.f32.mrf.mxu0
    %v2183 = vadd.f32 %v2142, %v2182
    %2184 = vmatmul.f32.gmra.mxu0 %v314
    %v2185 = vpop.f32.mrf.mxu0
    %v2186 = vadd.f32 %v2142, %v2185
    %2187 = vdwg.mxu0
    %v2188 = vmul.f32 %v2067, 0.35355338
    %v2189 = vmul.f32 %v2070, 0.35355338
    %v2190 = vmul.f32 %v2073, 0.35355338
    %v2191 = vmul.f32 %v2076, 0.35355338
    %v2192 = vmul.f32 %v2079, 0.35355338
    %v2193 = vmul.f32 %v2082, 0.35355338
    %v2194 = vmul.f32 %v2085, 0.35355338
    %v2195 = vmul.f32 %v2088, 0.35355338
    %v2197 = vsel %vm417, %v2188, 0
    %v2200 = vsel %vm417, %v2189, 0
    %v2203 = vsel %vm417, %v2190, 0
    %v2206 = vsel %vm417, %v2191, 0
    %v2209 = vsel %vm417, %v2192, 0
    %v2212 = vsel %vm417, %v2193, 0
    %v2215 = vsel %vm417, %v2194, 0
    %v2218 = vsel %vm417, %v2195, 0
    %v2221 = vsel %vm417, %v2116, 0
    %v2224 = vsel %vm417, %v2119, 0
    %v2227 = vsel %vm417, %v2122, 0
    %v2230 = vsel %vm417, %v2125, 0
    %v2233 = vsel %vm417, %v2128, 0
    %v2236 = vsel %vm417, %v2131, 0
    %v2239 = vsel %vm417, %v2134, 0
    %v2242 = vsel %vm417, %v2137, 0
    %2244 = vmatpush.xpose.msra.mxu0 0.0
    %2245 = vmatpush.xpose.msra.mxu0 0.0
    %2246 = vmatpush.xpose.msra.mxu0 0.0
    %2247 = vmatpush.xpose.msra.mxu0 0.0
    %2248 = vmatpush.xpose.msra.mxu0 0.0
    %2249 = vmatpush.xpose.msra.mxu0 0.0
    %2250 = vmatpush.xpose.msra.mxu0 0.0
    %2251 = vmatpush.xpose.msra.mxu0 0.0
    %2252 = vmatpush.xpose.msra.mxu0 %v2242
    %2253 = vmatpush.xpose.msra.mxu0 %v2239
    %2254 = vmatpush.xpose.msra.mxu0 %v2236
    %2255 = vmatpush.xpose.msra.mxu0 %v2233
    %2256 = vmatpush.xpose.msra.mxu0 %v2230
    %2257 = vmatpush.xpose.msra.mxu0 %v2227
    %2258 = vmatpush.xpose.msra.mxu0 %v2224
    %2259 = vmatpush.xpose.msra.mxu0 %v2221
    %2260 = vmatmul.f32.gmra.mxu0 %v2197
    %v2261 = vpop.f32.mrf.mxu0
    %v2262 = vadd.f32 0.0, %v2261
    %2263 = vmatmul.f32.gmra.mxu0 %v2200
    %v2264 = vpop.f32.mrf.mxu0
    %v2265 = vadd.f32 0.0, %v2264
    %2266 = vmatmul.f32.gmra.mxu0 %v2203
    %v2267 = vpop.f32.mrf.mxu0
    %v2268 = vadd.f32 0.0, %v2267
    %2269 = vmatmul.f32.gmra.mxu0 %v2206
    %v2270 = vpop.f32.mrf.mxu0
    %v2271 = vadd.f32 0.0, %v2270
    %2272 = vmatmul.f32.gmra.mxu0 %v2209
    %v2273 = vpop.f32.mrf.mxu0
    %v2274 = vadd.f32 0.0, %v2273
    %2275 = vmatmul.f32.gmra.mxu0 %v2212
    %v2276 = vpop.f32.mrf.mxu0
    %v2277 = vadd.f32 0.0, %v2276
    %2278 = vmatmul.f32.gmra.mxu0 %v2215
    %v2279 = vpop.f32.mrf.mxu0
    %v2280 = vadd.f32 0.0, %v2279
    %2281 = vmatmul.f32.gmra.mxu0 %v2218
    %v2282 = vpop.f32.mrf.mxu0
    %v2283 = vadd.f32 0.0, %v2282
    %2284 = vdwg.mxu0
    %v2285 = vsel %vm141, %v2262, -inf
    %2286 = vmax.xlane.f32.xlu0 %v2285
    %v2287 = vpop.xlane.xlu0 %2286
    %v2288 = vsel %vm141, %v2265, -inf
    %2289 = vmax.xlane.f32.xlu0 %v2288
    %v2290 = vpop.xlane.xlu0 %2289
    %v2291 = vsel %vm141, %v2268, -inf
    %2292 = vmax.xlane.f32.xlu0 %v2291
    %v2293 = vpop.xlane.xlu0 %2292
    %v2294 = vsel %vm141, %v2271, -inf
    %2295 = vmax.xlane.f32.xlu0 %v2294
    %v2296 = vpop.xlane.xlu0 %2295
    %v2297 = vsel %vm141, %v2274, -inf
    %2298 = vmax.xlane.f32.xlu0 %v2297
    %v2299 = vpop.xlane.xlu0 %2298
    %v2300 = vsel %vm141, %v2277, -inf
    %2301 = vmax.xlane.f32.xlu0 %v2300
    %v2302 = vpop.xlane.xlu0 %2301
    %v2303 = vsel %vm141, %v2280, -inf
    %2304 = vmax.xlane.f32.xlu0 %v2303
    %v2305 = vpop.xlane.xlu0 %2304
    %v2306 = vsel %vm141, %v2283, -inf
    %2307 = vmax.xlane.f32.xlu0 %v2306
    %v2308 = vpop.xlane.xlu0 %2307
    %v2309 = vsub.f32 %v2262, %v2287
    %v2310 = vsub.f32 %v2265, %v2290
    %v2311 = vsub.f32 %v2268, %v2293
    %v2312 = vsub.f32 %v2271, %v2296
    %v2313 = vsub.f32 %v2274, %v2299
    %v2314 = vsub.f32 %v2277, %v2302
    %v2315 = vsub.f32 %v2280, %v2305
    %v2316 = vsub.f32 %v2283, %v2308
    %v2317 = vmul.f32 %v2309, 1.442695
    %v2318 = vpow.pop %v2317
    %v2319 = vmul.f32 %v2310, 1.442695
    %v2320 = vpow.pop %v2319
    %v2321 = vmul.f32 %v2311, 1.442695
    %v2322 = vpow.pop %v2321
    %v2323 = vmul.f32 %v2312, 1.442695
    %v2324 = vpow.pop %v2323
    %v2325 = vmul.f32 %v2313, 1.442695
    %v2326 = vpow.pop %v2325
    %v2327 = vmul.f32 %v2314, 1.442695
    %v2328 = vpow.pop %v2327
    %v2329 = vmul.f32 %v2315, 1.442695
    %v2330 = vpow.pop %v2329
    %v2331 = vmul.f32 %v2316, 1.442695
    %v2332 = vpow.pop %v2331
    %v2333 = vmul.f32 %v2318, %v133
    %v2334 = vmul.f32 %v2320, %v134
    %v2335 = vmul.f32 %v2322, %v135
    %v2336 = vmul.f32 %v2324, %v136
    %v2337 = vmul.f32 %v2326, %v137
    %v2338 = vmul.f32 %v2328, %v138
    %v2339 = vmul.f32 %v2330, %v139
    %v2340 = vmul.f32 %v2332, %v140
    %v2341 = vsel %vm141, %v2333, 0.0
    %2342 = vadd.xlane.f32.xlu0 %v2341
    %v2343 = vpop.xlane.xlu0 %2342
    %v2344 = vsel %vm141, %v2334, 0.0
    %2345 = vadd.xlane.f32.xlu0 %v2344
    %v2346 = vpop.xlane.xlu0 %2345
    %v2347 = vsel %vm141, %v2335, 0.0
    %2348 = vadd.xlane.f32.xlu0 %v2347
    %v2349 = vpop.xlane.xlu0 %2348
    %v2350 = vsel %vm141, %v2336, 0.0
    %2351 = vadd.xlane.f32.xlu0 %v2350
    %v2352 = vpop.xlane.xlu0 %2351
    %v2353 = vsel %vm141, %v2337, 0.0
    %2354 = vadd.xlane.f32.xlu0 %v2353
    %v2355 = vpop.xlane.xlu0 %2354
    %v2356 = vsel %vm141, %v2338, 0.0
    %2357 = vadd.xlane.f32.xlu0 %v2356
    %v2358 = vpop.xlane.xlu0 %2357
    %v2359 = vsel %vm141, %v2339, 0.0
    %2360 = vadd.xlane.f32.xlu0 %v2359
    %v2361 = vpop.xlane.xlu0 %2360
    %v2362 = vsel %vm141, %v2340, 0.0
    %2363 = vadd.xlane.f32.xlu0 %v2362
    %v2364 = vpop.xlane.xlu0 %2363
    %v2365 = vrcp.pop %v2343
    %v2366 = vmul.f32 %v2343, %v2365
    %v2367 = vsub.f32 1.0, %v2366
    %v2368 = vmul.f32 %v2365, %v2367
    %v2369 = vadd.f32 %v2365, %v2368
    %vm2370 = vweird.f32 %v2343
    %vm2371 = vweird.f32 %v2365
    %vm2372 = vmor %vm2370, %vm2371
    %v2373 = vsel %vm2372, %v2365, %v2369
    %v2374 = vand.u32 2147483647, %v2343
    %vm2375 = vcmp.eq.f32.partialorder %v2374, 8.507059e+37
    %v2376 = vand.u32 %v2343, 2147483648
    %v2377 = vor.u32 1.1754944e-38, %v2376
    %v2378 = vsel %vm2375, %v2377, %v2373
    %v2379 = vmul.f32 1.0, %v2378
    %v2380 = vrcp.pop %v2346
    %v2381 = vmul.f32 %v2346, %v2380
    %v2382 = vsub.f32 1.0, %v2381
    %v2383 = vmul.f32 %v2380, %v2382
    %v2384 = vadd.f32 %v2380, %v2383
    %vm2385 = vweird.f32 %v2346
    %vm2386 = vweird.f32 %v2380
    %vm2387 = vmor %vm2385, %vm2386
    %v2388 = vsel %vm2387, %v2380, %v2384
    %v2389 = vand.u32 2147483647, %v2346
    %vm2390 = vcmp.eq.f32.partialorder %v2389, 8.507059e+37
    %v2391 = vand.u32 %v2346, 2147483648
    %v2392 = vor.u32 1.1754944e-38, %v2391
    %v2393 = vsel %vm2390, %v2392, %v2388
    %v2394 = vmul.f32 1.0, %v2393
    %v2395 = vrcp.pop %v2349
    %v2396 = vmul.f32 %v2349, %v2395
    %v2397 = vsub.f32 1.0, %v2396
    %v2398 = vmul.f32 %v2395, %v2397
    %v2399 = vadd.f32 %v2395, %v2398
    %vm2400 = vweird.f32 %v2349
    %vm2401 = vweird.f32 %v2395
    %vm2402 = vmor %vm2400, %vm2401
    %v2403 = vsel %vm2402, %v2395, %v2399
    %v2404 = vand.u32 2147483647, %v2349
    %vm2405 = vcmp.eq.f32.partialorder %v2404, 8.507059e+37
    %v2406 = vand.u32 %v2349, 2147483648
    %v2407 = vor.u32 1.1754944e-38, %v2406
    %v2408 = vsel %vm2405, %v2407, %v2403
    %v2409 = vmul.f32 1.0, %v2408
    %v2410 = vrcp.pop %v2352
    %v2411 = vmul.f32 %v2352, %v2410
    %v2412 = vsub.f32 1.0, %v2411
    %v2413 = vmul.f32 %v2410, %v2412
    %v2414 = vadd.f32 %v2410, %v2413
    %vm2415 = vweird.f32 %v2352
    %vm2416 = vweird.f32 %v2410
    %vm2417 = vmor %vm2415, %vm2416
    %v2418 = vsel %vm2417, %v2410, %v2414
    %v2419 = vand.u32 2147483647, %v2352
    %vm2420 = vcmp.eq.f32.partialorder %v2419, 8.507059e+37
    %v2421 = vand.u32 %v2352, 2147483648
    %v2422 = vor.u32 1.1754944e-38, %v2421
    %v2423 = vsel %vm2420, %v2422, %v2418
    %v2424 = vmul.f32 1.0, %v2423
    %v2425 = vrcp.pop %v2355
    %v2426 = vmul.f32 %v2355, %v2425
    %v2427 = vsub.f32 1.0, %v2426
    %v2428 = vmul.f32 %v2425, %v2427
    %v2429 = vadd.f32 %v2425, %v2428
    %vm2430 = vweird.f32 %v2355
    %vm2431 = vweird.f32 %v2425
    %vm2432 = vmor %vm2430, %vm2431
    %v2433 = vsel %vm2432, %v2425, %v2429
    %v2434 = vand.u32 2147483647, %v2355
    %vm2435 = vcmp.eq.f32.partialorder %v2434, 8.507059e+37
    %v2436 = vand.u32 %v2355, 2147483648
    %v2437 = vor.u32 1.1754944e-38, %v2436
    %v2438 = vsel %vm2435, %v2437, %v2433
    %v2439 = vmul.f32 1.0, %v2438
    %v2440 = vrcp.pop %v2358
    %v2441 = vmul.f32 %v2358, %v2440
    %v2442 = vsub.f32 1.0, %v2441
    %v2443 = vmul.f32 %v2440, %v2442
    %v2444 = vadd.f32 %v2440, %v2443
    %vm2445 = vweird.f32 %v2358
    %vm2446 = vweird.f32 %v2440
    %vm2447 = vmor %vm2445, %vm2446
    %v2448 = vsel %vm2447, %v2440, %v2444
    %v2449 = vand.u32 2147483647, %v2358
    %vm2450 = vcmp.eq.f32.partialorder %v2449, 8.507059e+37
    %v2451 = vand.u32 %v2358, 2147483648
    %v2452 = vor.u32 1.1754944e-38, %v2451
    %v2453 = vsel %vm2450, %v2452, %v2448
    %v2454 = vmul.f32 1.0, %v2453
    %v2455 = vrcp.pop %v2361
    %v2456 = vmul.f32 %v2361, %v2455
    %v2457 = vsub.f32 1.0, %v2456
    %v2458 = vmul.f32 %v2455, %v2457
    %v2459 = vadd.f32 %v2455, %v2458
    %vm2460 = vweird.f32 %v2361
    %vm2461 = vweird.f32 %v2455
    %vm2462 = vmor %vm2460, %vm2461
    %v2463 = vsel %vm2462, %v2455, %v2459
    %v2464 = vand.u32 2147483647, %v2361
    %vm2465 = vcmp.eq.f32.partialorder %v2464, 8.507059e+37
    %v2466 = vand.u32 %v2361, 2147483648
    %v2467 = vor.u32 1.1754944e-38, %v2466
    %v2468 = vsel %vm2465, %v2467, %v2463
    %v2469 = vmul.f32 1.0, %v2468
    %v2470 = vrcp.pop %v2364
    %v2471 = vmul.f32 %v2364, %v2470
    %v2472 = vsub.f32 1.0, %v2471
    %v2473 = vmul.f32 %v2470, %v2472
    %v2474 = vadd.f32 %v2470, %v2473
    %vm2475 = vweird.f32 %v2364
    %vm2476 = vweird.f32 %v2470
    %vm2477 = vmor %vm2475, %vm2476
    %v2478 = vsel %vm2477, %v2470, %v2474
    %v2479 = vand.u32 2147483647, %v2364
    %vm2480 = vcmp.eq.f32.partialorder %v2479, 8.507059e+37
    %v2481 = vand.u32 %v2364, 2147483648
    %v2482 = vor.u32 1.1754944e-38, %v2481
    %v2483 = vsel %vm2480, %v2482, %v2478
    %v2484 = vmul.f32 1.0, %v2483
    %v2485 = vmul.f32 %v2333, %v2379
    %v2486 = vmul.f32 %v2334, %v2394
    %v2487 = vmul.f32 %v2335, %v2409
    %v2488 = vmul.f32 %v2336, %v2424
    %v2489 = vmul.f32 %v2337, %v2439
    %v2490 = vmul.f32 %v2338, %v2454
    %v2491 = vmul.f32 %v2339, %v2469
    %v2492 = vmul.f32 %v2340, %v2484
    %v2494 = vsel %vm141, %v2485, 0
    %v2497 = vsel %vm141, %v2486, 0
    %v2500 = vsel %vm141, %v2487, 0
    %v2503 = vsel %vm141, %v2488, 0
    %v2506 = vsel %vm141, %v2489, 0
    %v2509 = vsel %vm141, %v2490, 0
    %v2512 = vsel %vm141, %v2491, 0
    %v2515 = vsel %vm141, %v2492, 0
    %2517 = vmatpush.msra.mxu0 0.0
    %2518 = vmatpush.msra.mxu0 0.0
    %2519 = vmatpush.msra.mxu0 0.0
    %2520 = vmatpush.msra.mxu0 0.0
    %2521 = vmatpush.msra.mxu0 0.0
    %2522 = vmatpush.msra.mxu0 0.0
    %2523 = vmatpush.msra.mxu0 0.0
    %2524 = vmatpush.msra.mxu0 0.0
    %2525 = vmatpush.msra.mxu0 %v2186
    %2526 = vmatpush.msra.mxu0 %v2183
    %2527 = vmatpush.msra.mxu0 %v2180
    %2528 = vmatpush.msra.mxu0 %v2177
    %2529 = vmatpush.msra.mxu0 %v2174
    %2530 = vmatpush.msra.mxu0 %v2171
    %2531 = vmatpush.msra.mxu0 %v2168
    %2532 = vmatpush.msra.mxu0 %v2165
    %2533 = vmatmul.f32.gmra.mxu0 %v2494
    %v2534 = vpop.f32.mrf.mxu0
    %v2535 = vadd.f32 0.0, %v2534
    %2536 = vmatmul.f32.gmra.mxu0 %v2497
    %v2537 = vpop.f32.mrf.mxu0
    %v2538 = vadd.f32 0.0, %v2537
    %2539 = vmatmul.f32.gmra.mxu0 %v2500
    %v2540 = vpop.f32.mrf.mxu0
    %v2541 = vadd.f32 0.0, %v2540
    %2542 = vmatmul.f32.gmra.mxu0 %v2503
    %v2543 = vpop.f32.mrf.mxu0
    %v2544 = vadd.f32 0.0, %v2543
    %2545 = vmatmul.f32.gmra.mxu0 %v2506
    %v2546 = vpop.f32.mrf.mxu0
    %v2547 = vadd.f32 0.0, %v2546
    %2548 = vmatmul.f32.gmra.mxu0 %v2509
    %v2549 = vpop.f32.mrf.mxu0
    %v2550 = vadd.f32 0.0, %v2549
    %2551 = vmatmul.f32.gmra.mxu0 %v2512
    %v2552 = vpop.f32.mrf.mxu0
    %v2553 = vadd.f32 0.0, %v2552
    %2554 = vmatmul.f32.gmra.mxu0 %v2515
    %v2555 = vpop.f32.mrf.mxu0
    %v2556 = vadd.f32 0.0, %v2555
    %2557 = vdwg.mxu0
    %v2559 = vsel %vm417, %v2535, 0
    %v2562 = vsel %vm417, %v2538, 0
    %v2565 = vsel %vm417, %v2541, 0
    %v2568 = vsel %vm417, %v2544, 0
    %v2571 = vsel %vm417, %v2547, 0
    %v2574 = vsel %vm417, %v2550, 0
    %v2577 = vsel %vm417, %v2553, 0
    %v2580 = vsel %vm417, %v2556, 0
    %2582 = vmatpush.msra.mxu0 0.0
    %2583 = vmatpush.msra.mxu0 0.0
    %2584 = vmatpush.msra.mxu0 0.0
    %2585 = vmatpush.msra.mxu0 0.0
    %2586 = vmatpush.msra.mxu0 0.0
    %2587 = vmatpush.msra.mxu0 0.0
    %2588 = vmatpush.msra.mxu0 0.0
    %2589 = vmatpush.msra.mxu0 0.0
    %2590 = vmatpush.msra.mxu0 0.0
    %2591 = vmatpush.msra.mxu0 0.0
    %2592 = vmatpush.msra.mxu0 0.0
    %2593 = vmatpush.msra.mxu0 0.0
    %2594 = vmatpush.msra.mxu0 0.0
    %2595 = vmatpush.msra.mxu0 0.0
    %2596 = vmatpush.msra.mxu0 0.0
    %2597 = vmatpush.msra.mxu0 %v2040
    %2598 = vmatmul.f32.gmra.mxu0 %v2559
    %v2599 = vpop.f32.mrf.mxu0
    %v2600 = vadd.f32 0.0, %v2599
    %2601 = vmatmul.f32.gmra.mxu0 %v2562
    %v2602 = vpop.f32.mrf.mxu0
    %v2603 = vadd.f32 0.0, %v2602
    %2604 = vmatmul.f32.gmra.mxu0 %v2565
    %v2605 = vpop.f32.mrf.mxu0
    %v2606 = vadd.f32 0.0, %v2605
    %2607 = vmatmul.f32.gmra.mxu0 %v2568
    %v2608 = vpop.f32.mrf.mxu0
    %v2609 = vadd.f32 0.0, %v2608
    %2610 = vmatmul.f32.gmra.mxu0 %v2571
    %v2611 = vpop.f32.mrf.mxu0
    %v2612 = vadd.f32 0.0, %v2611
    %2613 = vmatmul.f32.gmra.mxu0 %v2574
    %v2614 = vpop.f32.mrf.mxu0
    %v2615 = vadd.f32 0.0, %v2614
    %2616 = vmatmul.f32.gmra.mxu0 %v2577
    %v2617 = vpop.f32.mrf.mxu0
    %v2618 = vadd.f32 0.0, %v2617
    %2619 = vmatmul.f32.gmra.mxu0 %v2580
    %v2620 = vpop.f32.mrf.mxu0
    %v2621 = vadd.f32 0.0, %v2620
    %2622 = vdwg.mxu0
    %v2623 = vadd.f32 %v2025, %v2600
    %v2624 = vadd.f32 %v2026, %v2603
    %v2625 = vadd.f32 %v2027, %v2606
    %v2626 = vadd.f32 %v2028, %v2609
    %v2627 = vadd.f32 %v2029, %v2612
    %v2628 = vadd.f32 %v2030, %v2615
    %v2629 = vadd.f32 %v2031, %v2618
    %v2630 = vadd.f32 %v2032, %v2621
    %v2631 = vld [vmem:[#allocation10] sm:$0x1]
    %v2632 = vperm.slane %v2631, 0
    %v2633 = vadd.f32 %v2623, %v2632
    %v2634 = vadd.f32 %v2624, %v2632
    %v2635 = vadd.f32 %v2625, %v2632
    %v2636 = vadd.f32 %v2626, %v2632
    %v2637 = vadd.f32 %v2627, %v2632
    %v2638 = vadd.f32 %v2628, %v2632
    %v2639 = vadd.f32 %v2629, %v2632
    %v2640 = vadd.f32 %v2630, %v2632
    %v2641 = vadd.f32 %v116, %v2633
    %v2642 = vadd.f32 %v117, %v2634
    %v2643 = vadd.f32 %v118, %v2635
    %v2644 = vadd.f32 %v119, %v2636
    %v2645 = vadd.f32 %v120, %v2637
    %v2646 = vadd.f32 %v121, %v2638
    %v2647 = vadd.f32 %v122, %v2639
    %v2648 = vadd.f32 %v123, %v2640
    %v2649 = vld [vmem:[#allocation10 + $0x1] sm:$0x1]
    %v2650 = vld [vmem:[#allocation10 + $0x2] sm:$0x1]
    %v2651 = vsel %vm218, %v2641, 0.0
    %2652 = vadd.xlane.f32.xlu0 %v2651
    %v2653 = vpop.xlane.xlu0 %2652
    %v2654 = vsel %vm218, %v2642, 0.0
    %2655 = vadd.xlane.f32.xlu0 %v2654
    %v2656 = vpop.xlane.xlu0 %2655
    %v2657 = vsel %vm218, %v2643, 0.0
    %2658 = vadd.xlane.f32.xlu0 %v2657
    %v2659 = vpop.xlane.xlu0 %2658
    %v2660 = vsel %vm218, %v2644, 0.0
    %2661 = vadd.xlane.f32.xlu0 %v2660
    %v2662 = vpop.xlane.xlu0 %2661
    %v2663 = vsel %vm218, %v2645, 0.0
    %2664 = vadd.xlane.f32.xlu0 %v2663
    %v2665 = vpop.xlane.xlu0 %2664
    %v2666 = vsel %vm218, %v2646, 0.0
    %2667 = vadd.xlane.f32.xlu0 %v2666
    %v2668 = vpop.xlane.xlu0 %2667
    %v2669 = vsel %vm218, %v2647, 0.0
    %2670 = vadd.xlane.f32.xlu0 %v2669
    %v2671 = vpop.xlane.xlu0 %2670
    %v2672 = vsel %vm218, %v2648, 0.0
    %2673 = vadd.xlane.f32.xlu0 %v2672
    %v2674 = vpop.xlane.xlu0 %2673
    %v2675 = vrcp.pop 32.0
    %v2676 = vmul.f32 32.0, %v2675
    %v2677 = vsub.f32 1.0, %v2676
    %v2678 = vmul.f32 %v2675, %v2677
    %v2679 = vadd.f32 %v2675, %v2678
    %vm2680 = vweird.f32 %v2675
    %v2681 = vsel %vm2680, %v2675, %v2679
    %v2682 = vmul.f32 %v2653, %v2681
    %v2683 = vmul.f32 %v2656, %v2681
    %v2684 = vmul.f32 %v2659, %v2681
    %v2685 = vmul.f32 %v2662, %v2681
    %v2686 = vmul.f32 %v2665, %v2681
    %v2687 = vmul.f32 %v2668, %v2681
    %v2688 = vmul.f32 %v2671, %v2681
    %v2689 = vmul.f32 %v2674, %v2681
    %v2690 = vsub.f32 %v2641, %v2682
    %v2691 = vsub.f32 %v2642, %v2683
    %v2692 = vsub.f32 %v2643, %v2684
    %v2693 = vsub.f32 %v2644, %v2685
    %v2694 = vsub.f32 %v2645, %v2686
    %v2695 = vsub.f32 %v2646, %v2687
    %v2696 = vsub.f32 %v2647, %v2688
    %v2697 = vsub.f32 %v2648, %v2689
    %v2698 = vmul.f32 %v2690, %v2690
    %v2699 = vmul.f32 %v2691, %v2691
    %v2700 = vmul.f32 %v2692, %v2692
    %v2701 = vmul.f32 %v2693, %v2693
    %v2702 = vmul.f32 %v2694, %v2694
    %v2703 = vmul.f32 %v2695, %v2695
    %v2704 = vmul.f32 %v2696, %v2696
    %v2705 = vmul.f32 %v2697, %v2697
    %v2706 = vsel %vm218, %v2698, 0.0
    %2707 = vadd.xlane.f32.xlu0 %v2706
    %v2708 = vpop.xlane.xlu0 %2707
    %v2709 = vsel %vm218, %v2699, 0.0
    %2710 = vadd.xlane.f32.xlu0 %v2709
    %v2711 = vpop.xlane.xlu0 %2710
    %v2712 = vsel %vm218, %v2700, 0.0
    %2713 = vadd.xlane.f32.xlu0 %v2712
    %v2714 = vpop.xlane.xlu0 %2713
    %v2715 = vsel %vm218, %v2701, 0.0
    %2716 = vadd.xlane.f32.xlu0 %v2715
    %v2717 = vpop.xlane.xlu0 %2716
    %v2718 = vsel %vm218, %v2702, 0.0
    %2719 = vadd.xlane.f32.xlu0 %v2718
    %v2720 = vpop.xlane.xlu0 %2719
    %v2721 = vsel %vm218, %v2703, 0.0
    %2722 = vadd.xlane.f32.xlu0 %v2721
    %v2723 = vpop.xlane.xlu0 %2722
    %v2724 = vsel %vm218, %v2704, 0.0
    %2725 = vadd.xlane.f32.xlu0 %v2724
    %v2726 = vpop.xlane.xlu0 %2725
    %v2727 = vsel %vm218, %v2705, 0.0
    %2728 = vadd.xlane.f32.xlu0 %v2727
    %v2729 = vpop.xlane.xlu0 %2728
    %v2730 = vmul.f32 %v2708, %v2681
    %v2731 = vmul.f32 %v2711, %v2681
    %v2732 = vmul.f32 %v2714, %v2681
    %v2733 = vmul.f32 %v2717, %v2681
    %v2734 = vmul.f32 %v2720, %v2681
    %v2735 = vmul.f32 %v2723, %v2681
    %v2736 = vmul.f32 %v2726, %v2681
    %v2737 = vmul.f32 %v2729, %v2681
    %v2738 = vadd.f32 %v2730, 1e-05
    %v2739 = vadd.f32 %v2731, 1e-05
    %v2740 = vadd.f32 %v2732, 1e-05
    %v2741 = vadd.f32 %v2733, 1e-05
    %v2742 = vadd.f32 %v2734, 1e-05
    %v2743 = vadd.f32 %v2735, 1e-05
    %v2744 = vadd.f32 %v2736, 1e-05
    %v2745 = vadd.f32 %v2737, 1e-05
    %v2746 = vrsqrt.pop %v2738
    %v2747 = vmul.f32 %v2746, %v2738
    %v2748 = vmul.f32 %v2747, %v2746
    %v2749 = vmul.f32 0.5, %v2748
    %v2750 = vsub.f32 1.5, %v2749
    %v2751 = vmul.f32 %v2746, %v2750
    %vm2752 = vweird.f32 %v2738
    %vm2753 = vweird.f32 %v2746
    %vm2754 = vmor %vm2752, %vm2753
    %v2755 = vsel %vm2754, %v2746, %v2751
    %v2756 = vrsqrt.pop %v2739
    %v2757 = vmul.f32 %v2756, %v2739
    %v2758 = vmul.f32 %v2757, %v2756
    %v2759 = vmul.f32 0.5, %v2758
    %v2760 = vsub.f32 1.5, %v2759
    %v2761 = vmul.f32 %v2756, %v2760
    %vm2762 = vweird.f32 %v2739
    %vm2763 = vweird.f32 %v2756
    %vm2764 = vmor %vm2762, %vm2763
    %v2765 = vsel %vm2764, %v2756, %v2761
    %v2766 = vrsqrt.pop %v2740
    %v2767 = vmul.f32 %v2766, %v2740
    %v2768 = vmul.f32 %v2767, %v2766
    %v2769 = vmul.f32 0.5, %v2768
    %v2770 = vsub.f32 1.5, %v2769
    %v2771 = vmul.f32 %v2766, %v2770
    %vm2772 = vweird.f32 %v2740
    %vm2773 = vweird.f32 %v2766
    %vm2774 = vmor %vm2772, %vm2773
    %v2775 = vsel %vm2774, %v2766, %v2771
    %v2776 = vrsqrt.pop %v2741
    %v2777 = vmul.f32 %v2776, %v2741
    %v2778 = vmul.f32 %v2777, %v2776
    %v2779 = vmul.f32 0.5, %v2778
    %v2780 = vsub.f32 1.5, %v2779
    %v2781 = vmul.f32 %v2776, %v2780
    %vm2782 = vweird.f32 %v2741
    %vm2783 = vweird.f32 %v2776
    %vm2784 = vmor %vm2782, %vm2783
    %v2785 = vsel %vm2784, %v2776, %v2781
    %v2786 = vrsqrt.pop %v2742
    %v2787 = vmul.f32 %v2786, %v2742
    %v2788 = vmul.f32 %v2787, %v2786
    %v2789 = vmul.f32 0.5, %v2788
    %v2790 = vsub.f32 1.5, %v2789
    %v2791 = vmul.f32 %v2786, %v2790
    %vm2792 = vweird.f32 %v2742
    %vm2793 = vweird.f32 %v2786
    %vm2794 = vmor %vm2792, %vm2793
    %v2795 = vsel %vm2794, %v2786, %v2791
    %v2796 = vrsqrt.pop %v2743
    %v2797 = vmul.f32 %v2796, %v2743
    %v2798 = vmul.f32 %v2797, %v2796
    %v2799 = vmul.f32 0.5, %v2798
    %v2800 = vsub.f32 1.5, %v2799
    %v2801 = vmul.f32 %v2796, %v2800
    %vm2802 = vweird.f32 %v2743
    %vm2803 = vweird.f32 %v2796
    %vm2804 = vmor %vm2802, %vm2803
    %v2805 = vsel %vm2804, %v2796, %v2801
    %v2806 = vrsqrt.pop %v2744
    %v2807 = vmul.f32 %v2806, %v2744
    %v2808 = vmul.f32 %v2807, %v2806
    %v2809 = vmul.f32 0.5, %v2808
    %v2810 = vsub.f32 1.5, %v2809
    %v2811 = vmul.f32 %v2806, %v2810
    %vm2812 = vweird.f32 %v2744
    %vm2813 = vweird.f32 %v2806
    %vm2814 = vmor %vm2812, %vm2813
    %v2815 = vsel %vm2814, %v2806, %v2811
    %v2816 = vrsqrt.pop %v2745
    %v2817 = vmul.f32 %v2816, %v2745
    %v2818 = vmul.f32 %v2817, %v2816
    %v2819 = vmul.f32 0.5, %v2818
    %v2820 = vsub.f32 1.5, %v2819
    %v2821 = vmul.f32 %v2816, %v2820
    %vm2822 = vweird.f32 %v2745
    %vm2823 = vweird.f32 %v2816
    %vm2824 = vmor %vm2822, %vm2823
    %v2825 = vsel %vm2824, %v2816, %v2821
    %v2826 = vmul.f32 %v2690, %v2755
    %v2827 = vmul.f32 %v2691, %v2765
    %v2828 = vmul.f32 %v2692, %v2775
    %v2829 = vmul.f32 %v2693, %v2785
    %v2830 = vmul.f32 %v2694, %v2795
    %v2831 = vmul.f32 %v2695, %v2805
    %v2832 = vmul.f32 %v2696, %v2815
    %v2833 = vmul.f32 %v2697, %v2825
    %v2834 = vperm.slane %v2649, 0
    %v2835 = vmul.f32 %v2826, %v2834
    %v2836 = vmul.f32 %v2827, %v2834
    %v2837 = vmul.f32 %v2828, %v2834
    %v2838 = vmul.f32 %v2829, %v2834
    %v2839 = vmul.f32 %v2830, %v2834
    %v2840 = vmul.f32 %v2831, %v2834
    %v2841 = vmul.f32 %v2832, %v2834
    %v2842 = vmul.f32 %v2833, %v2834
    %v2843 = vperm.slane %v2650, 0
    %v2844 = vadd.f32 %v2835, %v2843
    %v2845 = vadd.f32 %v2836, %v2843
    %v2846 = vadd.f32 %v2837, %v2843
    %v2847 = vadd.f32 %v2838, %v2843
    %v2848 = vadd.f32 %v2839, %v2843
    %v2849 = vadd.f32 %v2840, %v2843
    %v2850 = vadd.f32 %v2841, %v2843
    %v2851 = vadd.f32 %v2842, %v2843
    %v2852 = vld [vmem:[#allocation8] sm:$0xff]
    %v2853 = vld [vmem:[#allocation8 + $0x8] sm:$0xff]
    %v2854 = vld [vmem:[#allocation8 + $0x10] sm:$0xff]
    %v2855 = vld [vmem:[#allocation8 + $0x18] sm:$0xff]
    %v2856 = vld [vmem:[#allocation10 + $0x3] sm:$0x1]
    %v2857 = vperm.slane %v2856, 0
    %v2859 = vsel %vm218, %v2844, 0
    %v2862 = vsel %vm218, %v2845, 0
    %v2865 = vsel %vm218, %v2846, 0
    %v2868 = vsel %vm218, %v2847, 0
    %v2871 = vsel %vm218, %v2848, 0
    %v2874 = vsel %vm218, %v2849, 0
    %v2877 = vsel %vm218, %v2850, 0
    %v2880 = vsel %vm218, %v2851, 0
    %v2883 = vsel %vm218, %v2852, 0
    %v2886 = vsel %vm218, %v2853, 0
    %v2889 = vsel %vm218, %v2854, 0
    %v2892 = vsel %vm218, %v2855, 0
    %2894 = vmatpush.xpose.msra.mxu0 0.0
    %2895 = vmatpush.xpose.msra.mxu0 0.0
    %2896 = vmatpush.xpose.msra.mxu0 0.0
    %2897 = vmatpush.xpose.msra.mxu0 0.0
    %2898 = vmatpush.xpose.msra.mxu0 0.0
    %2899 = vmatpush.xpose.msra.mxu0 0.0
    %2900 = vmatpush.xpose.msra.mxu0 0.0
    %2901 = vmatpush.xpose.msra.mxu0 0.0
    %2902 = vmatpush.xpose.msra.mxu0 0.0
    %2903 = vmatpush.xpose.msra.mxu0 0.0
    %2904 = vmatpush.xpose.msra.mxu0 0.0
    %2905 = vmatpush.xpose.msra.mxu0 0.0
    %2906 = vmatpush.xpose.msra.mxu0 %v2892
    %2907 = vmatpush.xpose.msra.mxu0 %v2889
    %2908 = vmatpush.xpose.msra.mxu0 %v2886
    %2909 = vmatpush.xpose.msra.mxu0 %v2883
    %2910 = vmatmul.f32.gmra.mxu0 %v2859
    %v2911 = vpop.f32.mrf.mxu0
    %v2912 = vadd.f32 %v2857, %v2911
    %2913 = vmatmul.f32.gmra.mxu0 %v2862
    %v2914 = vpop.f32.mrf.mxu0
    %v2915 = vadd.f32 %v2857, %v2914
    %2916 = vmatmul.f32.gmra.mxu0 %v2865
    %v2917 = vpop.f32.mrf.mxu0
    %v2918 = vadd.f32 %v2857, %v2917
    %2919 = vmatmul.f32.gmra.mxu0 %v2868
    %v2920 = vpop.f32.mrf.mxu0
    %v2921 = vadd.f32 %v2857, %v2920
    %2922 = vmatmul.f32.gmra.mxu0 %v2871
    %v2923 = vpop.f32.mrf.mxu0
    %v2924 = vadd.f32 %v2857, %v2923
    %2925 = vmatmul.f32.gmra.mxu0 %v2874
    %v2926 = vpop.f32.mrf.mxu0
    %v2927 = vadd.f32 %v2857, %v2926
    %2928 = vmatmul.f32.gmra.mxu0 %v2877
    %v2929 = vpop.f32.mrf.mxu0
    %v2930 = vadd.f32 %v2857, %v2929
    %2931 = vmatmul.f32.gmra.mxu0 %v2880
    %v2932 = vpop.f32.mrf.mxu0
    %v2933 = vadd.f32 %v2857, %v2932
    %2934 = vdwg.mxu0
    %v2935 = vmul.f32 %v2912, 0.5
    %v2936 = vmul.f32 %v2915, 0.5
    %v2937 = vmul.f32 %v2918, 0.5
    %v2938 = vmul.f32 %v2921, 0.5
    %v2939 = vmul.f32 %v2924, 0.5
    %v2940 = vmul.f32 %v2927, 0.5
    %v2941 = vmul.f32 %v2930, 0.5
    %v2942 = vmul.f32 %v2933, 0.5
    %v2943 = vmul.f32 %v2912, 0.70710677
    %v2944 = vmul.f32 %v2915, 0.70710677
    %v2945 = vmul.f32 %v2918, 0.70710677
    %v2946 = vmul.f32 %v2921, 0.70710677
    %v2947 = vmul.f32 %v2924, 0.70710677
    %v2948 = vmul.f32 %v2927, 0.70710677
    %v2949 = vmul.f32 %v2930, 0.70710677
    %v2950 = vmul.f32 %v2933, 0.70710677
    %vm2951 = vcmp.ge.f32.partialorder %v2943, 0.0
    %vm2952 = vcmp.ge.f32.partialorder %v2944, 0.0
    %vm2953 = vcmp.ge.f32.partialorder %v2945, 0.0
    %vm2954 = vcmp.ge.f32.partialorder %v2946, 0.0
    %vm2955 = vcmp.ge.f32.partialorder %v2947, 0.0
    %vm2956 = vcmp.ge.f32.partialorder %v2948, 0.0
    %vm2957 = vcmp.ge.f32.partialorder %v2949, 0.0
    %vm2958 = vcmp.ge.f32.partialorder %v2950, 0.0
    %v2959 = vsel %vm2951, 1.0, -1.0
    %v2960 = vsel %vm2952, 1.0, -1.0
    %v2961 = vsel %vm2953, 1.0, -1.0
    %v2962 = vsel %vm2954, 1.0, -1.0
    %v2963 = vsel %vm2955, 1.0, -1.0
    %v2964 = vsel %vm2956, 1.0, -1.0
    %v2965 = vsel %vm2957, 1.0, -1.0
    %v2966 = vsel %vm2958, 1.0, -1.0
    %v2967 = vand.u32 2147483647, %v2943
    %v2968 = vand.u32 2147483647, %v2944
    %v2969 = vand.u32 2147483647, %v2945
    %v2970 = vand.u32 2147483647, %v2946
    %v2971 = vand.u32 2147483647, %v2947
    %v2972 = vand.u32 2147483647, %v2948
    %v2973 = vand.u32 2147483647, %v2949
    %v2974 = vand.u32 2147483647, %v2950
    %v2975 = vmul.f32 %v2967, 0.3275911
    %v2976 = vmul.f32 %v2968, 0.3275911
    %v2977 = vmul.f32 %v2969, 0.3275911
    %v2978 = vmul.f32 %v2970, 0.3275911
    %v2979 = vmul.f32 %v2971, 0.3275911
    %v2980 = vmul.f32 %v2972, 0.3275911
    %v2981 = vmul.f32 %v2973, 0.3275911
    %v2982 = vmul.f32 %v2974, 0.3275911
    %v2983 = vadd.f32 %v2975, 1.0
    %v2984 = vadd.f32 %v2976, 1.0
    %v2985 = vadd.f32 %v2977, 1.0
    %v2986 = vadd.f32 %v2978, 1.0
    %v2987 = vadd.f32 %v2979, 1.0
    %v2988 = vadd.f32 %v2980, 1.0
    %v2989 = vadd.f32 %v2981, 1.0
    %v2990 = vadd.f32 %v2982, 1.0
    %v2991 = vrcp.pop %v2983
    %v2992 = vmul.f32 %v2983, %v2991
    %v2993 = vsub.f32 1.0, %v2992
    %v2994 = vmul.f32 %v2991, %v2993
    %v2995 = vadd.f32 %v2991, %v2994
    %vm2996 = vweird.f32 %v2983
    %vm2997 = vweird.f32 %v2991
    %vm2998 = vmor %vm2996, %vm2997
    %v2999 = vsel %vm2998, %v2991, %v2995
    %v3000 = vand.u32 2147483647, %v2983
    %vm3001 = vcmp.eq.f32.partialorder %v3000, 8.507059e+37
    %v3002 = vand.u32 %v2983, 2147483648
    %v3003 = vor.u32 1.1754944e-38, %v3002
    %v3004 = vsel %vm3001, %v3003, %v2999
    %v3005 = vmul.f32 1.0, %v3004
    %v3006 = vrcp.pop %v2984
    %v3007 = vmul.f32 %v2984, %v3006
    %v3008 = vsub.f32 1.0, %v3007
    %v3009 = vmul.f32 %v3006, %v3008
    %v3010 = vadd.f32 %v3006, %v3009
    %vm3011 = vweird.f32 %v2984
    %vm3012 = vweird.f32 %v3006
    %vm3013 = vmor %vm3011, %vm3012
    %v3014 = vsel %vm3013, %v3006, %v3010
    %v3015 = vand.u32 2147483647, %v2984
    %vm3016 = vcmp.eq.f32.partialorder %v3015, 8.507059e+37
    %v3017 = vand.u32 %v2984, 2147483648
    %v3018 = vor.u32 1.1754944e-38, %v3017
    %v3019 = vsel %vm3016, %v3018, %v3014
    %v3020 = vmul.f32 1.0, %v3019
    %v3021 = vrcp.pop %v2985
    %v3022 = vmul.f32 %v2985, %v3021
    %v3023 = vsub.f32 1.0, %v3022
    %v3024 = vmul.f32 %v3021, %v3023
    %v3025 = vadd.f32 %v3021, %v3024
    %vm3026 = vweird.f32 %v2985
    %vm3027 = vweird.f32 %v3021
    %vm3028 = vmor %vm3026, %vm3027
    %v3029 = vsel %vm3028, %v3021, %v3025
    %v3030 = vand.u32 2147483647, %v2985
    %vm3031 = vcmp.eq.f32.partialorder %v3030, 8.507059e+37
    %v3032 = vand.u32 %v2985, 2147483648
    %v3033 = vor.u32 1.1754944e-38, %v3032
    %v3034 = vsel %vm3031, %v3033, %v3029
    %v3035 = vmul.f32 1.0, %v3034
    %v3036 = vrcp.pop %v2986
    %v3037 = vmul.f32 %v2986, %v3036
    %v3038 = vsub.f32 1.0, %v3037
    %v3039 = vmul.f32 %v3036, %v3038
    %v3040 = vadd.f32 %v3036, %v3039
    %vm3041 = vweird.f32 %v2986
    %vm3042 = vweird.f32 %v3036
    %vm3043 = vmor %vm3041, %vm3042
    %v3044 = vsel %vm3043, %v3036, %v3040
    %v3045 = vand.u32 2147483647, %v2986
    %vm3046 = vcmp.eq.f32.partialorder %v3045, 8.507059e+37
    %v3047 = vand.u32 %v2986, 2147483648
    %v3048 = vor.u32 1.1754944e-38, %v3047
    %v3049 = vsel %vm3046, %v3048, %v3044
    %v3050 = vmul.f32 1.0, %v3049
    %v3051 = vrcp.pop %v2987
    %v3052 = vmul.f32 %v2987, %v3051
    %v3053 = vsub.f32 1.0, %v3052
    %v3054 = vmul.f32 %v3051, %v3053
    %v3055 = vadd.f32 %v3051, %v3054
    %vm3056 = vweird.f32 %v2987
    %vm3057 = vweird.f32 %v3051
    %vm3058 = vmor %vm3056, %vm3057
    %v3059 = vsel %vm3058, %v3051, %v3055
    %v3060 = vand.u32 2147483647, %v2987
    %vm3061 = vcmp.eq.f32.partialorder %v3060, 8.507059e+37
    %v3062 = vand.u32 %v2987, 2147483648
    %v3063 = vor.u32 1.1754944e-38, %v3062
    %v3064 = vsel %vm3061, %v3063, %v3059
    %v3065 = vmul.f32 1.0, %v3064
    %v3066 = vrcp.pop %v2988
    %v3067 = vmul.f32 %v2988, %v3066
    %v3068 = vsub.f32 1.0, %v3067
    %v3069 = vmul.f32 %v3066, %v3068
    %v3070 = vadd.f32 %v3066, %v3069
    %vm3071 = vweird.f32 %v2988
    %vm3072 = vweird.f32 %v3066
    %vm3073 = vmor %vm3071, %vm3072
    %v3074 = vsel %vm3073, %v3066, %v3070
    %v3075 = vand.u32 2147483647, %v2988
    %vm3076 = vcmp.eq.f32.partialorder %v3075, 8.507059e+37
    %v3077 = vand.u32 %v2988, 2147483648
    %v3078 = vor.u32 1.1754944e-38, %v3077
    %v3079 = vsel %vm3076, %v3078, %v3074
    %v3080 = vmul.f32 1.0, %v3079
    %v3081 = vrcp.pop %v2989
    %v3082 = vmul.f32 %v2989, %v3081
    %v3083 = vsub.f32 1.0, %v3082
    %v3084 = vmul.f32 %v3081, %v3083
    %v3085 = vadd.f32 %v3081, %v3084
    %vm3086 = vweird.f32 %v2989
    %vm3087 = vweird.f32 %v3081
    %vm3088 = vmor %vm3086, %vm3087
    %v3089 = vsel %vm3088, %v3081, %v3085
    %v3090 = vand.u32 2147483647, %v2989
    %vm3091 = vcmp.eq.f32.partialorder %v3090, 8.507059e+37
    %v3092 = vand.u32 %v2989, 2147483648
    %v3093 = vor.u32 1.1754944e-38, %v3092
    %v3094 = vsel %vm3091, %v3093, %v3089
    %v3095 = vmul.f32 1.0, %v3094
    %v3096 = vrcp.pop %v2990
    %v3097 = vmul.f32 %v2990, %v3096
    %v3098 = vsub.f32 1.0, %v3097
    %v3099 = vmul.f32 %v3096, %v3098
    %v3100 = vadd.f32 %v3096, %v3099
    %vm3101 = vweird.f32 %v2990
    %vm3102 = vweird.f32 %v3096
    %vm3103 = vmor %vm3101, %vm3102
    %v3104 = vsel %vm3103, %v3096, %v3100
    %v3105 = vand.u32 2147483647, %v2990
    %vm3106 = vcmp.eq.f32.partialorder %v3105, 8.507059e+37
    %v3107 = vand.u32 %v2990, 2147483648
    %v3108 = vor.u32 1.1754944e-38, %v3107
    %v3109 = vsel %vm3106, %v3108, %v3104
    %v3110 = vmul.f32 1.0, %v3109
    %v3111 = vmul.f32 %v3005, 1.0614054
    %v3112 = vmul.f32 %v3020, 1.0614054
    %v3113 = vmul.f32 %v3035, 1.0614054
    %v3114 = vmul.f32 %v3050, 1.0614054
    %v3115 = vmul.f32 %v3065, 1.0614054
    %v3116 = vmul.f32 %v3080, 1.0614054
    %v3117 = vmul.f32 %v3095, 1.0614054
    %v3118 = vmul.f32 %v3110, 1.0614054
    %v3119 = vadd.f32 %v3111, -1.4531521
    %v3120 = vadd.f32 %v3112, -1.4531521
    %v3121 = vadd.f32 %v3113, -1.4531521
    %v3122 = vadd.f32 %v3114, -1.4531521
    %v3123 = vadd.f32 %v3115, -1.4531521
    %v3124 = vadd.f32 %v3116, -1.4531521
    %v3125 = vadd.f32 %v3117, -1.4531521
    %v3126 = vadd.f32 %v3118, -1.4531521
    %v3127 = vmul.f32 %v3005, %v3119
    %v3128 = vmul.f32 %v3020, %v3120
    %v3129 = vmul.f32 %v3035, %v3121
    %v3130 = vmul.f32 %v3050, %v3122
    %v3131 = vmul.f32 %v3065, %v3123
    %v3132 = vmul.f32 %v3080, %v3124
    %v3133 = vmul.f32 %v3095, %v3125
    %v3134 = vmul.f32 %v3110, %v3126
    %v3135 = vadd.f32 %v3127, 1.4214138
    %v3136 = vadd.f32 %v3128, 1.4214138
    %v3137 = vadd.f32 %v3129, 1.4214138
    %v3138 = vadd.f32 %v3130, 1.4214138
    %v3139 = vadd.f32 %v3131, 1.4214138
    %v3140 = vadd.f32 %v3132, 1.4214138
    %v3141 = vadd.f32 %v3133, 1.4214138
    %v3142 = vadd.f32 %v3134, 1.4214138
    %v3143 = vmul.f32 %v3005, %v3135
    %v3144 = vmul.f32 %v3020, %v3136
    %v3145 = vmul.f32 %v3035, %v3137
    %v3146 = vmul.f32 %v3050, %v3138
    %v3147 = vmul.f32 %v3065, %v3139
    %v3148 = vmul.f32 %v3080, %v3140
    %v3149 = vmul.f32 %v3095, %v3141
    %v3150 = vmul.f32 %v3110, %v3142
    %v3151 = vadd.f32 %v3143, -0.28449672
    %v3152 = vadd.f32 %v3144, -0.28449672
    %v3153 = vadd.f32 %v3145, -0.28449672
    %v3154 = vadd.f32 %v3146, -0.28449672
    %v3155 = vadd.f32 %v3147, -0.28449672
    %v3156 = vadd.f32 %v3148, -0.28449672
    %v3157 = vadd.f32 %v3149, -0.28449672
    %v3158 = vadd.f32 %v3150, -0.28449672
    %v3159 = vmul.f32 %v3005, %v3151
    %v3160 = vmul.f32 %v3020, %v3152
    %v3161 = vmul.f32 %v3035, %v3153
    %v3162 = vmul.f32 %v3050, %v3154
    %v3163 = vmul.f32 %v3065, %v3155
    %v3164 = vmul.f32 %v3080, %v3156
    %v3165 = vmul.f32 %v3095, %v3157
    %v3166 = vmul.f32 %v3110, %v3158
    %v3167 = vadd.f32 %v3159, 0.2548296
    %v3168 = vadd.f32 %v3160, 0.2548296
    %v3169 = vadd.f32 %v3161, 0.2548296
    %v3170 = vadd.f32 %v3162, 0.2548296
    %v3171 = vadd.f32 %v3163, 0.2548296
    %v3172 = vadd.f32 %v3164, 0.2548296
    %v3173 = vadd.f32 %v3165, 0.2548296
    %v3174 = vadd.f32 %v3166, 0.2548296
    %v3175 = vmul.f32 %v3005, %v3167
    %v3176 = vmul.f32 %v3020, %v3168
    %v3177 = vmul.f32 %v3035, %v3169
    %v3178 = vmul.f32 %v3050, %v3170
    %v3179 = vmul.f32 %v3065, %v3171
    %v3180 = vmul.f32 %v3080, %v3172
    %v3181 = vmul.f32 %v3095, %v3173
    %v3182 = vmul.f32 %v3110, %v3174
    %v3183 = vsub.f32 0.0, %v2967
    %v3184 = vsub.f32 0.0, %v2968
    %v3185 = vsub.f32 0.0, %v2969
    %v3186 = vsub.f32 0.0, %v2970
    %v3187 = vsub.f32 0.0, %v2971
    %v3188 = vsub.f32 0.0, %v2972
    %v3189 = vsub.f32 0.0, %v2973
    %v3190 = vsub.f32 0.0, %v2974
    %v3191 = vmul.f32 %v3183, %v2967
    %v3192 = vmul.f32 %v3184, %v2968
    %v3193 = vmul.f32 %v3185, %v2969
    %v3194 = vmul.f32 %v3186, %v2970
    %v3195 = vmul.f32 %v3187, %v2971
    %v3196 = vmul.f32 %v3188, %v2972
    %v3197 = vmul.f32 %v3189, %v2973
    %v3198 = vmul.f32 %v3190, %v2974
    %v3199 = vmul.f32 %v3191, 1.442695
    %v3200 = vpow.pop %v3199
    %v3201 = vmul.f32 %v3192, 1.442695
    %v3202 = vpow.pop %v3201
    %v3203 = vmul.f32 %v3193, 1.442695
    %v3204 = vpow.pop %v3203
    %v3205 = vmul.f32 %v3194, 1.442695
    %v3206 = vpow.pop %v3205
    %v3207 = vmul.f32 %v3195, 1.442695
    %v3208 = vpow.pop %v3207
    %v3209 = vmul.f32 %v3196, 1.442695
    %v3210 = vpow.pop %v3209
    %v3211 = vmul.f32 %v3197, 1.442695
    %v3212 = vpow.pop %v3211
    %v3213 = vmul.f32 %v3198, 1.442695
    %v3214 = vpow.pop %v3213
    %v3215 = vmul.f32 %v3175, %v3200
    %v3216 = vmul.f32 %v3176, %v3202
    %v3217 = vmul.f32 %v3177, %v3204
    %v3218 = vmul.f32 %v3178, %v3206
    %v3219 = vmul.f32 %v3179, %v3208
    %v3220 = vmul.f32 %v3180, %v3210
    %v3221 = vmul.f32 %v3181, %v3212
    %v3222 = vmul.f32 %v3182, %v3214
    %v3223 = vsub.f32 1.0, %v3215
    %v3224 = vsub.f32 1.0, %v3216
    %v3225 = vsub.f32 1.0, %v3217
    %v3226 = vsub.f32 1.0, %v3218
    %v3227 = vsub.f32 1.0, %v3219
    %v3228 = vsub.f32 1.0, %v3220
    %v3229 = vsub.f32 1.0, %v3221
    %v3230 = vsub.f32 1.0, %v3222
    %v3231 = vmul.f32 %v2959, %v3223
    %v3232 = vmul.f32 %v2960, %v3224
    %v3233 = vmul.f32 %v2961, %v3225
    %v3234 = vmul.f32 %v2962, %v3226
    %v3235 = vmul.f32 %v2963, %v3227
    %v3236 = vmul.f32 %v2964, %v3228
    %v3237 = vmul.f32 %v2965, %v3229
    %v3238 = vmul.f32 %v2966, %v3230
    %v3239 = vadd.f32 %v3231, 1.0
    %v3240 = vadd.f32 %v3232, 1.0
    %v3241 = vadd.f32 %v3233, 1.0
    %v3242 = vadd.f32 %v3234, 1.0
    %v3243 = vadd.f32 %v3235, 1.0
    %v3244 = vadd.f32 %v3236, 1.0
    %v3245 = vadd.f32 %v3237, 1.0
    %v3246 = vadd.f32 %v3238, 1.0
    %v3247 = vmul.f32 %v2935, %v3239
    %v3248 = vmul.f32 %v2936, %v3240
    %v3249 = vmul.f32 %v2937, %v3241
    %v3250 = vmul.f32 %v2938, %v3242
    %v3251 = vmul.f32 %v2939, %v3243
    %v3252 = vmul.f32 %v2940, %v3244
    %v3253 = vmul.f32 %v2941, %v3245
    %v3254 = vmul.f32 %v2942, %v3246
    %s3255 = scalar_lea.vmem [#allocation8], 32
    %v3256 = vld [vmem:[%s3255] sm:$0xff]
    %v3257 = vld [vmem:[%s3255 + $0x8] sm:$0xff]
    %v3258 = vld [vmem:[%s3255 + $0x10] sm:$0xff]
    %v3259 = vld [vmem:[%s3255 + $0x18] sm:$0xff]
    %v3260 = vld [vmem:[#allocation10 + $0x4] sm:$0x1]
    %v3261 = vperm.slane %v3260, 0
    %v3263 = vsel %vm218, %v3247, 0
    %v3266 = vsel %vm218, %v3248, 0
    %v3269 = vsel %vm218, %v3249, 0
    %v3272 = vsel %vm218, %v3250, 0
    %v3275 = vsel %vm218, %v3251, 0
    %v3278 = vsel %vm218, %v3252, 0
    %v3281 = vsel %vm218, %v3253, 0
    %v3284 = vsel %vm218, %v3254, 0
    %v3287 = vsel %vm218, %v3256, 0
    %v3290 = vsel %vm218, %v3257, 0
    %v3293 = vsel %vm218, %v3258, 0
    %v3296 = vsel %vm218, %v3259, 0
    %3298 = vmatpush.xpose.msra.mxu0 0.0
    %3299 = vmatpush.xpose.msra.mxu0 0.0
    %3300 = vmatpush.xpose.msra.mxu0 0.0
    %3301 = vmatpush.xpose.msra.mxu0 0.0
    %3302 = vmatpush.xpose.msra.mxu0 0.0
    %3303 = vmatpush.xpose.msra.mxu0 0.0
    %3304 = vmatpush.xpose.msra.mxu0 0.0
    %3305 = vmatpush.xpose.msra.mxu0 0.0
    %3306 = vmatpush.xpose.msra.mxu0 0.0
    %3307 = vmatpush.xpose.msra.mxu0 0.0
    %3308 = vmatpush.xpose.msra.mxu0 0.0
    %3309 = vmatpush.xpose.msra.mxu0 0.0
    %3310 = vmatpush.xpose.msra.mxu0 %v3296
    %3311 = vmatpush.xpose.msra.mxu0 %v3293
    %3312 = vmatpush.xpose.msra.mxu0 %v3290
    %3313 = vmatpush.xpose.msra.mxu0 %v3287
    %3314 = vmatmul.f32.gmra.mxu0 %v3263
    %v3315 = vpop.f32.mrf.mxu0
    %v3316 = vadd.f32 %v3261, %v3315
    %3317 = vmatmul.f32.gmra.mxu0 %v3266
    %v3318 = vpop.f32.mrf.mxu0
    %v3319 = vadd.f32 %v3261, %v3318
    %3320 = vmatmul.f32.gmra.mxu0 %v3269
    %v3321 = vpop.f32.mrf.mxu0
    %v3322 = vadd.f32 %v3261, %v3321
    %3323 = vmatmul.f32.gmra.mxu0 %v3272
    %v3324 = vpop.f32.mrf.mxu0
    %v3325 = vadd.f32 %v3261, %v3324
    %3326 = vmatmul.f32.gmra.mxu0 %v3275
    %v3327 = vpop.f32.mrf.mxu0
    %v3328 = vadd.f32 %v3261, %v3327
    %3329 = vmatmul.f32.gmra.mxu0 %v3278
    %v3330 = vpop.f32.mrf.mxu0
    %v3331 = vadd.f32 %v3261, %v3330
    %3332 = vmatmul.f32.gmra.mxu0 %v3281
    %v3333 = vpop.f32.mrf.mxu0
    %v3334 = vadd.f32 %v3261, %v3333
    %3335 = vmatmul.f32.gmra.mxu0 %v3284
    %v3336 = vpop.f32.mrf.mxu0
    %v3337 = vadd.f32 %v3261, %v3336
    %3338 = vdwg.mxu0
    %v3339 = vadd.f32 %v2844, %v3316
    %v3340 = vadd.f32 %v2845, %v3319
    %v3341 = vadd.f32 %v2846, %v3322
    %v3342 = vadd.f32 %v2847, %v3325
    %v3343 = vadd.f32 %v2848, %v3328
    %v3344 = vadd.f32 %v2849, %v3331
    %v3345 = vadd.f32 %v2850, %v3334
    %v3346 = vadd.f32 %v2851, %v3337
    %v3347 = vld [vmem:[#allocation10 + $0x5] sm:$0x1]
    %v3348 = vld [vmem:[#allocation10 + $0x6] sm:$0x1]
    %v3349 = vsel %vm218, %v3339, 0.0
    %3350 = vadd.xlane.f32.xlu0 %v3349
    %v3351 = vpop.xlane.xlu0 %3350
    %v3352 = vsel %vm218, %v3340, 0.0
    %3353 = vadd.xlane.f32.xlu0 %v3352
    %v3354 = vpop.xlane.xlu0 %3353
    %v3355 = vsel %vm218, %v3341, 0.0
    %3356 = vadd.xlane.f32.xlu0 %v3355
    %v3357 = vpop.xlane.xlu0 %3356
    %v3358 = vsel %vm218, %v3342, 0.0
    %3359 = vadd.xlane.f32.xlu0 %v3358
    %v3360 = vpop.xlane.xlu0 %3359
    %v3361 = vsel %vm218, %v3343, 0.0
    %3362 = vadd.xlane.f32.xlu0 %v3361
    %v3363 = vpop.xlane.xlu0 %3362
    %v3364 = vsel %vm218, %v3344, 0.0
    %3365 = vadd.xlane.f32.xlu0 %v3364
    %v3366 = vpop.xlane.xlu0 %3365
    %v3367 = vsel %vm218, %v3345, 0.0
    %3368 = vadd.xlane.f32.xlu0 %v3367
    %v3369 = vpop.xlane.xlu0 %3368
    %v3370 = vsel %vm218, %v3346, 0.0
    %3371 = vadd.xlane.f32.xlu0 %v3370
    %v3372 = vpop.xlane.xlu0 %3371
    %v3373 = vmul.f32 %v3351, %v2681
    %v3374 = vmul.f32 %v3354, %v2681
    %v3375 = vmul.f32 %v3357, %v2681
    %v3376 = vmul.f32 %v3360, %v2681
    %v3377 = vmul.f32 %v3363, %v2681
    %v3378 = vmul.f32 %v3366, %v2681
    %v3379 = vmul.f32 %v3369, %v2681
    %v3380 = vmul.f32 %v3372, %v2681
    %v3381 = vsub.f32 %v3339, %v3373
    %v3382 = vsub.f32 %v3340, %v3374
    %v3383 = vsub.f32 %v3341, %v3375
    %v3384 = vsub.f32 %v3342, %v3376
    %v3385 = vsub.f32 %v3343, %v3377
    %v3386 = vsub.f32 %v3344, %v3378
    %v3387 = vsub.f32 %v3345, %v3379
    %v3388 = vsub.f32 %v3346, %v3380
    %v3389 = vmul.f32 %v3381, %v3381
    %v3390 = vmul.f32 %v3382, %v3382
    %v3391 = vmul.f32 %v3383, %v3383
    %v3392 = vmul.f32 %v3384, %v3384
    %v3393 = vmul.f32 %v3385, %v3385
    %v3394 = vmul.f32 %v3386, %v3386
    %v3395 = vmul.f32 %v3387, %v3387
    %v3396 = vmul.f32 %v3388, %v3388
    %v3397 = vsel %vm218, %v3389, 0.0
    %3398 = vadd.xlane.f32.xlu0 %v3397
    %v3399 = vpop.xlane.xlu0 %3398
    %v3400 = vsel %vm218, %v3390, 0.0
    %3401 = vadd.xlane.f32.xlu0 %v3400
    %v3402 = vpop.xlane.xlu0 %3401
    %v3403 = vsel %vm218, %v3391, 0.0
    %3404 = vadd.xlane.f32.xlu0 %v3403
    %v3405 = vpop.xlane.xlu0 %3404
    %v3406 = vsel %vm218, %v3392, 0.0
    %3407 = vadd.xlane.f32.xlu0 %v3406
    %v3408 = vpop.xlane.xlu0 %3407
    %v3409 = vsel %vm218, %v3393, 0.0
    %3410 = vadd.xlane.f32.xlu0 %v3409
    %v3411 = vpop.xlane.xlu0 %3410
    %v3412 = vsel %vm218, %v3394, 0.0
    %3413 = vadd.xlane.f32.xlu0 %v3412
    %v3414 = vpop.xlane.xlu0 %3413
    %v3415 = vsel %vm218, %v3395, 0.0
    %3416 = vadd.xlane.f32.xlu0 %v3415
    %v3417 = vpop.xlane.xlu0 %3416
    %v3418 = vsel %vm218, %v3396, 0.0
    %3419 = vadd.xlane.f32.xlu0 %v3418
    %v3420 = vpop.xlane.xlu0 %3419
    %v3421 = vmul.f32 %v3399, %v2681
    %v3422 = vmul.f32 %v3402, %v2681
    %v3423 = vmul.f32 %v3405, %v2681
    %v3424 = vmul.f32 %v3408, %v2681
    %v3425 = vmul.f32 %v3411, %v2681
    %v3426 = vmul.f32 %v3414, %v2681
    %v3427 = vmul.f32 %v3417, %v2681
    %v3428 = vmul.f32 %v3420, %v2681
    %v3429 = vadd.f32 %v3421, 1e-05
    %v3430 = vadd.f32 %v3422, 1e-05
    %v3431 = vadd.f32 %v3423, 1e-05
    %v3432 = vadd.f32 %v3424, 1e-05
    %v3433 = vadd.f32 %v3425, 1e-05
    %v3434 = vadd.f32 %v3426, 1e-05
    %v3435 = vadd.f32 %v3427, 1e-05
    %v3436 = vadd.f32 %v3428, 1e-05
    %v3437 = vrsqrt.pop %v3429
    %v3438 = vmul.f32 %v3437, %v3429
    %v3439 = vmul.f32 %v3438, %v3437
    %v3440 = vmul.f32 0.5, %v3439
    %v3441 = vsub.f32 1.5, %v3440
    %v3442 = vmul.f32 %v3437, %v3441
    %vm3443 = vweird.f32 %v3429
    %vm3444 = vweird.f32 %v3437
    %vm3445 = vmor %vm3443, %vm3444
    %v3446 = vsel %vm3445, %v3437, %v3442
    %v3447 = vrsqrt.pop %v3430
    %v3448 = vmul.f32 %v3447, %v3430
    %v3449 = vmul.f32 %v3448, %v3447
    %v3450 = vmul.f32 0.5, %v3449
    %v3451 = vsub.f32 1.5, %v3450
    %v3452 = vmul.f32 %v3447, %v3451
    %vm3453 = vweird.f32 %v3430
    %vm3454 = vweird.f32 %v3447
    %vm3455 = vmor %vm3453, %vm3454
    %v3456 = vsel %vm3455, %v3447, %v3452
    %v3457 = vrsqrt.pop %v3431
    %v3458 = vmul.f32 %v3457, %v3431
    %v3459 = vmul.f32 %v3458, %v3457
    %v3460 = vmul.f32 0.5, %v3459
    %v3461 = vsub.f32 1.5, %v3460
    %v3462 = vmul.f32 %v3457, %v3461
    %vm3463 = vweird.f32 %v3431
    %vm3464 = vweird.f32 %v3457
    %vm3465 = vmor %vm3463, %vm3464
    %v3466 = vsel %vm3465, %v3457, %v3462
    %v3467 = vrsqrt.pop %v3432
    %v3468 = vmul.f32 %v3467, %v3432
    %v3469 = vmul.f32 %v3468, %v3467
    %v3470 = vmul.f32 0.5, %v3469
    %v3471 = vsub.f32 1.5, %v3470
    %v3472 = vmul.f32 %v3467, %v3471
    %vm3473 = vweird.f32 %v3432
    %vm3474 = vweird.f32 %v3467
    %vm3475 = vmor %vm3473, %vm3474
    %v3476 = vsel %vm3475, %v3467, %v3472
    %v3477 = vrsqrt.pop %v3433
    %v3478 = vmul.f32 %v3477, %v3433
    %v3479 = vmul.f32 %v3478, %v3477
    %v3480 = vmul.f32 0.5, %v3479
    %v3481 = vsub.f32 1.5, %v3480
    %v3482 = vmul.f32 %v3477, %v3481
    %vm3483 = vweird.f32 %v3433
    %vm3484 = vweird.f32 %v3477
    %vm3485 = vmor %vm3483, %vm3484
    %v3486 = vsel %vm3485, %v3477, %v3482
    %v3487 = vrsqrt.pop %v3434
    %v3488 = vmul.f32 %v3487, %v3434
    %v3489 = vmul.f32 %v3488, %v3487
    %v3490 = vmul.f32 0.5, %v3489
    %v3491 = vsub.f32 1.5, %v3490
    %v3492 = vmul.f32 %v3487, %v3491
    %vm3493 = vweird.f32 %v3434
    %vm3494 = vweird.f32 %v3487
    %vm3495 = vmor %vm3493, %vm3494
    %v3496 = vsel %vm3495, %v3487, %v3492
    %v3497 = vrsqrt.pop %v3435
    %v3498 = vmul.f32 %v3497, %v3435
    %v3499 = vmul.f32 %v3498, %v3497
    %v3500 = vmul.f32 0.5, %v3499
    %v3501 = vsub.f32 1.5, %v3500
    %v3502 = vmul.f32 %v3497, %v3501
    %vm3503 = vweird.f32 %v3435
    %vm3504 = vweird.f32 %v3497
    %vm3505 = vmor %vm3503, %vm3504
    %v3506 = vsel %vm3505, %v3497, %v3502
    %v3507 = vrsqrt.pop %v3436
    %v3508 = vmul.f32 %v3507, %v3436
    %v3509 = vmul.f32 %v3508, %v3507
    %v3510 = vmul.f32 0.5, %v3509
    %v3511 = vsub.f32 1.5, %v3510
    %v3512 = vmul.f32 %v3507, %v3511
    %vm3513 = vweird.f32 %v3436
    %vm3514 = vweird.f32 %v3507
    %vm3515 = vmor %vm3513, %vm3514
    %v3516 = vsel %vm3515, %v3507, %v3512
    %v3517 = vmul.f32 %v3381, %v3446
    %v3518 = vmul.f32 %v3382, %v3456
    %v3519 = vmul.f32 %v3383, %v3466
    %v3520 = vmul.f32 %v3384, %v3476
    %v3521 = vmul.f32 %v3385, %v3486
    %v3522 = vmul.f32 %v3386, %v3496
    %v3523 = vmul.f32 %v3387, %v3506
    %v3524 = vmul.f32 %v3388, %v3516
    %v3525 = vperm.slane %v3347, 0
    %v3526 = vmul.f32 %v3517, %v3525
    %v3527 = vmul.f32 %v3518, %v3525
    %v3528 = vmul.f32 %v3519, %v3525
    %v3529 = vmul.f32 %v3520, %v3525
    %v3530 = vmul.f32 %v3521, %v3525
    %v3531 = vmul.f32 %v3522, %v3525
    %v3532 = vmul.f32 %v3523, %v3525
    %v3533 = vmul.f32 %v3524, %v3525
    %v3534 = vperm.slane %v3348, 0
    %v3535 = vadd.f32 %v3526, %v3534
    %v3536 = vadd.f32 %v3527, %v3534
    %v3537 = vadd.f32 %v3528, %v3534
    %v3538 = vadd.f32 %v3529, %v3534
    %v3539 = vadd.f32 %v3530, %v3534
    %v3540 = vadd.f32 %v3531, %v3534
    %v3541 = vadd.f32 %v3532, %v3534
    %v3542 = vadd.f32 %v3533, %v3534
    %3543 = vst.msk [vmem:[#allocation13] sm:$0xff] %vm218, %v3535
    %3544 = vst.msk [vmem:[#allocation13 + $0x8] sm:$0xff] %vm218, %v3536
    %3545 = vst.msk [vmem:[#allocation13 + $0x10] sm:$0xff] %vm218, %v3537
    %3546 = vst.msk [vmem:[#allocation13 + $0x18] sm:$0xff] %vm218, %v3538
    %3547 = vst.msk [vmem:[#allocation13 + $0x20] sm:$0xff] %vm218, %v3539
    %3548 = vst.msk [vmem:[#allocation13 + $0x28] sm:$0xff] %vm218, %v3540
    %3549 = vst.msk [vmem:[#allocation13 + $0x30] sm:$0xff] %vm218, %v3541
    %3550 = vst.msk [vmem:[#allocation13 + $0x38] sm:$0xff] %vm218, %v3542
    // Predicated region
    $region50: #{vit_block_forward.1} parent=1 // pred_check
      _
    $region51: #{vit_block_forward.1} parent=1 // pred_check_branch
      %3552 = sbr.rel (0) target = $region53
    $region52: #{vit_block_forward.1} parent=1 // pred_region
      %3554 = vsyncadd [#allocation4], 0
      %s3555 = sshll.u32 [#allocation13], 4
      %s3556 = int_to_ptr.vmem [resolvable:$true] %s3555
      %s3557 = sshll.u32 %s6, 4
      %s3558 = int_to_ptr.hbm [resolvable:$true] %s3557
      %3563 = dma.vmem_to_hbm [thread:$0]  %s3556, 1024, %s3558, [#allocation4], 128, 128, 8
    $region53: #{vit_block_forward.1} parent=1 // pred_fallthru
      _
    // Predicated region
    $region54: #{vit_block_forward.1} parent=1 // pred_check
      _
    $region55: #{vit_block_forward.1} parent=1 // pred_check_branch
      %3565 = sbr.rel (0) target = $region57
    $region56: #{vit_block_forward.1} parent=1 // pred_region
      %3567 = dma.done [#allocation4], 1024
    $region57: #{vit_block_forward.1} parent=1 // pred_fallthru
      _
    %3568 = vsyncpa [#allocation3], 1
    %3569 = vsyncpa [#allocation6], 1
    %3570 = vsyncpa [#allocation9], 1
    %3571 = vsyncpa [#allocation12], 1
    %3572 = vsyncpa [#allocation4], 1

</llo_original>
